<compile_context>
chip_gen: v6e
topology: v6e:2x2x1
jax: 0.10.0
libtpu: 0.0.40
codegen_flags: <defaults>
</compile_context>

<pallas_src>
import math

import jax
import jax.numpy as jnp
from jax import lax
from jax.experimental import pallas as pl
from jax.experimental.pallas import tpu as pltpu

# ---------------- model hyper-params (lane-dense: d_model == 128) ----------------
D_MODEL = 128      # d_model
N_HEAD  = 4        # n_head
D_K     = 32       # d_k
D_V     = 32       # d_v
D_FF    = 256      # d_ff
LN_EPS  = 1e-5     # nn.LayerNorm default
MASK_FILL = -1e9   # masked_fill value from the reference module

# rows of the packed (4, 128) bias/LN slab
_ROW_BO, _ROW_LN_G, _ROW_LN_B, _ROW_B2 = 0, 1, 2, 3


def _encoder_layer_kernel(x_ref, mask_ref, wqkv_ref, bqkv_ref, wo_ref,
                          w1_ref, w2_ref, bslab_ref, b1_ref, out_ref):
    """One batch tile per grid step.
       x_ref:    (Bt, S, D)    f32
       mask_ref: (Bt, S, S)    i8   (nonzero => masked key)
       wqkv_ref: (D, 3*H*dk)   bf16   [W_Q | W_K | W_V]
       bqkv_ref: (1, 3*H*dk)   f32
       wo_ref:   (H*dv, D)     bf16
       w1_ref:   (D, d_ff)     bf16
       w2_ref:   (d_ff, D)     bf16
       bslab_ref:(4, D)        f32  rows = [b_o, ln_gamma, ln_beta, b_fc2]
       b1_ref:   (1, d_ff)     f32
       out_ref:  (Bt, S, D)    f32
    """
    bt, S, D = x_ref.shape
    rows = bt * S

    x = x_ref[...]                       # (Bt, S, D) f32
    xf = x.reshape(rows, D)              # (Bt*S, D)

    # ---- mask bias, hoisted out of the head loop (mask is 0/1 int8) ----
    bias = mask_ref[...].astype(jnp.float32) * MASK_FILL        # (Bt, S, S) f32

    # ---- fused QKV projection: one bf16 MXU matmul, f32 accumulate ----
    qkv = jnp.dot(xf.astype(jnp.bfloat16), wqkv_ref[...],
                  preferred_element_type=jnp.float32) + bqkv_ref[...]   # (rows, 3*H*dk)

    hd = N_HEAD * D_K
    q = qkv[:, 0 * hd:1 * hd]
    k = qkv[:, 1 * hd:2 * hd]
    v = qkv[:, 2 * hd:3 * hd]

    scale = 1.0 / math.sqrt(D_K)
    ctx_heads = []
    # Static unroll over heads; each head's attention is batched over Bt.
    for h in range(N_HEAD):
        qh = q[:, h * D_K:(h + 1) * D_K].reshape(bt, S, D_K).astype(jnp.bfloat16)
        kh = k[:, h * D_K:(h + 1) * D_K].reshape(bt, S, D_K).astype(jnp.bfloat16)
        vh = v[:, h * D_V:(h + 1) * D_V].reshape(bt, S, D_V).astype(jnp.bfloat16)

        s = jnp.einsum('bqd,bkd->bqk', qh, kh,
                       preferred_element_type=jnp.float32) * scale + bias  # (Bt,S,S)

        # numerically-stable softmax over keys (f32); divide -> EUP reciprocal
        s = s - jnp.max(s, axis=-1, keepdims=True)
        p = jnp.exp(s)
        inv = pl.reciprocal(jnp.sum(p, axis=-1, keepdims=True), approx=True)
        attn = p * inv

        ctx_heads.append(
            jnp.einsum('bqk,bkd->bqd', attn.astype(jnp.bfloat16), vh,
                       preferred_element_type=jnp.float32))               # (Bt,S,dv)

    # concat heads along lanes -> (Bt*S, H*dv), single output projection
    ctx = jnp.concatenate(ctx_heads, axis=-1).reshape(rows, N_HEAD * D_V)
    attn_out = jnp.dot(ctx.astype(jnp.bfloat16), wo_ref[...],
                       preferred_element_type=jnp.float32) + bslab_ref[_ROW_BO:_ROW_BO + 1, :]

    # ---- residual + LayerNorm(d_model), f32 (biased variance, eps=1e-5, affine) ----
    y = attn_out + xf
    mean = jnp.mean(y, axis=-1, keepdims=True)
    cen = y - mean
    var = jnp.mean(cen * cen, axis=-1, keepdims=True)
    y = (cen * lax.rsqrt(var + LN_EPS) * bslab_ref[_ROW_LN_G:_ROW_LN_G + 1, :]
         + bslab_ref[_ROW_LN_B:_ROW_LN_B + 1, :])

    # ---- position-wise feed-forward: fc2(relu(fc1(y))) ----
    h1 = jnp.dot(y.astype(jnp.bfloat16), w1_ref[...],
                 preferred_element_type=jnp.float32) + b1_ref[...]
    h1 = jnp.maximum(h1, 0.0)
    ffn = jnp.dot(h1.astype(jnp.bfloat16), w2_ref[...],
                  preferred_element_type=jnp.float32) + bslab_ref[_ROW_B2:_ROW_B2 + 1, :]

    # TODO(synk): nn.Dropout is identity in eval mode; training-mode stochastic
    # dropout (pltpu.prng_random_bits mask) is not fused here.
    out_ref[...] = ffn.reshape(bt, S, D)


def _pick_batch_tile(B, S):
    """Largest useful batch tile: Bt*S >= 128 rows, but keep >= 2 grid steps
    when the batch allows (v7x has 2 TensorCores sharing the chip)."""
    divisors = [d for d in range(1, B + 1) if B % d == 0]
    good = [d for d in divisors if d * S >= 128]
    bt = good[0] if good else divisors[-1]
    if B // bt < 2:
        smaller = [d for d in divisors if d < bt and B // d >= 2]
        if smaller:
            bt = smaller[-1]
    return bt


def encoder_layer_forward(x, attn_mask, params):
    """x: (B, S, D) float32, attn_mask: (B, S, S) bool. Returns (B, S, D) float32."""
    B, S, D = x.shape
    assert D == D_MODEL
    wq, bq, wk, bk, wv, bv, wo, bo, g, be, w1, b1, w2, b2 = params

    # pack / cast parameters (bf16 at the MXU, biases & LN params stay f32)
    wqkv = jnp.concatenate([wq, wk, wv], axis=1).astype(jnp.bfloat16)   # (D, 3*H*dk)
    bqkv = jnp.concatenate([bq, bk, bv], axis=1).astype(jnp.float32)    # (1, 3*H*dk)
    bslab = jnp.concatenate([bo, g, be, b2], axis=0).astype(jnp.float32)  # (4, D)
    wo_bf = wo.astype(jnp.bfloat16)
    w1_bf = w1.astype(jnp.bfloat16)
    w2_bf = w2.astype(jnp.bfloat16)
    b1_f = b1.astype(jnp.float32)
    mask_i8 = attn_mask.astype(jnp.int8)

    bt = _pick_batch_tile(B, S)
    grid = (B // bt,)

    def tile_map(i):
        return (i, 0, 0)

    def rep2(i):
        return (0, 0)

    in_specs = [
        pl.BlockSpec((bt, S, D), tile_map),        # x
        pl.BlockSpec((bt, S, S), tile_map),        # mask (int8)
        pl.BlockSpec(wqkv.shape, rep2),
        pl.BlockSpec(bqkv.shape, rep2),
        pl.BlockSpec(wo_bf.shape, rep2),
        pl.BlockSpec(w1_bf.shape, rep2),
        pl.BlockSpec(w2_bf.shape, rep2),
        pl.BlockSpec(bslab.shape, rep2),
        pl.BlockSpec(b1_f.shape, rep2),
    ]

    return pl.pallas_call(
        _encoder_layer_kernel,
        out_shape=jax.ShapeDtypeStruct((B, S, D), jnp.float32),
        grid=grid,
        in_specs=in_specs,
        out_specs=pl.BlockSpec((bt, S, D), tile_map),
        compiler_params=pltpu.CompilerParams(
            dimension_semantics=("parallel",)),    # megacore sharding on v7x
    )(x, mask_i8, wqkv, bqkv, wo_bf, w1_bf, w2_bf, bslab, b1_f)


def _reference(x, attn_mask, params):
    """Pure-JAX f32 reference matching the PyTorch EncoderLayer (eval mode)."""
    wq, bq, wk, bk, wv, bv, wo, bo, g, be, w1, b1, w2, b2 = params
    B, S, D = x.shape
    hp = lax.Precision.HIGHEST

    q = jnp.einsum('bsd,dk->bsk', x, wq, precision=hp) + bq
    k = jnp.einsum('bsd,dk->bsk', x, wk, precision=hp) + bk
    v = jnp.einsum('bsd,dk->bsk', x, wv, precision=hp) + bv
    q = q.reshape(B, S, N_HEAD, D_K).transpose(0, 2, 1, 3)
    k = k.reshape(B, S, N_HEAD, D_K).transpose(0, 2, 1, 3)
    v = v.reshape(B, S, N_HEAD, D_V).transpose(0, 2, 1, 3)

    s = jnp.einsum('bhqd,bhkd->bhqk', q, k, precision=hp) / math.sqrt(D_K)
    s = jnp.where(attn_mask[:, None, :, :], MASK_FILL, s)
    attn = jax.nn.softmax(s, axis=-1)
    ctx = jnp.einsum('bhqk,bhkd->bhqd', attn, v, precision=hp)
    ctx = ctx.transpose(0, 2, 1, 3).reshape(B, S, N_HEAD * D_V)

    out = jnp.einsum('bsk,kd->bsd', ctx, wo, precision=hp) + bo
    y = out + x
    mean = jnp.mean(y, axis=-1, keepdims=True)
    var = jnp.mean((y - mean) ** 2, axis=-1, keepdims=True)
    y = (y - mean) / jnp.sqrt(var + LN_EPS) * g + be

    h1 = jnp.maximum(jnp.einsum('bsd,df->bsf', y, w1, precision=hp) + b1, 0.0)
    return jnp.einsum('bsf,fd->bsd', h1, w2, precision=hp) + b2


if __name__ == "__main__":
    key = jax.random.PRNGKey(0)
    keys = jax.random.split(key, 16)

    # B=16, S=16 -> batch tile Bt=8 (128 rows / grid step), grid = 2 steps.
    B, S = 16, 16
    x = jax.random.normal(keys[0], (B, S, D_MODEL), jnp.float32)

    # padding-style attention mask: keys beyond each sequence's valid length masked
    lens = 6 + jax.random.randint(keys[15], (B,), 0, S - 5)          # in [6, S]
    key_pad = jnp.arange(S)[None, :] >= lens[:, None]                # (B, S)
    attn_mask = jnp.broadcast_to(key_pad[:, None, :], (B, S, S))     # (B, S, S) bool

    def lin(kw, kb, fan_in, fan_out):
        w = jax.random.normal(kw, (fan_in, fan_out), jnp.float32) / math.sqrt(fan_in)
        b = 0.1 * jax.random.normal(kb, (1, fan_out), jnp.float32)
        return w, b

    wq, bq = lin(keys[1], keys[2], D_MODEL, N_HEAD * D_K)
    wk, bk = lin(keys[3], keys[4], D_MODEL, N_HEAD * D_K)
    wv, bv = lin(keys[5], keys[6], D_MODEL, N_HEAD * D_V)
    wo, bo = lin(keys[7], keys[8], N_HEAD * D_V, D_MODEL)
    g  = 1.0 + 0.1 * jax.random.normal(keys[9],  (1, D_MODEL), jnp.float32)
    be = 0.1 * jax.random.normal(keys[10], (1, D_MODEL), jnp.float32)
    w1, b1 = lin(keys[11], keys[12], D_MODEL, D_FF)
    w2, b2 = lin(keys[13], keys[14], D_FF, D_MODEL)
    params = (wq, bq, wk, bk, wv, bv, wo, bo, g, be, w1, b1, w2, b2)

    out = encoder_layer_forward(x, attn_mask, params)
    out = jax.block_until_ready(out)

    ref = _reference(x, attn_mask, params)
    assert out.shape == (B, S, D_MODEL)
    max_err = float(jnp.max(jnp.abs(out - ref)))
    # bf16 MXU operands (f32 accumulate) vs. f32 HIGHEST reference -> relaxed tol
    assert jnp.allclose(out, ref, atol=5e-2, rtol=5e-2), (
        "mismatch vs reference, max abs err = %e" % max_err)

    print("KERNEL_OK")
</pallas_src>

<mosaic_0001>
module attributes {stable_mosaic.version = 11 : i64} {
  func.func @_encoder_layer_kernel(%arg0: i32, %arg1: memref<8x16x128xf32, #tpu.memory_space<vmem>>, %arg2: memref<8x16x16xi8, #tpu.memory_space<vmem>>, %arg3: memref<128x384xbf16, #tpu.memory_space<vmem>>, %arg4: memref<1x384xf32, #tpu.memory_space<vmem>>, %arg5: memref<128x128xbf16, #tpu.memory_space<vmem>>, %arg6: memref<128x256xbf16, #tpu.memory_space<vmem>>, %arg7: memref<256x128xbf16, #tpu.memory_space<vmem>>, %arg8: memref<4x128xf32, #tpu.memory_space<vmem>>, %arg9: memref<1x256xf32, #tpu.memory_space<vmem>>, %arg10: memref<8x16x128xf32, #tpu.memory_space<vmem>>) attributes {dimension_semantics = [#tpu.dimension_semantics<parallel>], iteration_bounds = array<i64: 2>, scalar_prefetch = 0 : i64, scratch_operands = 0 : i64, tpu.core_type = #tpu.core_type<tc>, window_params = [{transform_indices = @transform_0, window_bounds = array<i64: 8, 16, 128>}, {transform_indices = @transform_1, window_bounds = array<i64: 8, 16, 16>}, {pipeline_mode = #tpu.pipeline_mode<synchronous>, transform_indices = @transform_2, window_bounds = array<i64: 128, 384>}, {pipeline_mode = #tpu.pipeline_mode<synchronous>, transform_indices = @transform_3, window_bounds = array<i64: 1, 384>}, {pipeline_mode = #tpu.pipeline_mode<synchronous>, transform_indices = @transform_4, window_bounds = array<i64: 128, 128>}, {pipeline_mode = #tpu.pipeline_mode<synchronous>, transform_indices = @transform_5, window_bounds = array<i64: 128, 256>}, {pipeline_mode = #tpu.pipeline_mode<synchronous>, transform_indices = @transform_6, window_bounds = array<i64: 256, 128>}, {pipeline_mode = #tpu.pipeline_mode<synchronous>, transform_indices = @transform_7, window_bounds = array<i64: 4, 128>}, {pipeline_mode = #tpu.pipeline_mode<synchronous>, transform_indices = @transform_8, window_bounds = array<i64: 1, 256>}, {transform_indices = @transform_9, window_bounds = array<i64: 8, 16, 128>}]} {
    %c0 = arith.constant 0 : index
    %c0_0 = arith.constant 0 : index
    %c0_1 = arith.constant 0 : index
    %0 = vector.load %arg1[%c0, %c0_0, %c0_1] : memref<8x16x128xf32, #tpu.memory_space<vmem>>, vector<8x16x128xf32>
    %1 = vector.shape_cast %0 : vector<8x16x128xf32> to vector<128x128xf32>
    %c0_2 = arith.constant 0 : index
    %c0_3 = arith.constant 0 : index
    %c0_4 = arith.constant 0 : index
    %2 = vector.load %arg2[%c0_2, %c0_3, %c0_4] : memref<8x16x16xi8, #tpu.memory_space<vmem>>, vector<8x16x16xi8>
    %3 = arith.sitofp %2 : vector<8x16x16xi8> to vector<8x16x16xf32>
    %cst = arith.constant -1.000000e+09 : f32
    %4 = vector.broadcast %cst : f32 to vector<8x16x16xf32>
    %5 = arith.mulf %3, %4 : vector<8x16x16xf32>
    %6 = arith.truncf %1 : vector<128x128xf32> to vector<128x128xbf16>
    %c0_5 = arith.constant 0 : index
    %c0_6 = arith.constant 0 : index
    %7 = vector.load %arg3[%c0_5, %c0_6] : memref<128x384xbf16, #tpu.memory_space<vmem>>, vector<128x384xbf16>
    %cst_7 = arith.constant dense<0.000000e+00> : vector<128x384xf32>
    %8 = tpu.matmul %6, %7, %cst_7 {dimension_numbers = #tpu.dot_dimension_numbers<[1], [0], [0], [1], [0, 0, 1, 1], [], []>} : vector<128x128xbf16>, vector<128x384xbf16>, vector<128x384xf32> -> vector<128x384xf32>
    %c0_8 = arith.constant 0 : index
    %c0_9 = arith.constant 0 : index
    %9 = vector.load %arg4[%c0_8, %c0_9] : memref<1x384xf32, #tpu.memory_space<vmem>>, vector<1x384xf32>
    %10 = vector.broadcast %9 : vector<1x384xf32> to vector<128x384xf32>
    %11 = arith.addf %8, %10 : vector<128x384xf32>
    %12 = vector.extract_strided_slice %11 {offsets = [0, 0], sizes = [128, 128], strides = [1, 1]} : vector<128x384xf32> to vector<128x128xf32>
    %13 = vector.extract_strided_slice %11 {offsets = [0, 128], sizes = [128, 128], strides = [1, 1]} : vector<128x384xf32> to vector<128x128xf32>
    %14 = vector.extract_strided_slice %11 {offsets = [0, 256], sizes = [128, 128], strides = [1, 1]} : vector<128x384xf32> to vector<128x128xf32>
    %15 = vector.extract_strided_slice %12 {offsets = [0, 0], sizes = [128, 32], strides = [1, 1]} : vector<128x128xf32> to vector<128x32xf32>
    %16 = vector.shape_cast %15 : vector<128x32xf32> to vector<8x16x32xf32>
    %17 = arith.truncf %16 : vector<8x16x32xf32> to vector<8x16x32xbf16>
    %18 = vector.extract_strided_slice %13 {offsets = [0, 0], sizes = [128, 32], strides = [1, 1]} : vector<128x128xf32> to vector<128x32xf32>
    %19 = vector.shape_cast %18 : vector<128x32xf32> to vector<8x16x32xf32>
    %20 = arith.truncf %19 : vector<8x16x32xf32> to vector<8x16x32xbf16>
    %21 = vector.extract_strided_slice %14 {offsets = [0, 0], sizes = [128, 32], strides = [1, 1]} : vector<128x128xf32> to vector<128x32xf32>
    %22 = vector.shape_cast %21 : vector<128x32xf32> to vector<8x16x32xf32>
    %23 = arith.truncf %22 : vector<8x16x32xf32> to vector<8x16x32xbf16>
    "tpu.trace_start"() <{level = 10 : i32, message = "bqd,bkd->bqk"}> : () -> ()
    %cst_10 = arith.constant dense<0.000000e+00> : vector<8x16x16xf32>
    %24 = tpu.matmul %17, %20, %cst_10 {dimension_numbers = #tpu.dot_dimension_numbers<[2], [2], [1], [1], [0, 0, 0, 1, 1, 1], [0], [0]>} : vector<8x16x32xbf16>, vector<8x16x32xbf16>, vector<8x16x16xf32> -> vector<8x16x16xf32>
    "tpu.trace_stop"() : () -> ()
    %cst_11 = arith.constant 0.176776692 : f32
    %25 = vector.broadcast %cst_11 : f32 to vector<8x16x16xf32>
    %26 = arith.mulf %24, %25 : vector<8x16x16xf32>
    %27 = arith.addf %26, %5 : vector<8x16x16xf32>
    %cst_12 = arith.constant dense<0xFF800000> : vector<8x16xf32>
    %28 = vector.multi_reduction <maximumf>, %27, %cst_12 [2] : vector<8x16x16xf32> to vector<8x16xf32>
    %29 = vector.shape_cast %28 : vector<8x16xf32> to vector<8x16x1xf32>
    %30 = vector.broadcast %29 : vector<8x16x1xf32> to vector<8x16x16xf32>
    %31 = arith.subf %27, %30 : vector<8x16x16xf32>
    %32 = math.exp %31 : vector<8x16x16xf32>
    %cst_13 = arith.constant dense<0.000000e+00> : vector<8x16xf32>
    %33 = vector.multi_reduction <add>, %32, %cst_13 [2] : vector<8x16x16xf32> to vector<8x16xf32>
    %34 = vector.shape_cast %33 : vector<8x16xf32> to vector<8x16x1xf32>
    %35 = tpu.reciprocal %34 {approx = true} : vector<8x16x1xf32> -> vector<8x16x1xf32>
    %36 = vector.broadcast %35 : vector<8x16x1xf32> to vector<8x16x16xf32>
    %37 = arith.mulf %32, %36 : vector<8x16x16xf32>
    %38 = arith.truncf %37 : vector<8x16x16xf32> to vector<8x16x16xbf16>
    "tpu.trace_start"() <{level = 10 : i32, message = "bqk,bkd->bqd"}> : () -> ()
    %cst_14 = arith.constant dense<0.000000e+00> : vector<8x16x32xf32>
    %39 = tpu.matmul %38, %23, %cst_14 {dimension_numbers = #tpu.dot_dimension_numbers<[2], [1], [1], [2], [0, 0, 0, 1, 1, 2], [0], [0]>} : vector<8x16x16xbf16>, vector<8x16x32xbf16>, vector<8x16x32xf32> -> vector<8x16x32xf32>
    "tpu.trace_stop"() : () -> ()
    %40 = vector.extract_strided_slice %12 {offsets = [0, 32], sizes = [128, 32], strides = [1, 1]} : vector<128x128xf32> to vector<128x32xf32>
    %41 = vector.shape_cast %40 : vector<128x32xf32> to vector<8x16x32xf32>
    %42 = arith.truncf %41 : vector<8x16x32xf32> to vector<8x16x32xbf16>
    %43 = vector.extract_strided_slice %13 {offsets = [0, 32], sizes = [128, 32], strides = [1, 1]} : vector<128x128xf32> to vector<128x32xf32>
    %44 = vector.shape_cast %43 : vector<128x32xf32> to vector<8x16x32xf32>
    %45 = arith.truncf %44 : vector<8x16x32xf32> to vector<8x16x32xbf16>
    %46 = vector.extract_strided_slice %14 {offsets = [0, 32], sizes = [128, 32], strides = [1, 1]} : vector<128x128xf32> to vector<128x32xf32>
    %47 = vector.shape_cast %46 : vector<128x32xf32> to vector<8x16x32xf32>
    %48 = arith.truncf %47 : vector<8x16x32xf32> to vector<8x16x32xbf16>
    "tpu.trace_start"() <{level = 10 : i32, message = "bqd,bkd->bqk"}> : () -> ()
    %cst_15 = arith.constant dense<0.000000e+00> : vector<8x16x16xf32>
    %49 = tpu.matmul %42, %45, %cst_15 {dimension_numbers = #tpu.dot_dimension_numbers<[2], [2], [1], [1], [0, 0, 0, 1, 1, 1], [0], [0]>} : vector<8x16x32xbf16>, vector<8x16x32xbf16>, vector<8x16x16xf32> -> vector<8x16x16xf32>
    "tpu.trace_stop"() : () -> ()
    %cst_16 = arith.constant 0.176776692 : f32
    %50 = vector.broadcast %cst_16 : f32 to vector<8x16x16xf32>
    %51 = arith.mulf %49, %50 : vector<8x16x16xf32>
    %52 = arith.addf %51, %5 : vector<8x16x16xf32>
    %cst_17 = arith.constant dense<0xFF800000> : vector<8x16xf32>
    %53 = vector.multi_reduction <maximumf>, %52, %cst_17 [2] : vector<8x16x16xf32> to vector<8x16xf32>
    %54 = vector.shape_cast %53 : vector<8x16xf32> to vector<8x16x1xf32>
    %55 = vector.broadcast %54 : vector<8x16x1xf32> to vector<8x16x16xf32>
    %56 = arith.subf %52, %55 : vector<8x16x16xf32>
    %57 = math.exp %56 : vector<8x16x16xf32>
    %cst_18 = arith.constant dense<0.000000e+00> : vector<8x16xf32>
    %58 = vector.multi_reduction <add>, %57, %cst_18 [2] : vector<8x16x16xf32> to vector<8x16xf32>
    %59 = vector.shape_cast %58 : vector<8x16xf32> to vector<8x16x1xf32>
    %60 = tpu.reciprocal %59 {approx = true} : vector<8x16x1xf32> -> vector<8x16x1xf32>
    %61 = vector.broadcast %60 : vector<8x16x1xf32> to vector<8x16x16xf32>
    %62 = arith.mulf %57, %61 : vector<8x16x16xf32>
    %63 = arith.truncf %62 : vector<8x16x16xf32> to vector<8x16x16xbf16>
    "tpu.trace_start"() <{level = 10 : i32, message = "bqk,bkd->bqd"}> : () -> ()
    %cst_19 = arith.constant dense<0.000000e+00> : vector<8x16x32xf32>
    %64 = tpu.matmul %63, %48, %cst_19 {dimension_numbers = #tpu.dot_dimension_numbers<[2], [1], [1], [2], [0, 0, 0, 1, 1, 2], [0], [0]>} : vector<8x16x16xbf16>, vector<8x16x32xbf16>, vector<8x16x32xf32> -> vector<8x16x32xf32>
    "tpu.trace_stop"() : () -> ()
    %65 = vector.extract_strided_slice %12 {offsets = [0, 64], sizes = [128, 32], strides = [1, 1]} : vector<128x128xf32> to vector<128x32xf32>
    %66 = vector.shape_cast %65 : vector<128x32xf32> to vector<8x16x32xf32>
    %67 = arith.truncf %66 : vector<8x16x32xf32> to vector<8x16x32xbf16>
    %68 = vector.extract_strided_slice %13 {offsets = [0, 64], sizes = [128, 32], strides = [1, 1]} : vector<128x128xf32> to vector<128x32xf32>
    %69 = vector.shape_cast %68 : vector<128x32xf32> to vector<8x16x32xf32>
    %70 = arith.truncf %69 : vector<8x16x32xf32> to vector<8x16x32xbf16>
    %71 = vector.extract_strided_slice %14 {offsets = [0, 64], sizes = [128, 32], strides = [1, 1]} : vector<128x128xf32> to vector<128x32xf32>
    %72 = vector.shape_cast %71 : vector<128x32xf32> to vector<8x16x32xf32>
    %73 = arith.truncf %72 : vector<8x16x32xf32> to vector<8x16x32xbf16>
    "tpu.trace_start"() <{level = 10 : i32, message = "bqd,bkd->bqk"}> : () -> ()
    %cst_20 = arith.constant dense<0.000000e+00> : vector<8x16x16xf32>
    %74 = tpu.matmul %67, %70, %cst_20 {dimension_numbers = #tpu.dot_dimension_numbers<[2], [2], [1], [1], [0, 0, 0, 1, 1, 1], [0], [0]>} : vector<8x16x32xbf16>, vector<8x16x32xbf16>, vector<8x16x16xf32> -> vector<8x16x16xf32>
    "tpu.trace_stop"() : () -> ()
    %cst_21 = arith.constant 0.176776692 : f32
    %75 = vector.broadcast %cst_21 : f32 to vector<8x16x16xf32>
    %76 = arith.mulf %74, %75 : vector<8x16x16xf32>
    %77 = arith.addf %76, %5 : vector<8x16x16xf32>
    %cst_22 = arith.constant dense<0xFF800000> : vector<8x16xf32>
    %78 = vector.multi_reduction <maximumf>, %77, %cst_22 [2] : vector<8x16x16xf32> to vector<8x16xf32>
    %79 = vector.shape_cast %78 : vector<8x16xf32> to vector<8x16x1xf32>
    %80 = vector.broadcast %79 : vector<8x16x1xf32> to vector<8x16x16xf32>
    %81 = arith.subf %77, %80 : vector<8x16x16xf32>
    %82 = math.exp %81 : vector<8x16x16xf32>
    %cst_23 = arith.constant dense<0.000000e+00> : vector<8x16xf32>
    %83 = vector.multi_reduction <add>, %82, %cst_23 [2] : vector<8x16x16xf32> to vector<8x16xf32>
    %84 = vector.shape_cast %83 : vector<8x16xf32> to vector<8x16x1xf32>
    %85 = tpu.reciprocal %84 {approx = true} : vector<8x16x1xf32> -> vector<8x16x1xf32>
    %86 = vector.broadcast %85 : vector<8x16x1xf32> to vector<8x16x16xf32>
    %87 = arith.mulf %82, %86 : vector<8x16x16xf32>
    %88 = arith.truncf %87 : vector<8x16x16xf32> to vector<8x16x16xbf16>
    "tpu.trace_start"() <{level = 10 : i32, message = "bqk,bkd->bqd"}> : () -> ()
    %cst_24 = arith.constant dense<0.000000e+00> : vector<8x16x32xf32>
    %89 = tpu.matmul %88, %73, %cst_24 {dimension_numbers = #tpu.dot_dimension_numbers<[2], [1], [1], [2], [0, 0, 0, 1, 1, 2], [0], [0]>} : vector<8x16x16xbf16>, vector<8x16x32xbf16>, vector<8x16x32xf32> -> vector<8x16x32xf32>
    "tpu.trace_stop"() : () -> ()
    %90 = vector.extract_strided_slice %12 {offsets = [0, 96], sizes = [128, 32], strides = [1, 1]} : vector<128x128xf32> to vector<128x32xf32>
    %91 = vector.shape_cast %90 : vector<128x32xf32> to vector<8x16x32xf32>
    %92 = arith.truncf %91 : vector<8x16x32xf32> to vector<8x16x32xbf16>
    %93 = vector.extract_strided_slice %13 {offsets = [0, 96], sizes = [128, 32], strides = [1, 1]} : vector<128x128xf32> to vector<128x32xf32>
    %94 = vector.shape_cast %93 : vector<128x32xf32> to vector<8x16x32xf32>
    %95 = arith.truncf %94 : vector<8x16x32xf32> to vector<8x16x32xbf16>
    %96 = vector.extract_strided_slice %14 {offsets = [0, 96], sizes = [128, 32], strides = [1, 1]} : vector<128x128xf32> to vector<128x32xf32>
    %97 = vector.shape_cast %96 : vector<128x32xf32> to vector<8x16x32xf32>
    %98 = arith.truncf %97 : vector<8x16x32xf32> to vector<8x16x32xbf16>
    "tpu.trace_start"() <{level = 10 : i32, message = "bqd,bkd->bqk"}> : () -> ()
    %cst_25 = arith.constant dense<0.000000e+00> : vector<8x16x16xf32>
    %99 = tpu.matmul %92, %95, %cst_25 {dimension_numbers = #tpu.dot_dimension_numbers<[2], [2], [1], [1], [0, 0, 0, 1, 1, 1], [0], [0]>} : vector<8x16x32xbf16>, vector<8x16x32xbf16>, vector<8x16x16xf32> -> vector<8x16x16xf32>
    "tpu.trace_stop"() : () -> ()
    %cst_26 = arith.constant 0.176776692 : f32
    %100 = vector.broadcast %cst_26 : f32 to vector<8x16x16xf32>
    %101 = arith.mulf %99, %100 : vector<8x16x16xf32>
    %102 = arith.addf %101, %5 : vector<8x16x16xf32>
    %cst_27 = arith.constant dense<0xFF800000> : vector<8x16xf32>
    %103 = vector.multi_reduction <maximumf>, %102, %cst_27 [2] : vector<8x16x16xf32> to vector<8x16xf32>
    %104 = vector.shape_cast %103 : vector<8x16xf32> to vector<8x16x1xf32>
    %105 = vector.broadcast %104 : vector<8x16x1xf32> to vector<8x16x16xf32>
    %106 = arith.subf %102, %105 : vector<8x16x16xf32>
    %107 = math.exp %106 : vector<8x16x16xf32>
    %cst_28 = arith.constant dense<0.000000e+00> : vector<8x16xf32>
    %108 = vector.multi_reduction <add>, %107, %cst_28 [2] : vector<8x16x16xf32> to vector<8x16xf32>
    %109 = vector.shape_cast %108 : vector<8x16xf32> to vector<8x16x1xf32>
    %110 = tpu.reciprocal %109 {approx = true} : vector<8x16x1xf32> -> vector<8x16x1xf32>
    %111 = vector.broadcast %110 : vector<8x16x1xf32> to vector<8x16x16xf32>
    %112 = arith.mulf %107, %111 : vector<8x16x16xf32>
    %113 = arith.truncf %112 : vector<8x16x16xf32> to vector<8x16x16xbf16>
    "tpu.trace_start"() <{level = 10 : i32, message = "bqk,bkd->bqd"}> : () -> ()
    %cst_29 = arith.constant dense<0.000000e+00> : vector<8x16x32xf32>
    %114 = tpu.matmul %113, %98, %cst_29 {dimension_numbers = #tpu.dot_dimension_numbers<[2], [1], [1], [2], [0, 0, 0, 1, 1, 2], [0], [0]>} : vector<8x16x16xbf16>, vector<8x16x32xbf16>, vector<8x16x32xf32> -> vector<8x16x32xf32>
    "tpu.trace_stop"() : () -> ()
    %115 = tpu.concatenate %39, %64, %89, %114 in 2 : vector<8x16x32xf32>, vector<8x16x32xf32>, vector<8x16x32xf32>, vector<8x16x32xf32> -> vector<8x16x128xf32>
    %116 = vector.shape_cast %115 : vector<8x16x128xf32> to vector<128x128xf32>
    %117 = arith.truncf %116 : vector<128x128xf32> to vector<128x128xbf16>
    %c0_30 = arith.constant 0 : index
    %c0_31 = arith.constant 0 : index
    %118 = vector.load %arg5[%c0_30, %c0_31] : memref<128x128xbf16, #tpu.memory_space<vmem>>, vector<128x128xbf16>
    %cst_32 = arith.constant dense<0.000000e+00> : vector<128x128xf32>
    %119 = tpu.matmul %117, %118, %cst_32 {dimension_numbers = #tpu.dot_dimension_numbers<[1], [0], [0], [1], [0, 0, 1, 1], [], []>} : vector<128x128xbf16>, vector<128x128xbf16>, vector<128x128xf32> -> vector<128x128xf32>
    %c0_33 = arith.constant 0 : index
    %c0_34 = arith.constant 0 : index
    %120 = vector.load %arg8[%c0_33, %c0_34] : memref<4x128xf32, #tpu.memory_space<vmem>>, vector<1x128xf32>
    %121 = vector.broadcast %120 : vector<1x128xf32> to vector<128x128xf32>
    %122 = arith.addf %119, %121 : vector<128x128xf32>
    %123 = arith.addf %122, %1 : vector<128x128xf32>
    %cst_35 = arith.constant dense<0.000000e+00> : vector<128xf32>
    %124 = vector.multi_reduction <add>, %123, %cst_35 [1] : vector<128x128xf32> to vector<128xf32>
    %125 = vector.shape_cast %124 : vector<128xf32> to vector<128x1xf32>
    %cst_36 = arith.constant 1.280000e+02 : f32
    %126 = vector.broadcast %cst_36 : f32 to vector<128x1xf32>
    %127 = arith.divf %125, %126 : vector<128x1xf32>
    %128 = vector.broadcast %127 : vector<128x1xf32> to vector<128x128xf32>
    %129 = arith.subf %123, %128 : vector<128x128xf32>
    %130 = arith.mulf %129, %129 : vector<128x128xf32>
    %cst_37 = arith.constant dense<0.000000e+00> : vector<128xf32>
    %131 = vector.multi_reduction <add>, %130, %cst_37 [1] : vector<128x128xf32> to vector<128xf32>
    %132 = vector.shape_cast %131 : vector<128xf32> to vector<128x1xf32>
    %cst_38 = arith.constant 1.280000e+02 : f32
    %133 = vector.broadcast %cst_38 : f32 to vector<128x1xf32>
    %134 = arith.divf %132, %133 : vector<128x1xf32>
    %cst_39 = arith.constant 9.99999974E-6 : f32
    %135 = vector.broadcast %cst_39 : f32 to vector<128x1xf32>
    %136 = arith.addf %134, %135 : vector<128x1xf32>
    %137 = math.rsqrt %136 : vector<128x1xf32>
    %138 = vector.broadcast %137 : vector<128x1xf32> to vector<128x128xf32>
    %139 = arith.mulf %129, %138 : vector<128x128xf32>
    %c1 = arith.constant 1 : index
    %c0_40 = arith.constant 0 : index
    %140 = vector.load %arg8[%c1, %c0_40] : memref<4x128xf32, #tpu.memory_space<vmem>>, vector<1x128xf32>
    %141 = vector.broadcast %140 : vector<1x128xf32> to vector<128x128xf32>
    %142 = arith.mulf %139, %141 : vector<128x128xf32>
    %c2 = arith.constant 2 : index
    %c0_41 = arith.constant 0 : index
    %143 = vector.load %arg8[%c2, %c0_41] : memref<4x128xf32, #tpu.memory_space<vmem>>, vector<1x128xf32>
    %144 = vector.broadcast %143 : vector<1x128xf32> to vector<128x128xf32>
    %145 = arith.addf %142, %144 : vector<128x128xf32>
    %146 = arith.truncf %145 : vector<128x128xf32> to vector<128x128xbf16>
    %c0_42 = arith.constant 0 : index
    %c0_43 = arith.constant 0 : index
    %147 = vector.load %arg6[%c0_42, %c0_43] : memref<128x256xbf16, #tpu.memory_space<vmem>>, vector<128x256xbf16>
    %cst_44 = arith.constant dense<0.000000e+00> : vector<128x256xf32>
    %148 = tpu.matmul %146, %147, %cst_44 {dimension_numbers = #tpu.dot_dimension_numbers<[1], [0], [0], [1], [0, 0, 1, 1], [], []>} : vector<128x128xbf16>, vector<128x256xbf16>, vector<128x256xf32> -> vector<128x256xf32>
    %c0_45 = arith.constant 0 : index
    %c0_46 = arith.constant 0 : index
    %149 = vector.load %arg9[%c0_45, %c0_46] : memref<1x256xf32, #tpu.memory_space<vmem>>, vector<1x256xf32>
    %150 = vector.broadcast %149 : vector<1x256xf32> to vector<128x256xf32>
    %151 = arith.addf %148, %150 : vector<128x256xf32>
    %cst_47 = arith.constant 0.000000e+00 : f32
    %152 = vector.broadcast %cst_47 : f32 to vector<128x256xf32>
    %153 = arith.maximumf %151, %152 : vector<128x256xf32>
    %154 = arith.truncf %153 : vector<128x256xf32> to vector<128x256xbf16>
    %c0_48 = arith.constant 0 : index
    %c0_49 = arith.constant 0 : index
    %155 = vector.load %arg7[%c0_48, %c0_49] : memref<256x128xbf16, #tpu.memory_space<vmem>>, vector<256x128xbf16>
    %cst_50 = arith.constant dense<0.000000e+00> : vector<128x128xf32>
    %156 = tpu.matmul %154, %155, %cst_50 {dimension_numbers = #tpu.dot_dimension_numbers<[1], [0], [0], [1], [0, 0, 1, 1], [], []>} : vector<128x256xbf16>, vector<256x128xbf16>, vector<128x128xf32> -> vector<128x128xf32>
    %c3 = arith.constant 3 : index
    %c0_51 = arith.constant 0 : index
    %157 = vector.load %arg8[%c3, %c0_51] : memref<4x128xf32, #tpu.memory_space<vmem>>, vector<1x128xf32>
    %158 = vector.broadcast %157 : vector<1x128xf32> to vector<128x128xf32>
    %159 = arith.addf %156, %158 : vector<128x128xf32>
    %160 = vector.shape_cast %159 : vector<128x128xf32> to vector<8x16x128xf32>
    %c0_52 = arith.constant 0 : index
    %c0_53 = arith.constant 0 : index
    %c0_54 = arith.constant 0 : index
    %161 = vector.load %arg10[%c0_52, %c0_53, %c0_54] : memref<8x16x128xf32, #tpu.memory_space<vmem>>, vector<8x16x128xf32>
    tpu.vector_store %arg10[%c0_52, %c0_53, %c0_54], %160 {strides = array<i32>} : memref<8x16x128xf32, #tpu.memory_space<vmem>>, vector<8x16x128xf32>,
    return
  }
  func.func @transform_0(%arg0: i32) -> (i32, i32, i32) {
    %c0_i32 = arith.constant 0 : i32
    %c0_i32_0 = arith.constant 0 : i32
    %c0_i32_1 = arith.constant 0 : i32
    return %arg0, %c0_i32, %c0_i32_0 : i32, i32, i32
  }
  func.func @transform_1(%arg0: i32) -> (i32, i32, i32) {
    %c0_i32 = arith.constant 0 : i32
    %c0_i32_0 = arith.constant 0 : i32
    %c0_i32_1 = arith.constant 0 : i32
    return %arg0, %c0_i32, %c0_i32_0 : i32, i32, i32
  }
  func.func @transform_2(%arg0: i32) -> (i32, i32) {
    %c0_i32 = arith.constant 0 : i32
    %c0_i32_0 = arith.constant 0 : i32
    %c0_i32_1 = arith.constant 0 : i32
    return %c0_i32, %c0_i32_0 : i32, i32
  }
  func.func @transform_3(%arg0: i32) -> (i32, i32) {
    %c0_i32 = arith.constant 0 : i32
    %c0_i32_0 = arith.constant 0 : i32
    %c0_i32_1 = arith.constant 0 : i32
    return %c0_i32, %c0_i32_0 : i32, i32
  }
  func.func @transform_4(%arg0: i32) -> (i32, i32) {
    %c0_i32 = arith.constant 0 : i32
    %c0_i32_0 = arith.constant 0 : i32
    %c0_i32_1 = arith.constant 0 : i32
    return %c0_i32, %c0_i32_0 : i32, i32
  }
  func.func @transform_5(%arg0: i32) -> (i32, i32) {
    %c0_i32 = arith.constant 0 : i32
    %c0_i32_0 = arith.constant 0 : i32
    %c0_i32_1 = arith.constant 0 : i32
    return %c0_i32, %c0_i32_0 : i32, i32
  }
  func.func @transform_6(%arg0: i32) -> (i32, i32) {
    %c0_i32 = arith.constant 0 : i32
    %c0_i32_0 = arith.constant 0 : i32
    %c0_i32_1 = arith.constant 0 : i32
    return %c0_i32, %c0_i32_0 : i32, i32
  }
  func.func @transform_7(%arg0: i32) -> (i32, i32) {
    %c0_i32 = arith.constant 0 : i32
    %c0_i32_0 = arith.constant 0 : i32
    %c0_i32_1 = arith.constant 0 : i32
    return %c0_i32, %c0_i32_0 : i32, i32
  }
  func.func @transform_8(%arg0: i32) -> (i32, i32) {
    %c0_i32 = arith.constant 0 : i32
    %c0_i32_0 = arith.constant 0 : i32
    %c0_i32_1 = arith.constant 0 : i32
    return %c0_i32, %c0_i32_0 : i32, i32
  }
  func.func @transform_9(%arg0: i32) -> (i32, i32, i32) {
    %c0_i32 = arith.constant 0 : i32
    %c0_i32_0 = arith.constant 0 : i32
    %c0_i32_1 = arith.constant 0 : i32
    return %arg0, %c0_i32, %c0_i32_0 : i32, i32, i32
  }
}

</mosaic_0001>

<llo_original>
// kernel: tpu_custom_call.1
$region0: #{tpu_custom_call.1}
  #allocation0 [shape = 'u32[]', space=smem, size = 0x4, offset = 0x4, fixed_abs, tag = 'smem constant byte address 0x4 - core index']
  #allocation1 [shape = 'u32[144,128]{1,0:T(1,128)}', space=vmem, size = 0x12000, scoped, tag = 'internal scratch']
  %s0 = inlined_call_operand.hbm [shape: f32[16,16,128], index: 0, kind: input, shape index: {}]
  %s1 = inlined_call_operand.hbm [shape: s8[16,16,16], index: 1, kind: input, shape index: {}]
  %s2 = inlined_call_operand.hbm [shape: bf16[128,384], index: 2, kind: input, shape index: {}]
  %s3 = inlined_call_operand.vmem [shape: f32[1,384], index: 3, kind: input, shape index: {}]
  %s4 = inlined_call_operand.hbm [shape: bf16[128,128], index: 4, kind: input, shape index: {}]
  %s5 = inlined_call_operand.hbm [shape: bf16[128,256], index: 5, kind: input, shape index: {}]
  %s6 = inlined_call_operand.hbm [shape: bf16[256,128], index: 6, kind: input, shape index: {}]
  %s7 = inlined_call_operand.vmem [shape: f32[4,128], index: 7, kind: input, shape index: {}]
  %s8 = inlined_call_operand.vmem [shape: f32[1,256], index: 8, kind: input, shape index: {}]
  %s9 = inlined_call_operand.hbm [shape: f32[16,16,128], index: 9, kind: output, shape index: {}]
  %s10 = sld [smem:[#allocation0]]
  $region93: #{tpu_custom_call.1} parent=0
    _
  %s12 = ssub.s32 1, %s10
  %s13 = scalar_select 0, %s12, %s10
  $region1: #{tpu_custom_call.1} parent=0
    #allocation2 [shape = 'u8[131072]{0}', space=vmem, size = 0x20000, scoped, tag = 'input window, operand 0']
    #allocation3 [shape = 's32[2]{0}', space=sflag, size = 0x8, scoped, tag = 'scoped memory for tpu_custom_call.1']
    #allocation4 [shape = 's32[2]{0}', space=sflag, size = 0x8, scoped, tag = 'scoped memory for tpu_custom_call.1']
    #allocation5 [shape = 'u8[32768]{0}', space=vmem, size = 0x8000, scoped, tag = 'input window, operand 1']
    #allocation6 [shape = 's32[2]{0}', space=sflag, size = 0x8, scoped, tag = 'scoped memory for tpu_custom_call.1']
    #allocation7 [shape = 'u8[98304]{0}', space=vmem, size = 0x18000, scoped, tag = 'input window, operand 2, single buffered']
    #allocation8 [shape = 'u8[32768]{0}', space=vmem, size = 0x8000, scoped, tag = 'input window, operand 4, single buffered']
    #allocation9 [shape = 's32[1]{0}', space=sflag, size = 0x4, scoped, tag = 'scoped memory for tpu_custom_call.1']
    #allocation10 [shape = 'u8[65536]{0}', space=vmem, size = 0x10000, scoped, tag = 'input window, operand 5, single buffered']
    #allocation11 [shape = 'u8[65536]{0}', space=vmem, size = 0x10000, scoped, tag = 'input window, operand 6, single buffered']
    #allocation12 [shape = 's32[1]{0}', space=sflag, size = 0x4, scoped, tag = 'scoped memory for tpu_custom_call.1']
    #allocation13 [shape = 'u8[131072]{0}', space=vmem, size = 0x20000, scoped, tag = 'output window, operand 0']
    %14 = vsyncpa [#allocation3], 0
    %s15 = scalar_lea.sflag [#allocation3], 1
    %16 = vsyncpa %s15, 0
    %17 = vsyncpa [#allocation6], 0
    %s18 = scalar_lea.sflag [#allocation6], 1
    %19 = vsyncpa %s18, 0
    %20 = vsyncpa [#allocation9], 0
    %21 = vsyncpa [#allocation12], 0
    %22 = vsyncpa [#allocation4], 0
    %s23 = scalar_lea.sflag [#allocation4], 1
    %24 = vsyncpa %s23, 0
    loop: start=0, step=1, limit=4
    $region2: #{tpu_custom_call.1} parent=1 // loop_pre_header
      _
    $region3: #{tpu_custom_call.1} parent=1 // loop_header
      %s26 = sphi 0, %s30
      %p27 = scmp.ge.s32.totalorder %s26, 4
      %s36 = sphi 0, %s38
      %s39 = sphi 0, %s36
      %s40 = sphi 0, %s39
      %s56 = sphi 0, %s40
      %s62 = sphi 0, %s64
      %s65 = sphi 0, %s62
      %s66 = sphi 0, %s65
      %s82 = sphi 0, %s66
      %s86 = sphi 0, %s86
      %s88 = sphi 0, %s86
      %s89 = sphi 0, %s88
      %s103 = sphi 0, %s89
      %s107 = sphi 0, %s107
      %s109 = sphi 0, %s107
      %s110 = sphi 0, %s109
      %s124 = sphi 0, %s110
      %s128 = sphi 0, %s128
      %s130 = sphi 0, %s128
      %s131 = sphi 0, %s130
      %s145 = sphi 0, %s131
      %s149 = sphi 0, %s149
      %s151 = sphi 0, %s149
      %s152 = sphi 0, %s151
      %s166 = sphi 0, %s152
      %s170 = sphi 0, %s170
      %s172 = sphi 0, %s170
      %s173 = sphi 0, %s172
      %s187 = sphi 0, %s173
      %s191 = sphi 0, %s191
      %s193 = sphi 0, %s191
      %s194 = sphi 0, %s193
      %s208 = sphi 0, %s194
      %s212 = sphi 0, %s212
      %s214 = sphi 0, %s212
      %s215 = sphi 0, %s214
      %s229 = sphi 0, %s215
      %s235 = sphi 0, %s237
      %s238 = sphi 0, %s235
      %s239 = sphi 0, %s238
      %s255 = sphi 0, %s239
    $region4: #{tpu_custom_call.1} parent=1 // loop_header_branch
      %29 = sbr.rel (%p27) target = $region8
    $region5: #{tpu_custom_call.1} parent=1 // loop_body
      %s31 = ssub.s32 %s26, 1
      %s32 = ssub.s32 %s26, 2
      %s33 = sadd.s32 %s26, 1
      %s34 = ssub.s32 %s26, %s33
      %p35 = scmp.eq.s32.totalorder %s34, 0
      %s37 = sadd.s32 %s36, 1
      %s38 = scalar_select %p35, %s36, %s37
      %p41 = pneg %p35
      %p42 = scmp.eq.s32.totalorder %s26, 1
      %p43 = por %p41, %p42
      %p44 = scmp.ne.s32.totalorder %s36, %s39
      %p45 = scmp.eq.s32.totalorder %s26, 0
      %p46 = por %p44, %p45
      %p47 = scmp.ne.s32.totalorder %s36, %s39
      %p48 = scmp.eq.s32.totalorder %s31, 1
      %p49 = por %p47, %p48
      %p50 = scmp.ne.s32.totalorder %s39, %s40
      %p51 = scmp.eq.s32.totalorder %s31, 0
      %p52 = por %p50, %p51
      %p53 = scmp.ne.s32.totalorder %s39, %s40
      %p54 = scmp.eq.s32.totalorder %s32, 1
      %p55 = por %p53, %p54
      %p57 = scmp.ne.s32.totalorder %s40, %s56
      %p58 = scmp.eq.s32.totalorder %s32, 0
      %p59 = por %p57, %p58
      %s60 = ssub.s32 %s26, %s33
      %p61 = scmp.eq.s32.totalorder %s60, 0
      %s63 = sadd.s32 %s62, 1
      %s64 = scalar_select %p61, %s62, %s63
      %p67 = pneg %p61
      %p68 = scmp.eq.s32.totalorder %s26, 1
      %p69 = por %p67, %p68
      %p70 = scmp.ne.s32.totalorder %s62, %s65
      %p71 = scmp.eq.s32.totalorder %s26, 0
      %p72 = por %p70, %p71
      %p73 = scmp.ne.s32.totalorder %s62, %s65
      %p74 = scmp.eq.s32.totalorder %s31, 1
      %p75 = por %p73, %p74
      %p76 = scmp.ne.s32.totalorder %s65, %s66
      %p77 = scmp.eq.s32.totalorder %s31, 0
      %p78 = por %p76, %p77
      %p79 = scmp.ne.s32.totalorder %s65, %s66
      %p80 = scmp.eq.s32.totalorder %s32, 1
      %p81 = por %p79, %p80
      %p83 = scmp.ne.s32.totalorder %s66, %s82
      %p84 = scmp.eq.s32.totalorder %s32, 0
      %p85 = por %p83, %p84
      %s87 = sadd.s32 %s86, 1
      %p90 = scmp.eq.s32.totalorder %s26, 1
      %p91 = scmp.ne.s32.totalorder %s86, %s88
      %p92 = scmp.eq.s32.totalorder %s26, 0
      %p93 = por %p91, %p92
      %p94 = scmp.ne.s32.totalorder %s86, %s88
      %p95 = scmp.eq.s32.totalorder %s31, 1
      %p96 = por %p94, %p95
      %p97 = scmp.ne.s32.totalorder %s88, %s89
      %p98 = scmp.eq.s32.totalorder %s31, 0
      %p99 = por %p97, %p98
      %p100 = scmp.ne.s32.totalorder %s88, %s89
      %p101 = scmp.eq.s32.totalorder %s32, 1
      %p102 = por %p100, %p101
      %p104 = scmp.ne.s32.totalorder %s89, %s103
      %p105 = scmp.eq.s32.totalorder %s32, 0
      %p106 = por %p104, %p105
      %s108 = sadd.s32 %s107, 1
      %p111 = scmp.eq.s32.totalorder %s26, 1
      %p112 = scmp.ne.s32.totalorder %s107, %s109
      %p113 = scmp.eq.s32.totalorder %s26, 0
      %p114 = por %p112, %p113
      %p115 = scmp.ne.s32.totalorder %s107, %s109
      %p116 = scmp.eq.s32.totalorder %s31, 1
      %p117 = por %p115, %p116
      %p118 = scmp.ne.s32.totalorder %s109, %s110
      %p119 = scmp.eq.s32.totalorder %s31, 0
      %p120 = por %p118, %p119
      %p121 = scmp.ne.s32.totalorder %s109, %s110
      %p122 = scmp.eq.s32.totalorder %s32, 1
      %p123 = por %p121, %p122
      %p125 = scmp.ne.s32.totalorder %s110, %s124
      %p126 = scmp.eq.s32.totalorder %s32, 0
      %p127 = por %p125, %p126
      %s129 = sadd.s32 %s128, 1
      %p132 = scmp.eq.s32.totalorder %s26, 1
      %p133 = scmp.ne.s32.totalorder %s128, %s130
      %p134 = scmp.eq.s32.totalorder %s26, 0
      %p135 = por %p133, %p134
      %p136 = scmp.ne.s32.totalorder %s128, %s130
      %p137 = scmp.eq.s32.totalorder %s31, 1
      %p138 = por %p136, %p137
      %p139 = scmp.ne.s32.totalorder %s130, %s131
      %p140 = scmp.eq.s32.totalorder %s31, 0
      %p141 = por %p139, %p140
      %p142 = scmp.ne.s32.totalorder %s130, %s131
      %p143 = scmp.eq.s32.totalorder %s32, 1
      %p144 = por %p142, %p143
      %p146 = scmp.ne.s32.totalorder %s131, %s145
      %p147 = scmp.eq.s32.totalorder %s32, 0
      %p148 = por %p146, %p147
      %s150 = sadd.s32 %s149, 1
      %p153 = scmp.eq.s32.totalorder %s26, 1
      %p154 = scmp.ne.s32.totalorder %s149, %s151
      %p155 = scmp.eq.s32.totalorder %s26, 0
      %p156 = por %p154, %p155
      %p157 = scmp.ne.s32.totalorder %s149, %s151
      %p158 = scmp.eq.s32.totalorder %s31, 1
      %p159 = por %p157, %p158
      %p160 = scmp.ne.s32.totalorder %s151, %s152
      %p161 = scmp.eq.s32.totalorder %s31, 0
      %p162 = por %p160, %p161
      %p163 = scmp.ne.s32.totalorder %s151, %s152
      %p164 = scmp.eq.s32.totalorder %s32, 1
      %p165 = por %p163, %p164
      %p167 = scmp.ne.s32.totalorder %s152, %s166
      %p168 = scmp.eq.s32.totalorder %s32, 0
      %p169 = por %p167, %p168
      %s171 = sadd.s32 %s170, 1
      %p174 = scmp.eq.s32.totalorder %s26, 1
      %p175 = scmp.ne.s32.totalorder %s170, %s172
      %p176 = scmp.eq.s32.totalorder %s26, 0
      %p177 = por %p175, %p176
      %p178 = scmp.ne.s32.totalorder %s170, %s172
      %p179 = scmp.eq.s32.totalorder %s31, 1
      %p180 = por %p178, %p179
      %p181 = scmp.ne.s32.totalorder %s172, %s173
      %p182 = scmp.eq.s32.totalorder %s31, 0
      %p183 = por %p181, %p182
      %p184 = scmp.ne.s32.totalorder %s172, %s173
      %p185 = scmp.eq.s32.totalorder %s32, 1
      %p186 = por %p184, %p185
      %p188 = scmp.ne.s32.totalorder %s173, %s187
      %p189 = scmp.eq.s32.totalorder %s32, 0
      %p190 = por %p188, %p189
      %s192 = sadd.s32 %s191, 1
      %p195 = scmp.eq.s32.totalorder %s26, 1
      %p196 = scmp.ne.s32.totalorder %s191, %s193
      %p197 = scmp.eq.s32.totalorder %s26, 0
      %p198 = por %p196, %p197
      %p199 = scmp.ne.s32.totalorder %s191, %s193
      %p200 = scmp.eq.s32.totalorder %s31, 1
      %p201 = por %p199, %p200
      %p202 = scmp.ne.s32.totalorder %s193, %s194
      %p203 = scmp.eq.s32.totalorder %s31, 0
      %p204 = por %p202, %p203
      %p205 = scmp.ne.s32.totalorder %s193, %s194
      %p206 = scmp.eq.s32.totalorder %s32, 1
      %p207 = por %p205, %p206
      %p209 = scmp.ne.s32.totalorder %s194, %s208
      %p210 = scmp.eq.s32.totalorder %s32, 0
      %p211 = por %p209, %p210
      %s213 = sadd.s32 %s212, 1
      %p216 = scmp.eq.s32.totalorder %s26, 1
      %p217 = scmp.ne.s32.totalorder %s212, %s214
      %p218 = scmp.eq.s32.totalorder %s26, 0
      %p219 = por %p217, %p218
      %p220 = scmp.ne.s32.totalorder %s212, %s214
      %p221 = scmp.eq.s32.totalorder %s31, 1
      %p222 = por %p220, %p221
      %p223 = scmp.ne.s32.totalorder %s214, %s215
      %p224 = scmp.eq.s32.totalorder %s31, 0
      %p225 = por %p223, %p224
      %p226 = scmp.ne.s32.totalorder %s214, %s215
      %p227 = scmp.eq.s32.totalorder %s32, 1
      %p228 = por %p226, %p227
      %p230 = scmp.ne.s32.totalorder %s215, %s229
      %p231 = scmp.eq.s32.totalorder %s32, 0
      %p232 = por %p230, %p231
      %s233 = ssub.s32 %s26, %s33
      %p234 = scmp.eq.s32.totalorder %s233, 0
      %s236 = sadd.s32 %s235, 1
      %s237 = scalar_select %p234, %s235, %s236
      %p240 = pneg %p234
      %p241 = scmp.eq.s32.totalorder %s26, 1
      %p242 = por %p240, %p241
      %p243 = scmp.ne.s32.totalorder %s235, %s238
      %p244 = scmp.eq.s32.totalorder %s26, 0
      %p245 = por %p243, %p244
      %p246 = scmp.ne.s32.totalorder %s235, %s238
      %p247 = scmp.eq.s32.totalorder %s31, 1
      %p248 = por %p246, %p247
      %p249 = scmp.ne.s32.totalorder %s238, %s239
      %p250 = scmp.eq.s32.totalorder %s31, 0
      %p251 = por %p249, %p250
      %p252 = scmp.ne.s32.totalorder %s238, %s239
      %p253 = scmp.eq.s32.totalorder %s32, 1
      %p254 = por %p252, %p253
      %p256 = scmp.ne.s32.totalorder %s239, %s255
      %p257 = scmp.eq.s32.totalorder %s32, 0
      %p258 = por %p256, %p257
      %p259 = scmp.le.s32.totalorder 1, %s26
      %p260 = scmp.lt.s32.totalorder %s26, 3
      %p261 = pnand %p259, %p260
      %p262 = pneg %p261
      // Predicated region
      $region9: #{tpu_custom_call.1} parent=5 // pred_check
        _
      $region10: #{tpu_custom_call.1} parent=5 // pred_check_branch
        %264 = sbr.rel (%p261) target = $region12
      $region11: #{tpu_custom_call.1} parent=5 // pred_region
        %s265 = ssub.s32 %s26, 1
        // Predicated region
        $region13: #{tpu_custom_call.1} parent=11 // pred_check
          %p266 = pneg %p99
        $region14: #{tpu_custom_call.1} parent=11 // pred_check_branch
          %268 = sbr.rel (%p266) target = $region16
        $region15: #{tpu_custom_call.1} parent=11 // pred_region
          %s270 = ssub.s32 3072, 3072
          %271 = vsyncadd [#allocation6], %s270
          %s272 = sshll.u32 [#allocation7], 4
          %s273 = int_to_ptr.vmem [resolvable:$true] %s272
          %278 = dma.hbm_to_vmem [thread:$0]  %s2, 3072, %s273, [#allocation6], 192, 192, 12
        $region16: #{tpu_custom_call.1} parent=11 // pred_fallthru
          _
        // Predicated region
        $region17: #{tpu_custom_call.1} parent=11 // pred_check
          %p279 = pneg %p120
        $region18: #{tpu_custom_call.1} parent=11 // pred_check_branch
          %281 = sbr.rel (%p279) target = $region20
        $region19: #{tpu_custom_call.1} parent=11 // pred_region
          _
        $region20: #{tpu_custom_call.1} parent=11 // pred_fallthru
          _
        // Predicated region
        $region21: #{tpu_custom_call.1} parent=11 // pred_check
          %p282 = pneg %p141
        $region22: #{tpu_custom_call.1} parent=11 // pred_check_branch
          %284 = sbr.rel (%p282) target = $region24
        $region23: #{tpu_custom_call.1} parent=11 // pred_region
          %s286 = ssub.s32 1024, 1024
          %287 = vsyncadd [#allocation9], %s286
          %s288 = sshll.u32 [#allocation8], 4
          %s289 = int_to_ptr.vmem [resolvable:$true] %s288
          %294 = dma.hbm_to_vmem [thread:$0]  %s4, 1024, %s289, [#allocation9], 64, 64, 4
        $region24: #{tpu_custom_call.1} parent=11 // pred_fallthru
          _
        // Predicated region
        $region25: #{tpu_custom_call.1} parent=11 // pred_check
          %p295 = pneg %p162
        $region26: #{tpu_custom_call.1} parent=11 // pred_check_branch
          %297 = sbr.rel (%p295) target = $region28
        $region27: #{tpu_custom_call.1} parent=11 // pred_region
          %s299 = ssub.s32 2048, 2048
          %300 = vsyncadd [#allocation9], %s299
          %s301 = sshll.u32 [#allocation10], 4
          %s302 = int_to_ptr.vmem [resolvable:$true] %s301
          %307 = dma.hbm_to_vmem [thread:$0]  %s5, 2048, %s302, [#allocation9], 128, 128, 8
        $region28: #{tpu_custom_call.1} parent=11 // pred_fallthru
          _
        // Predicated region
        $region29: #{tpu_custom_call.1} parent=11 // pred_check
          %p308 = pneg %p183
        $region30: #{tpu_custom_call.1} parent=11 // pred_check_branch
          %310 = sbr.rel (%p308) target = $region32
        $region31: #{tpu_custom_call.1} parent=11 // pred_region
          %s312 = ssub.s32 2048, 2048
          %313 = vsyncadd [#allocation12], %s312
          %s314 = sshll.u32 [#allocation11], 4
          %s315 = int_to_ptr.vmem [resolvable:$true] %s314
          %320 = dma.hbm_to_vmem [thread:$0]  %s6, 2048, %s315, [#allocation12], 64, 64, 4
        $region32: #{tpu_custom_call.1} parent=11 // pred_fallthru
          _
        // Predicated region
        $region33: #{tpu_custom_call.1} parent=11 // pred_check
          %p321 = pneg %p204
        $region34: #{tpu_custom_call.1} parent=11 // pred_check_branch
          %323 = sbr.rel (%p321) target = $region36
        $region35: #{tpu_custom_call.1} parent=11 // pred_region
          _
        $region36: #{tpu_custom_call.1} parent=11 // pred_fallthru
          _
        // Predicated region
        $region37: #{tpu_custom_call.1} parent=11 // pred_check
          %p324 = pneg %p225
        $region38: #{tpu_custom_call.1} parent=11 // pred_check_branch
          %326 = sbr.rel (%p324) target = $region40
        $region39: #{tpu_custom_call.1} parent=11 // pred_region
          _
        $region40: #{tpu_custom_call.1} parent=11 // pred_fallthru
          _
      $region12: #{tpu_custom_call.1} parent=5 // pred_fallthru
        _
      %p327 = scmp.lt.s32.totalorder %s26, 2
      // Predicated region
      $region41: #{tpu_custom_call.1} parent=5 // pred_check
        %p328 = pneg %p327
      $region42: #{tpu_custom_call.1} parent=5 // pred_check_branch
        %330 = sbr.rel (%p328) target = $region44
      $region43: #{tpu_custom_call.1} parent=5 // pred_region
        // Predicated region
        $region45: #{tpu_custom_call.1} parent=43 // pred_check
          %p331 = pneg %p46
        $region46: #{tpu_custom_call.1} parent=43 // pred_check_branch
          %333 = sbr.rel (%p331) target = $region48
        $region47: #{tpu_custom_call.1} parent=43 // pred_region
          %s334 = sand.u32 %s36, 1
          %s335 = scalar_lea.sflag [#allocation3], %s334
          %s336 = sand.u32 %s36, 1
          %s337 = smul.addr %s336, 128
          %s338 = scalar_lea.vmem [#allocation2], %s337
          %s339 = smul.u32 8, %s26
          %s341 = ssub.s32 2048, 2048
          %342 = vsyncadd %s335, %s341
          %s343 = smul.addr %s339, 2
          %s344 = smul.addr %s343, 128
          %s345 = scalar_lea.hbm %s0, %s344
          %s346 = sshll.u32 %s338, 4
          %s347 = int_to_ptr.vmem [resolvable:$true] %s346
          %352 = dma.hbm_to_vmem [thread:$0]  %s345, 2048, %s347, %s335, 128, 128, 8
        $region48: #{tpu_custom_call.1} parent=43 // pred_fallthru
          _
        // Predicated region
        $region49: #{tpu_custom_call.1} parent=43 // pred_check
          %p353 = pneg %p72
        $region50: #{tpu_custom_call.1} parent=43 // pred_check_branch
          %355 = sbr.rel (%p353) target = $region52
        $region51: #{tpu_custom_call.1} parent=43 // pred_region
          %s356 = sand.u32 %s26, 1
          %s357 = scalar_lea.sflag [#allocation6], %s356
          %s358 = sand.u32 %s62, 1
          %s359 = smul.addr %s358, 32
          %s360 = scalar_lea.vmem [#allocation5], %s359
          %s361 = smul.u32 8, %s26
          %s363 = ssub.s32 512, 512
          %364 = vsyncadd %s357, %s363
          %s365 = smul.addr %s361, 2
          %s366 = smul.addr %s365, 32
          %s367 = scalar_lea.hbm %s1, %s366
          %s368 = sshll.u32 %s360, 4
          %s369 = int_to_ptr.vmem [resolvable:$true] %s368
          %374 = dma.hbm_to_vmem [thread:$0]  %s367, 512, %s369, %s357, 32, 32, 2
        $region52: #{tpu_custom_call.1} parent=43 // pred_fallthru
          _
      $region44: #{tpu_custom_call.1} parent=5 // pred_fallthru
        _
      %p375 = scmp.le.s32.totalorder 1, %s26
      %p376 = scmp.lt.s32.totalorder %s26, 3
      %p377 = pnand %p375, %p376
      %p378 = pneg %p377
      // Predicated region
      $region53: #{tpu_custom_call.1} parent=5 // pred_check
        _
      $region54: #{tpu_custom_call.1} parent=5 // pred_check_branch
        %380 = sbr.rel (%p377) target = $region56
      $region55: #{tpu_custom_call.1} parent=5 // pred_region
        %s381 = ssub.s32 %s26, 1
        %s382 = sand.u32 %s39, 1
        %s383 = scalar_lea.sflag [#allocation3], %s382
        %s384 = sand.u32 %s39, 1
        %s385 = smul.addr %s384, 128
        %s386 = scalar_lea.vmem [#allocation2], %s385
        // Predicated region
        $region57: #{tpu_custom_call.1} parent=55 // pred_check
          %p387 = pneg %p52
        $region58: #{tpu_custom_call.1} parent=55 // pred_check_branch
          %389 = sbr.rel (%p387) target = $region60
        $region59: #{tpu_custom_call.1} parent=55 // pred_region
          %390 = dma.done %s383, 2048
        $region60: #{tpu_custom_call.1} parent=55 // pred_fallthru
          _
        %s391 = sand.u32 %s31, 1
        %s392 = scalar_lea.sflag [#allocation6], %s391
        %s393 = sand.u32 %s65, 1
        %s394 = smul.addr %s393, 32
        %s395 = scalar_lea.vmem [#allocation5], %s394
        // Predicated region
        $region61: #{tpu_custom_call.1} parent=55 // pred_check
          %p396 = pneg %p78
        $region62: #{tpu_custom_call.1} parent=55 // pred_check_branch
          %398 = sbr.rel (%p396) target = $region64
        $region63: #{tpu_custom_call.1} parent=55 // pred_region
          %399 = dma.done %s392, 512
        $region64: #{tpu_custom_call.1} parent=55 // pred_fallthru
          _
        // Predicated region
        $region65: #{tpu_custom_call.1} parent=55 // pred_check
          %p400 = pneg %p99
        $region66: #{tpu_custom_call.1} parent=55 // pred_check_branch
          %402 = sbr.rel (%p400) target = $region68
        $region67: #{tpu_custom_call.1} parent=55 // pred_region
          %403 = dma.done [#allocation6], 3072
        $region68: #{tpu_custom_call.1} parent=55 // pred_fallthru
          _
        // Predicated region
        $region69: #{tpu_custom_call.1} parent=55 // pred_check
          %p404 = pneg %p141
        $region70: #{tpu_custom_call.1} parent=55 // pred_check_branch
          %406 = sbr.rel (%p404) target = $region72
        $region71: #{tpu_custom_call.1} parent=55 // pred_region
          %407 = dma.done [#allocation9], 1024
        $region72: #{tpu_custom_call.1} parent=55 // pred_fallthru
          _
        // Predicated region
        $region73: #{tpu_custom_call.1} parent=55 // pred_check
          %p408 = pneg %p162
        $region74: #{tpu_custom_call.1} parent=55 // pred_check_branch
          %410 = sbr.rel (%p408) target = $region76
        $region75: #{tpu_custom_call.1} parent=55 // pred_region
          %411 = dma.done [#allocation9], 2048
        $region76: #{tpu_custom_call.1} parent=55 // pred_fallthru
          _
        // Predicated region
        $region77: #{tpu_custom_call.1} parent=55 // pred_check
          %p412 = pneg %p183
        $region78: #{tpu_custom_call.1} parent=55 // pred_check_branch
          %414 = sbr.rel (%p412) target = $region80
        $region79: #{tpu_custom_call.1} parent=55 // pred_region
          %415 = dma.done [#allocation12], 2048
        $region80: #{tpu_custom_call.1} parent=55 // pred_fallthru
          _
        %s416 = sand.u32 %s39, 1
        %s417 = scalar_lea.sflag [#allocation3], %s416
        %s418 = sand.u32 %s39, 1
        %s419 = smul.addr %s418, 128
        %s420 = scalar_lea.vmem [#allocation2], %s419
        %p421 = pneg %p52
        %p422 = pneg %p49
        %s423 = sand.u32 %s31, 1
        %s424 = scalar_lea.sflag [#allocation6], %s423
        %s425 = sand.u32 %s65, 1
        %s426 = smul.addr %s425, 32
        %s427 = scalar_lea.vmem [#allocation5], %s426
        %p428 = pneg %p78
        %p429 = pneg %p75
        %p430 = pneg %p99
        %p431 = pneg %p96
        %p432 = pneg %p120
        %p433 = pneg %p117
        %p434 = pneg %p141
        %p435 = pneg %p138
        %p436 = pneg %p162
        %p437 = pneg %p159
        %p438 = pneg %p183
        %p439 = pneg %p180
        %p440 = pneg %p204
        %p441 = pneg %p201
        %p442 = pneg %p225
        %p443 = pneg %p222
        %p444 = pneg %p251
        %p445 = pneg %p248
        %s446 = sand.u32 %s238, 1
        %s447 = scalar_lea.sflag [#allocation4], %s446
        %s448 = sand.u32 %s238, 1
        %s449 = smul.addr %s448, 128
        %s450 = scalar_lea.vmem [#allocation13], %s449
        %s451 = smul.u32 8, %s31
        %s452 = smul.u32 8, %s31
        %s453 = smul.u32 8, %s31
        %v455 = vld [vmem:[%s386] sm:$0xff]
        %v456 = vld [vmem:[%s386 + $0x8] sm:$0xff]
        %v457 = vld [vmem:[%s386 + $0x10] sm:$0xff]
        %v458 = vld [vmem:[%s386 + $0x18] sm:$0xff]
        %v459 = vld [vmem:[%s386 + $0x20] sm:$0xff]
        %v460 = vld [vmem:[%s386 + $0x28] sm:$0xff]
        %v461 = vld [vmem:[%s386 + $0x30] sm:$0xff]
        %v462 = vld [vmem:[%s386 + $0x38] sm:$0xff]
        %v463 = vld [vmem:[%s386 + $0x40] sm:$0xff]
        %v464 = vld [vmem:[%s386 + $0x48] sm:$0xff]
        %v465 = vld [vmem:[%s386 + $0x50] sm:$0xff]
        %v466 = vld [vmem:[%s386 + $0x58] sm:$0xff]
        %v467 = vld [vmem:[%s386 + $0x60] sm:$0xff]
        %v468 = vld [vmem:[%s386 + $0x68] sm:$0xff]
        %v469 = vld [vmem:[%s386 + $0x70] sm:$0xff]
        %v470 = vld [vmem:[%s386 + $0x78] sm:$0xff]
        %v471 = vld [vmem:[%s395] sm:$0x3]
        %v472 = vld [vmem:[%s395 + $0x2] sm:$0x3]
        %v473 = vld [vmem:[%s395 + $0x4] sm:$0x3]
        %v474 = vld [vmem:[%s395 + $0x6] sm:$0x3]
        %v475 = vld [vmem:[%s395 + $0x8] sm:$0x3]
        %v476 = vld [vmem:[%s395 + $0xa] sm:$0x3]
        %v477 = vld [vmem:[%s395 + $0xc] sm:$0x3]
        %v478 = vld [vmem:[%s395 + $0xe] sm:$0x3]
        %v479 = vld [vmem:[%s395 + $0x10] sm:$0x3]
        %v480 = vld [vmem:[%s395 + $0x12] sm:$0x3]
        %v481 = vld [vmem:[%s395 + $0x14] sm:$0x3]
        %v482 = vld [vmem:[%s395 + $0x16] sm:$0x3]
        %v483 = vld [vmem:[%s395 + $0x18] sm:$0x3]
        %v484 = vld [vmem:[%s395 + $0x1a] sm:$0x3]
        %v485 = vld [vmem:[%s395 + $0x1c] sm:$0x3]
        %v486 = vld [vmem:[%s395 + $0x1e] sm:$0x3]
        %v487 = vunpack.c.0.s8 %v471
        %v488 = vunpack.c.0.s8 %v472
        %v489 = vunpack.c.0.s8 %v473
        %v490 = vunpack.c.0.s8 %v474
        %v491 = vunpack.c.0.s8 %v475
        %v492 = vunpack.c.0.s8 %v476
        %v493 = vunpack.c.0.s8 %v477
        %v494 = vunpack.c.0.s8 %v478
        %v495 = vunpack.c.0.s8 %v479
        %v496 = vunpack.c.0.s8 %v480
        %v497 = vunpack.c.0.s8 %v481
        %v498 = vunpack.c.0.s8 %v482
        %v499 = vunpack.c.0.s8 %v483
        %v500 = vunpack.c.0.s8 %v484
        %v501 = vunpack.c.0.s8 %v485
        %v502 = vunpack.c.0.s8 %v486
        %v503 = vcvt.s32.f32 %v487
        %v504 = vcvt.s32.f32 %v488
        %v505 = vcvt.s32.f32 %v489
        %v506 = vcvt.s32.f32 %v490
        %v507 = vcvt.s32.f32 %v491
        %v508 = vcvt.s32.f32 %v492
        %v509 = vcvt.s32.f32 %v493
        %v510 = vcvt.s32.f32 %v494
        %v511 = vcvt.s32.f32 %v495
        %v512 = vcvt.s32.f32 %v496
        %v513 = vcvt.s32.f32 %v497
        %v514 = vcvt.s32.f32 %v498
        %v515 = vcvt.s32.f32 %v499
        %v516 = vcvt.s32.f32 %v500
        %v517 = vcvt.s32.f32 %v501
        %v518 = vcvt.s32.f32 %v502
        %v519 = vmul.f32 %v503, -1e+09
        %v520 = vmul.f32 %v504, -1e+09
        %v521 = vmul.f32 %v505, -1e+09
        %v522 = vmul.f32 %v506, -1e+09
        %v523 = vmul.f32 %v507, -1e+09
        %v524 = vmul.f32 %v508, -1e+09
        %v525 = vmul.f32 %v509, -1e+09
        %v526 = vmul.f32 %v510, -1e+09
        %v527 = vmul.f32 %v511, -1e+09
        %v528 = vmul.f32 %v512, -1e+09
        %v529 = vmul.f32 %v513, -1e+09
        %v530 = vmul.f32 %v514, -1e+09
        %v531 = vmul.f32 %v515, -1e+09
        %v532 = vmul.f32 %v516, -1e+09
        %v533 = vmul.f32 %v517, -1e+09
        %v534 = vmul.f32 %v518, -1e+09
        %v535 = vpack.c.bf16 %v456, %v455
        %v536 = vpack.c.bf16 %v458, %v457
        %v537 = vpack.c.bf16 %v460, %v459
        %v538 = vpack.c.bf16 %v462, %v461
        %v539 = vpack.c.bf16 %v464, %v463
        %v540 = vpack.c.bf16 %v466, %v465
        %v541 = vpack.c.bf16 %v468, %v467
        %v542 = vpack.c.bf16 %v470, %v469
        %v543 = vld [vmem:[#allocation7] sm:$0xff]
        %v544 = vld [vmem:[#allocation7 + $0x8] sm:$0xf]
        %v545 = vld [vmem:[#allocation7 + $0xc] sm:$0xff]
        %v546 = vld [vmem:[#allocation7 + $0x14] sm:$0xf]
        %v547 = vld [vmem:[#allocation7 + $0x18] sm:$0xff]
        %v548 = vld [vmem:[#allocation7 + $0x20] sm:$0xf]
        %v549 = vld [vmem:[#allocation7 + $0x24] sm:$0xff]
        %v550 = vld [vmem:[#allocation7 + $0x2c] sm:$0xf]
        %v551 = vld [vmem:[#allocation7 + $0x30] sm:$0xff]
        %v552 = vld [vmem:[#allocation7 + $0x38] sm:$0xf]
        %v553 = vld [vmem:[#allocation7 + $0x3c] sm:$0xff]
        %v554 = vld [vmem:[#allocation7 + $0x44] sm:$0xf]
        %v555 = vld [vmem:[#allocation7 + $0x48] sm:$0xff]
        %v556 = vld [vmem:[#allocation7 + $0x50] sm:$0xf]
        %v557 = vld [vmem:[#allocation7 + $0x54] sm:$0xff]
        %v558 = vld [vmem:[#allocation7 + $0x5c] sm:$0xf]
        %v559 = vld [vmem:[#allocation7 + $0x60] sm:$0xff]
        %v560 = vld [vmem:[#allocation7 + $0x68] sm:$0xf]
        %v561 = vld [vmem:[#allocation7 + $0x6c] sm:$0xff]
        %v562 = vld [vmem:[#allocation7 + $0x74] sm:$0xf]
        %v563 = vld [vmem:[#allocation7 + $0x78] sm:$0xff]
        %v564 = vld [vmem:[#allocation7 + $0x80] sm:$0xf]
        %v565 = vld [vmem:[#allocation7 + $0x84] sm:$0xff]
        %v566 = vld [vmem:[#allocation7 + $0x8c] sm:$0xf]
        %v567 = vld [vmem:[#allocation7 + $0x90] sm:$0xff]
        %v568 = vld [vmem:[#allocation7 + $0x98] sm:$0xf]
        %v569 = vld [vmem:[#allocation7 + $0x9c] sm:$0xff]
        %v570 = vld [vmem:[#allocation7 + $0xa4] sm:$0xf]
        %v571 = vld [vmem:[#allocation7 + $0xa8] sm:$0xff]
        %v572 = vld [vmem:[#allocation7 + $0xb0] sm:$0xf]
        %v573 = vld [vmem:[#allocation7 + $0xb4] sm:$0xff]
        %v574 = vld [vmem:[#allocation7 + $0xbc] sm:$0xf]
        %v575 = vld [vmem:[%s3] sm:$0x7]
        %v577 = vlaneseq
        %v578 = vshrl.u32 %v577, 7
        %v579 = vsub.s32 0, %v578
        %v580 = vrot.slane %v575, %v579
        %v581 = vlaneseq
        %v582 = vshrl.u32 %v581, 7
        %v583 = vsub.s32 1, %v582
        %v584 = vrot.slane %v575, %v583
        %v585 = vlaneseq
        %v586 = vshrl.u32 %v585, 7
        %v587 = vsub.s32 2, %v586
        %v588 = vrot.slane %v575, %v587
        %v624 = vunpack.c.l.b16 %v543
        %v625 = vunpack.c.h.b16 %v543
        %v626 = vunpack.c.l.b16 %v544
        %v627 = vunpack.c.l.b16 %v545
        %v628 = vunpack.c.h.b16 %v545
        %v629 = vunpack.c.l.b16 %v546
        %v630 = vunpack.c.l.b16 %v547
        %v631 = vunpack.c.h.b16 %v547
        %v632 = vunpack.c.l.b16 %v548
        %v633 = vunpack.c.l.b16 %v549
        %v634 = vunpack.c.h.b16 %v549
        %v635 = vunpack.c.l.b16 %v550
        %v636 = vunpack.c.l.b16 %v551
        %v637 = vunpack.c.h.b16 %v551
        %v638 = vunpack.c.l.b16 %v552
        %v639 = vunpack.c.l.b16 %v553
        %v640 = vunpack.c.h.b16 %v553
        %v641 = vunpack.c.l.b16 %v554
        %v642 = vunpack.c.l.b16 %v555
        %v643 = vunpack.c.h.b16 %v555
        %v644 = vunpack.c.l.b16 %v556
        %v645 = vunpack.c.l.b16 %v557
        %v646 = vunpack.c.h.b16 %v557
        %v647 = vunpack.c.l.b16 %v558
        %v648 = vunpack.c.l.b16 %v559
        %v649 = vunpack.c.h.b16 %v559
        %v650 = vunpack.c.l.b16 %v560
        %v651 = vunpack.c.l.b16 %v561
        %v652 = vunpack.c.h.b16 %v561
        %v653 = vunpack.c.l.b16 %v562
        %v654 = vunpack.c.l.b16 %v563
        %v655 = vunpack.c.h.b16 %v563
        %v656 = vunpack.c.l.b16 %v564
        %v657 = vunpack.c.l.b16 %v565
        %v658 = vunpack.c.h.b16 %v565
        %v659 = vunpack.c.l.b16 %v566
        %v660 = vunpack.c.l.b16 %v567
        %v661 = vunpack.c.h.b16 %v567
        %v662 = vunpack.c.l.b16 %v568
        %v663 = vunpack.c.l.b16 %v569
        %v664 = vunpack.c.h.b16 %v569
        %v665 = vunpack.c.l.b16 %v570
        %v666 = vunpack.c.l.b16 %v571
        %v667 = vunpack.c.h.b16 %v571
        %v668 = vunpack.c.l.b16 %v572
        %v669 = vunpack.c.l.b16 %v573
        %v670 = vunpack.c.h.b16 %v573
        %v671 = vunpack.c.l.b16 %v574
        %v672 = vpack.c.b16 %v627, %v624
        %v673 = vpack.c.b16 %v628, %v625
        %v674 = vpack.c.b16 %v629, %v626
        %v675 = vpack.c.b16 %v633, %v630
        %v676 = vpack.c.b16 %v634, %v631
        %v677 = vpack.c.b16 %v635, %v632
        %v678 = vpack.c.b16 %v639, %v636
        %v679 = vpack.c.b16 %v640, %v637
        %v680 = vpack.c.b16 %v641, %v638
        %v681 = vpack.c.b16 %v645, %v642
        %v682 = vpack.c.b16 %v646, %v643
        %v683 = vpack.c.b16 %v647, %v644
        %v684 = vpack.c.b16 %v651, %v648
        %v685 = vpack.c.b16 %v652, %v649
        %v686 = vpack.c.b16 %v653, %v650
        %v687 = vpack.c.b16 %v657, %v654
        %v688 = vpack.c.b16 %v658, %v655
        %v689 = vpack.c.b16 %v659, %v656
        %v690 = vpack.c.b16 %v663, %v660
        %v691 = vpack.c.b16 %v664, %v661
        %v692 = vpack.c.b16 %v665, %v662
        %v693 = vpack.c.b16 %v669, %v666
        %v694 = vpack.c.b16 %v670, %v667
        %v695 = vpack.c.b16 %v671, %v668
        %720 = vmatprep.subr.bf16.mxu0 %v694
        %721 = vmatpush1.bf16.msra.mxu0 %v693
        %722 = vmatprep.subr.bf16.mxu0 %v691
        %723 = vmatpush1.bf16.msra.mxu0 %v690
        %724 = vmatprep.subr.bf16.mxu0 %v688
        %725 = vmatpush1.bf16.msra.mxu0 %v687
        %726 = vmatprep.subr.bf16.mxu0 %v685
        %727 = vmatpush1.bf16.msra.mxu0 %v684
        %728 = vmatprep.subr.bf16.mxu0 %v682
        %729 = vmatpush1.bf16.msra.mxu0 %v681
        %730 = vmatprep.subr.bf16.mxu0 %v679
        %731 = vmatpush1.bf16.msra.mxu0 %v678
        %732 = vmatprep.subr.bf16.mxu0 %v676
        %733 = vmatpush1.bf16.msra.mxu0 %v675
        %734 = vmatprep.subr.bf16.mxu0 %v673
        %735 = vmatpush1.bf16.msra.mxu0 %v672
        %736 = vmatprep.subr.bf16.mxu0 0
        %737 = vmatpush2.bf16.msra.mxu0 0
        %738 = vmatprep.subr.bf16.mxu0 0
        %739 = vmatpush2.bf16.msra.mxu0 0
        %740 = vmatprep.subr.bf16.mxu0 0
        %741 = vmatpush2.bf16.msra.mxu0 0
        %742 = vmatprep.subr.bf16.mxu0 0
        %743 = vmatpush2.bf16.msra.mxu0 0
        %744 = vmatprep.subr.bf16.mxu0 0
        %745 = vmatpush2.bf16.msra.mxu0 0
        %746 = vmatprep.subr.bf16.mxu0 0
        %747 = vmatpush2.bf16.msra.mxu0 0
        %748 = vmatprep.subr.bf16.mxu0 0
        %749 = vmatpush2.bf16.msra.mxu0 0
        %750 = vmatprep.subr.bf16.mxu0 0
        %751 = vmatpush2.bf16.msra.mxu0 0
        %752 = vmatprep.mubr.bf16.mxu0 0
        %753 = vmatmul.mubr.bf16.gmra.mxu0 %v535
        %v754 = vpop.f32.mrf.mxu0
        %v755 = vadd.f32 %v580, %v754
        %v756 = vpop.f32.mrf.mxu0
        %v757 = vadd.f32 %v584, %v756
        %v758 = vpop.f32.mrf.mxu0
        %v759 = vadd.f32 %v580, %v758
        %v760 = vpop.f32.mrf.mxu0
        %v761 = vadd.f32 %v584, %v760
        %762 = vmatprep.mubr.bf16.mxu0 0
        %763 = vmatmul.mubr.bf16.gmra.mxu0 %v536
        %v764 = vpop.f32.mrf.mxu0
        %v765 = vadd.f32 %v580, %v764
        %v766 = vpop.f32.mrf.mxu0
        %v767 = vadd.f32 %v584, %v766
        %v768 = vpop.f32.mrf.mxu0
        %v769 = vadd.f32 %v580, %v768
        %v770 = vpop.f32.mrf.mxu0
        %v771 = vadd.f32 %v584, %v770
        %772 = vmatprep.mubr.bf16.mxu0 0
        %773 = vmatmul.mubr.bf16.gmra.mxu0 %v537
        %v774 = vpop.f32.mrf.mxu0
        %v775 = vadd.f32 %v580, %v774
        %v776 = vpop.f32.mrf.mxu0
        %v777 = vadd.f32 %v584, %v776
        %v778 = vpop.f32.mrf.mxu0
        %v779 = vadd.f32 %v580, %v778
        %v780 = vpop.f32.mrf.mxu0
        %v781 = vadd.f32 %v584, %v780
        %782 = vmatprep.mubr.bf16.mxu0 0
        %783 = vmatmul.mubr.bf16.gmra.mxu0 %v538
        %v784 = vpop.f32.mrf.mxu0
        %v785 = vadd.f32 %v580, %v784
        %v786 = vpop.f32.mrf.mxu0
        %v787 = vadd.f32 %v584, %v786
        %v788 = vpop.f32.mrf.mxu0
        %v789 = vadd.f32 %v580, %v788
        %v790 = vpop.f32.mrf.mxu0
        %v791 = vadd.f32 %v584, %v790
        %792 = vmatprep.mubr.bf16.mxu0 0
        %793 = vmatmul.mubr.bf16.gmra.mxu0 %v539
        %v794 = vpop.f32.mrf.mxu0
        %v795 = vadd.f32 %v580, %v794
        %v796 = vpop.f32.mrf.mxu0
        %v797 = vadd.f32 %v584, %v796
        %v798 = vpop.f32.mrf.mxu0
        %v799 = vadd.f32 %v580, %v798
        %v800 = vpop.f32.mrf.mxu0
        %v801 = vadd.f32 %v584, %v800
        %802 = vmatprep.mubr.bf16.mxu0 0
        %803 = vmatmul.mubr.bf16.gmra.mxu0 %v540
        %v804 = vpop.f32.mrf.mxu0
        %v805 = vadd.f32 %v580, %v804
        %v806 = vpop.f32.mrf.mxu0
        %v807 = vadd.f32 %v584, %v806
        %v808 = vpop.f32.mrf.mxu0
        %v809 = vadd.f32 %v580, %v808
        %v810 = vpop.f32.mrf.mxu0
        %v811 = vadd.f32 %v584, %v810
        %812 = vmatprep.mubr.bf16.mxu0 0
        %813 = vmatmul.mubr.bf16.gmra.mxu0 %v541
        %v814 = vpop.f32.mrf.mxu0
        %v815 = vadd.f32 %v580, %v814
        %v816 = vpop.f32.mrf.mxu0
        %v817 = vadd.f32 %v584, %v816
        %v818 = vpop.f32.mrf.mxu0
        %v819 = vadd.f32 %v580, %v818
        %v820 = vpop.f32.mrf.mxu0
        %v821 = vadd.f32 %v584, %v820
        %822 = vmatprep.mubr.bf16.mxu0 0
        %823 = vmatmul.mubr.bf16.gmra.mxu0 %v542
        %v824 = vpop.f32.mrf.mxu0
        %v825 = vadd.f32 %v580, %v824
        %v826 = vpop.f32.mrf.mxu0
        %v827 = vadd.f32 %v584, %v826
        %v828 = vpop.f32.mrf.mxu0
        %v829 = vadd.f32 %v580, %v828
        %v830 = vpop.f32.mrf.mxu0
        %v831 = vadd.f32 %v584, %v830
        %832 = vdwg.mxu0
        %833 = vmatprep.subr.bf16.mxu0 0
        %834 = vmatpush1.bf16.msra.mxu0 %v695
        %835 = vmatprep.subr.bf16.mxu0 0
        %836 = vmatpush1.bf16.msra.mxu0 %v692
        %837 = vmatprep.subr.bf16.mxu0 0
        %838 = vmatpush1.bf16.msra.mxu0 %v689
        %839 = vmatprep.subr.bf16.mxu0 0
        %840 = vmatpush1.bf16.msra.mxu0 %v686
        %841 = vmatprep.subr.bf16.mxu0 0
        %842 = vmatpush1.bf16.msra.mxu0 %v683
        %843 = vmatprep.subr.bf16.mxu0 0
        %844 = vmatpush1.bf16.msra.mxu0 %v680
        %845 = vmatprep.subr.bf16.mxu0 0
        %846 = vmatpush1.bf16.msra.mxu0 %v677
        %847 = vmatprep.subr.bf16.mxu0 0
        %848 = vmatpush1.bf16.msra.mxu0 %v674
        %849 = vmatprep.subr.bf16.mxu0 0
        %850 = vmatpush2.bf16.msra.mxu0 0
        %851 = vmatprep.subr.bf16.mxu0 0
        %852 = vmatpush2.bf16.msra.mxu0 0
        %853 = vmatprep.subr.bf16.mxu0 0
        %854 = vmatpush2.bf16.msra.mxu0 0
        %855 = vmatprep.subr.bf16.mxu0 0
        %856 = vmatpush2.bf16.msra.mxu0 0
        %857 = vmatprep.subr.bf16.mxu0 0
        %858 = vmatpush2.bf16.msra.mxu0 0
        %859 = vmatprep.subr.bf16.mxu0 0
        %860 = vmatpush2.bf16.msra.mxu0 0
        %861 = vmatprep.subr.bf16.mxu0 0
        %862 = vmatpush2.bf16.msra.mxu0 0
        %863 = vmatprep.subr.bf16.mxu0 0
        %864 = vmatpush2.bf16.msra.mxu0 0
        %865 = vmatprep.mubr.bf16.mxu0 0
        %866 = vmatmul.mubr.bf16.gmra.mxu0 %v535
        %v867 = vpop.f32.mrf.mxu0
        %v868 = vadd.f32 %v588, %v867
        %v869 = vpop.f32.mrf.mxu0
        %v870 = vpop.f32.mrf.mxu0
        %v871 = vadd.f32 %v588, %v870
        %v872 = vpop.f32.mrf.mxu0
        %873 = vmatprep.mubr.bf16.mxu0 0
        %874 = vmatmul.mubr.bf16.gmra.mxu0 %v536
        %v875 = vpop.f32.mrf.mxu0
        %v876 = vadd.f32 %v588, %v875
        %v877 = vpop.f32.mrf.mxu0
        %v878 = vpop.f32.mrf.mxu0
        %v879 = vadd.f32 %v588, %v878
        %v880 = vpop.f32.mrf.mxu0
        %881 = vmatprep.mubr.bf16.mxu0 0
        %882 = vmatmul.mubr.bf16.gmra.mxu0 %v537
        %v883 = vpop.f32.mrf.mxu0
        %v884 = vadd.f32 %v588, %v883
        %v885 = vpop.f32.mrf.mxu0
        %v886 = vpop.f32.mrf.mxu0
        %v887 = vadd.f32 %v588, %v886
        %v888 = vpop.f32.mrf.mxu0
        %889 = vmatprep.mubr.bf16.mxu0 0
        %890 = vmatmul.mubr.bf16.gmra.mxu0 %v538
        %v891 = vpop.f32.mrf.mxu0
        %v892 = vadd.f32 %v588, %v891
        %v893 = vpop.f32.mrf.mxu0
        %v894 = vpop.f32.mrf.mxu0
        %v895 = vadd.f32 %v588, %v894
        %v896 = vpop.f32.mrf.mxu0
        %897 = vmatprep.mubr.bf16.mxu0 0
        %898 = vmatmul.mubr.bf16.gmra.mxu0 %v539
        %v899 = vpop.f32.mrf.mxu0
        %v900 = vadd.f32 %v588, %v899
        %v901 = vpop.f32.mrf.mxu0
        %v902 = vpop.f32.mrf.mxu0
        %v903 = vadd.f32 %v588, %v902
        %v904 = vpop.f32.mrf.mxu0
        %905 = vmatprep.mubr.bf16.mxu0 0
        %906 = vmatmul.mubr.bf16.gmra.mxu0 %v540
        %v907 = vpop.f32.mrf.mxu0
        %v908 = vadd.f32 %v588, %v907
        %v909 = vpop.f32.mrf.mxu0
        %v910 = vpop.f32.mrf.mxu0
        %v911 = vadd.f32 %v588, %v910
        %v912 = vpop.f32.mrf.mxu0
        %913 = vmatprep.mubr.bf16.mxu0 0
        %914 = vmatmul.mubr.bf16.gmra.mxu0 %v541
        %v915 = vpop.f32.mrf.mxu0
        %v916 = vadd.f32 %v588, %v915
        %v917 = vpop.f32.mrf.mxu0
        %v918 = vpop.f32.mrf.mxu0
        %v919 = vadd.f32 %v588, %v918
        %v920 = vpop.f32.mrf.mxu0
        %921 = vmatprep.mubr.bf16.mxu0 0
        %922 = vmatmul.mubr.bf16.gmra.mxu0 %v542
        %v923 = vpop.f32.mrf.mxu0
        %v924 = vadd.f32 %v588, %v923
        %v925 = vpop.f32.mrf.mxu0
        %v926 = vpop.f32.mrf.mxu0
        %v927 = vadd.f32 %v588, %v926
        %v928 = vpop.f32.mrf.mxu0
        %929 = vdwg.mxu0
        %v930 = vpack.c.bf16 %v759, %v755
        %v931 = vpack.c.bf16 %v769, %v765
        %v932 = vpack.c.bf16 %v779, %v775
        %v933 = vpack.c.bf16 %v789, %v785
        %v934 = vpack.c.bf16 %v799, %v795
        %v935 = vpack.c.bf16 %v809, %v805
        %v936 = vpack.c.bf16 %v819, %v815
        %v937 = vpack.c.bf16 %v829, %v825
        %v938 = vpack.c.bf16 %v761, %v757
        %v939 = vpack.c.bf16 %v771, %v767
        %v940 = vpack.c.bf16 %v781, %v777
        %v941 = vpack.c.bf16 %v791, %v787
        %v942 = vpack.c.bf16 %v801, %v797
        %v943 = vpack.c.bf16 %v811, %v807
        %v944 = vpack.c.bf16 %v821, %v817
        %v945 = vpack.c.bf16 %v831, %v827
        %v946 = vpack.c.bf16 %v871, %v868
        %v947 = vpack.c.bf16 %v879, %v876
        %v948 = vpack.c.bf16 %v887, %v884
        %v949 = vpack.c.bf16 %v895, %v892
        %v950 = vpack.c.bf16 %v903, %v900
        %v951 = vpack.c.bf16 %v911, %v908
        %v952 = vpack.c.bf16 %v919, %v916
        %v953 = vpack.c.bf16 %v927, %v924
        %vm954 = vcmask 261120
        %v956 = vsel %vm954, %v930, 0
        %v959 = vsel %vm954, %v938, 0
        %961 = vmatprep.subr.bf16.mxu0 0
        %962 = vmatpush1.bf16.xpose.msra.mxu0 0
        %963 = vmatprep.subr.bf16.mxu0 0
        %964 = vmatpush1.bf16.xpose.msra.mxu0 0
        %965 = vmatprep.subr.bf16.mxu0 0
        %966 = vmatpush1.bf16.xpose.msra.mxu0 0
        %967 = vmatprep.subr.bf16.mxu0 0
        %968 = vmatpush1.bf16.xpose.msra.mxu0 0
        %969 = vmatprep.subr.bf16.mxu0 0
        %970 = vmatpush1.bf16.xpose.msra.mxu0 0
        %971 = vmatprep.subr.bf16.mxu0 0
        %972 = vmatpush1.bf16.xpose.msra.mxu0 0
        %973 = vmatprep.subr.bf16.mxu0 0
        %974 = vmatpush1.bf16.xpose.msra.mxu0 0
        %975 = vmatprep.subr.bf16.mxu0 0
        %976 = vmatpush1.bf16.xpose.msra.mxu0 %v959
        %977 = vmatprep.subr.bf16.mxu0 0
        %978 = vmatpush2.bf16.xpose.msra.mxu0 0
        %979 = vmatprep.subr.bf16.mxu0 0
        %980 = vmatpush2.bf16.xpose.msra.mxu0 0
        %981 = vmatprep.subr.bf16.mxu0 0
        %982 = vmatpush2.bf16.xpose.msra.mxu0 0
        %983 = vmatprep.subr.bf16.mxu0 0
        %984 = vmatpush2.bf16.xpose.msra.mxu0 0
        %985 = vmatprep.subr.bf16.mxu0 0
        %986 = vmatpush2.bf16.xpose.msra.mxu0 0
        %987 = vmatprep.subr.bf16.mxu0 0
        %988 = vmatpush2.bf16.xpose.msra.mxu0 0
        %989 = vmatprep.subr.bf16.mxu0 0
        %990 = vmatpush2.bf16.xpose.msra.mxu0 0
        %991 = vmatprep.subr.bf16.mxu0 0
        %992 = vmatpush2.bf16.xpose.msra.mxu0 0
        %993 = vmatprep.mubr.bf16.mxu0 0
        %994 = vmatmul.mubr.bf16.gmra.mxu0 %v956
        %v995 = vpop.f32.mrf.mxu0
        %v996 = vadd.f32 0.0, %v995
        %v997 = vpop.f32.mrf.mxu0
        %v998 = vpop.f32.mrf.mxu0
        %v999 = vadd.f32 0.0, %v998
        %v1000 = vpop.f32.mrf.mxu0
        %1001 = vdwg.mxu0
        %v1003 = vsel %vm954, %v931, 0
        %v1006 = vsel %vm954, %v939, 0
        %1008 = vmatprep.subr.bf16.mxu0 0
        %1009 = vmatpush1.bf16.xpose.msra.mxu0 0
        %1010 = vmatprep.subr.bf16.mxu0 0
        %1011 = vmatpush1.bf16.xpose.msra.mxu0 0
        %1012 = vmatprep.subr.bf16.mxu0 0
        %1013 = vmatpush1.bf16.xpose.msra.mxu0 0
        %1014 = vmatprep.subr.bf16.mxu0 0
        %1015 = vmatpush1.bf16.xpose.msra.mxu0 0
        %1016 = vmatprep.subr.bf16.mxu0 0
        %1017 = vmatpush1.bf16.xpose.msra.mxu0 0
        %1018 = vmatprep.subr.bf16.mxu0 0
        %1019 = vmatpush1.bf16.xpose.msra.mxu0 0
        %1020 = vmatprep.subr.bf16.mxu0 0
        %1021 = vmatpush1.bf16.xpose.msra.mxu0 0
        %1022 = vmatprep.subr.bf16.mxu0 0
        %1023 = vmatpush1.bf16.xpose.msra.mxu0 %v1006
        %1024 = vmatprep.subr.bf16.mxu0 0
        %1025 = vmatpush2.bf16.xpose.msra.mxu0 0
        %1026 = vmatprep.subr.bf16.mxu0 0
        %1027 = vmatpush2.bf16.xpose.msra.mxu0 0
        %1028 = vmatprep.subr.bf16.mxu0 0
        %1029 = vmatpush2.bf16.xpose.msra.mxu0 0
        %1030 = vmatprep.subr.bf16.mxu0 0
        %1031 = vmatpush2.bf16.xpose.msra.mxu0 0
        %1032 = vmatprep.subr.bf16.mxu0 0
        %1033 = vmatpush2.bf16.xpose.msra.mxu0 0
        %1034 = vmatprep.subr.bf16.mxu0 0
        %1035 = vmatpush2.bf16.xpose.msra.mxu0 0
        %1036 = vmatprep.subr.bf16.mxu0 0
        %1037 = vmatpush2.bf16.xpose.msra.mxu0 0
        %1038 = vmatprep.subr.bf16.mxu0 0
        %1039 = vmatpush2.bf16.xpose.msra.mxu0 0
        %1040 = vmatprep.mubr.bf16.mxu0 0
        %1041 = vmatmul.mubr.bf16.gmra.mxu0 %v1003
        %v1042 = vpop.f32.mrf.mxu0
        %v1043 = vadd.f32 0.0, %v1042
        %v1044 = vpop.f32.mrf.mxu0
        %v1045 = vpop.f32.mrf.mxu0
        %v1046 = vadd.f32 0.0, %v1045
        %v1047 = vpop.f32.mrf.mxu0
        %1048 = vdwg.mxu0
        %v1050 = vsel %vm954, %v932, 0
        %v1053 = vsel %vm954, %v940, 0
        %1055 = vmatprep.subr.bf16.mxu0 0
        %1056 = vmatpush1.bf16.xpose.msra.mxu0 0
        %1057 = vmatprep.subr.bf16.mxu0 0
        %1058 = vmatpush1.bf16.xpose.msra.mxu0 0
        %1059 = vmatprep.subr.bf16.mxu0 0
        %1060 = vmatpush1.bf16.xpose.msra.mxu0 0
        %1061 = vmatprep.subr.bf16.mxu0 0
        %1062 = vmatpush1.bf16.xpose.msra.mxu0 0
        %1063 = vmatprep.subr.bf16.mxu0 0
        %1064 = vmatpush1.bf16.xpose.msra.mxu0 0
        %1065 = vmatprep.subr.bf16.mxu0 0
        %1066 = vmatpush1.bf16.xpose.msra.mxu0 0
        %1067 = vmatprep.subr.bf16.mxu0 0
        %1068 = vmatpush1.bf16.xpose.msra.mxu0 0
        %1069 = vmatprep.subr.bf16.mxu0 0
        %1070 = vmatpush1.bf16.xpose.msra.mxu0 %v1053
        %1071 = vmatprep.subr.bf16.mxu0 0
        %1072 = vmatpush2.bf16.xpose.msra.mxu0 0
        %1073 = vmatprep.subr.bf16.mxu0 0
        %1074 = vmatpush2.bf16.xpose.msra.mxu0 0
        %1075 = vmatprep.subr.bf16.mxu0 0
        %1076 = vmatpush2.bf16.xpose.msra.mxu0 0
        %1077 = vmatprep.subr.bf16.mxu0 0
        %1078 = vmatpush2.bf16.xpose.msra.mxu0 0
        %1079 = vmatprep.subr.bf16.mxu0 0
        %1080 = vmatpush2.bf16.xpose.msra.mxu0 0
        %1081 = vmatprep.subr.bf16.mxu0 0
        %1082 = vmatpush2.bf16.xpose.msra.mxu0 0
        %1083 = vmatprep.subr.bf16.mxu0 0
        %1084 = vmatpush2.bf16.xpose.msra.mxu0 0
        %1085 = vmatprep.subr.bf16.mxu0 0
        %1086 = vmatpush2.bf16.xpose.msra.mxu0 0
        %1087 = vmatprep.mubr.bf16.mxu0 0
        %1088 = vmatmul.mubr.bf16.gmra.mxu0 %v1050
        %v1089 = vpop.f32.mrf.mxu0
        %v1090 = vadd.f32 0.0, %v1089
        %v1091 = vpop.f32.mrf.mxu0
        %v1092 = vpop.f32.mrf.mxu0
        %v1093 = vadd.f32 0.0, %v1092
        %v1094 = vpop.f32.mrf.mxu0
        %1095 = vdwg.mxu0
        %v1097 = vsel %vm954, %v933, 0
        %v1100 = vsel %vm954, %v941, 0
        %1102 = vmatprep.subr.bf16.mxu0 0
        %1103 = vmatpush1.bf16.xpose.msra.mxu0 0
        %1104 = vmatprep.subr.bf16.mxu0 0
        %1105 = vmatpush1.bf16.xpose.msra.mxu0 0
        %1106 = vmatprep.subr.bf16.mxu0 0
        %1107 = vmatpush1.bf16.xpose.msra.mxu0 0
        %1108 = vmatprep.subr.bf16.mxu0 0
        %1109 = vmatpush1.bf16.xpose.msra.mxu0 0
        %1110 = vmatprep.subr.bf16.mxu0 0
        %1111 = vmatpush1.bf16.xpose.msra.mxu0 0
        %1112 = vmatprep.subr.bf16.mxu0 0
        %1113 = vmatpush1.bf16.xpose.msra.mxu0 0
        %1114 = vmatprep.subr.bf16.mxu0 0
        %1115 = vmatpush1.bf16.xpose.msra.mxu0 0
        %1116 = vmatprep.subr.bf16.mxu0 0
        %1117 = vmatpush1.bf16.xpose.msra.mxu0 %v1100
        %1118 = vmatprep.subr.bf16.mxu0 0
        %1119 = vmatpush2.bf16.xpose.msra.mxu0 0
        %1120 = vmatprep.subr.bf16.mxu0 0
        %1121 = vmatpush2.bf16.xpose.msra.mxu0 0
        %1122 = vmatprep.subr.bf16.mxu0 0
        %1123 = vmatpush2.bf16.xpose.msra.mxu0 0
        %1124 = vmatprep.subr.bf16.mxu0 0
        %1125 = vmatpush2.bf16.xpose.msra.mxu0 0
        %1126 = vmatprep.subr.bf16.mxu0 0
        %1127 = vmatpush2.bf16.xpose.msra.mxu0 0
        %1128 = vmatprep.subr.bf16.mxu0 0
        %1129 = vmatpush2.bf16.xpose.msra.mxu0 0
        %1130 = vmatprep.subr.bf16.mxu0 0
        %1131 = vmatpush2.bf16.xpose.msra.mxu0 0
        %1132 = vmatprep.subr.bf16.mxu0 0
        %1133 = vmatpush2.bf16.xpose.msra.mxu0 0
        %1134 = vmatprep.mubr.bf16.mxu0 0
        %1135 = vmatmul.mubr.bf16.gmra.mxu0 %v1097
        %v1136 = vpop.f32.mrf.mxu0
        %v1137 = vadd.f32 0.0, %v1136
        %v1138 = vpop.f32.mrf.mxu0
        %v1139 = vpop.f32.mrf.mxu0
        %v1140 = vadd.f32 0.0, %v1139
        %v1141 = vpop.f32.mrf.mxu0
        %1142 = vdwg.mxu0
        %v1144 = vsel %vm954, %v934, 0
        %v1147 = vsel %vm954, %v942, 0
        %1149 = vmatprep.subr.bf16.mxu0 0
        %1150 = vmatpush1.bf16.xpose.msra.mxu0 0
        %1151 = vmatprep.subr.bf16.mxu0 0
        %1152 = vmatpush1.bf16.xpose.msra.mxu0 0
        %1153 = vmatprep.subr.bf16.mxu0 0
        %1154 = vmatpush1.bf16.xpose.msra.mxu0 0
        %1155 = vmatprep.subr.bf16.mxu0 0
        %1156 = vmatpush1.bf16.xpose.msra.mxu0 0
        %1157 = vmatprep.subr.bf16.mxu0 0
        %1158 = vmatpush1.bf16.xpose.msra.mxu0 0
        %1159 = vmatprep.subr.bf16.mxu0 0
        %1160 = vmatpush1.bf16.xpose.msra.mxu0 0
        %1161 = vmatprep.subr.bf16.mxu0 0
        %1162 = vmatpush1.bf16.xpose.msra.mxu0 0
        %1163 = vmatprep.subr.bf16.mxu0 0
        %1164 = vmatpush1.bf16.xpose.msra.mxu0 %v1147
        %1165 = vmatprep.subr.bf16.mxu0 0
        %1166 = vmatpush2.bf16.xpose.msra.mxu0 0
        %1167 = vmatprep.subr.bf16.mxu0 0
        %1168 = vmatpush2.bf16.xpose.msra.mxu0 0
        %1169 = vmatprep.subr.bf16.mxu0 0
        %1170 = vmatpush2.bf16.xpose.msra.mxu0 0
        %1171 = vmatprep.subr.bf16.mxu0 0
        %1172 = vmatpush2.bf16.xpose.msra.mxu0 0
        %1173 = vmatprep.subr.bf16.mxu0 0
        %1174 = vmatpush2.bf16.xpose.msra.mxu0 0
        %1175 = vmatprep.subr.bf16.mxu0 0
        %1176 = vmatpush2.bf16.xpose.msra.mxu0 0
        %1177 = vmatprep.subr.bf16.mxu0 0
        %1178 = vmatpush2.bf16.xpose.msra.mxu0 0
        %1179 = vmatprep.subr.bf16.mxu0 0
        %1180 = vmatpush2.bf16.xpose.msra.mxu0 0
        %1181 = vmatprep.mubr.bf16.mxu0 0
        %1182 = vmatmul.mubr.bf16.gmra.mxu0 %v1144
        %v1183 = vpop.f32.mrf.mxu0
        %v1184 = vadd.f32 0.0, %v1183
        %v1185 = vpop.f32.mrf.mxu0
        %v1186 = vpop.f32.mrf.mxu0
        %v1187 = vadd.f32 0.0, %v1186
        %v1188 = vpop.f32.mrf.mxu0
        %1189 = vdwg.mxu0
        %v1191 = vsel %vm954, %v935, 0
        %v1194 = vsel %vm954, %v943, 0
        %1196 = vmatprep.subr.bf16.mxu0 0
        %1197 = vmatpush1.bf16.xpose.msra.mxu0 0
        %1198 = vmatprep.subr.bf16.mxu0 0
        %1199 = vmatpush1.bf16.xpose.msra.mxu0 0
        %1200 = vmatprep.subr.bf16.mxu0 0
        %1201 = vmatpush1.bf16.xpose.msra.mxu0 0
        %1202 = vmatprep.subr.bf16.mxu0 0
        %1203 = vmatpush1.bf16.xpose.msra.mxu0 0
        %1204 = vmatprep.subr.bf16.mxu0 0
        %1205 = vmatpush1.bf16.xpose.msra.mxu0 0
        %1206 = vmatprep.subr.bf16.mxu0 0
        %1207 = vmatpush1.bf16.xpose.msra.mxu0 0
        %1208 = vmatprep.subr.bf16.mxu0 0
        %1209 = vmatpush1.bf16.xpose.msra.mxu0 0
        %1210 = vmatprep.subr.bf16.mxu0 0
        %1211 = vmatpush1.bf16.xpose.msra.mxu0 %v1194
        %1212 = vmatprep.subr.bf16.mxu0 0
        %1213 = vmatpush2.bf16.xpose.msra.mxu0 0
        %1214 = vmatprep.subr.bf16.mxu0 0
        %1215 = vmatpush2.bf16.xpose.msra.mxu0 0
        %1216 = vmatprep.subr.bf16.mxu0 0
        %1217 = vmatpush2.bf16.xpose.msra.mxu0 0
        %1218 = vmatprep.subr.bf16.mxu0 0
        %1219 = vmatpush2.bf16.xpose.msra.mxu0 0
        %1220 = vmatprep.subr.bf16.mxu0 0
        %1221 = vmatpush2.bf16.xpose.msra.mxu0 0
        %1222 = vmatprep.subr.bf16.mxu0 0
        %1223 = vmatpush2.bf16.xpose.msra.mxu0 0
        %1224 = vmatprep.subr.bf16.mxu0 0
        %1225 = vmatpush2.bf16.xpose.msra.mxu0 0
        %1226 = vmatprep.subr.bf16.mxu0 0
        %1227 = vmatpush2.bf16.xpose.msra.mxu0 0
        %1228 = vmatprep.mubr.bf16.mxu0 0
        %1229 = vmatmul.mubr.bf16.gmra.mxu0 %v1191
        %v1230 = vpop.f32.mrf.mxu0
        %v1231 = vadd.f32 0.0, %v1230
        %v1232 = vpop.f32.mrf.mxu0
        %v1233 = vpop.f32.mrf.mxu0
        %v1234 = vadd.f32 0.0, %v1233
        %v1235 = vpop.f32.mrf.mxu0
        %1236 = vdwg.mxu0
        %v1238 = vsel %vm954, %v936, 0
        %v1241 = vsel %vm954, %v944, 0
        %1243 = vmatprep.subr.bf16.mxu0 0
        %1244 = vmatpush1.bf16.xpose.msra.mxu0 0
        %1245 = vmatprep.subr.bf16.mxu0 0
        %1246 = vmatpush1.bf16.xpose.msra.mxu0 0
        %1247 = vmatprep.subr.bf16.mxu0 0
        %1248 = vmatpush1.bf16.xpose.msra.mxu0 0
        %1249 = vmatprep.subr.bf16.mxu0 0
        %1250 = vmatpush1.bf16.xpose.msra.mxu0 0
        %1251 = vmatprep.subr.bf16.mxu0 0
        %1252 = vmatpush1.bf16.xpose.msra.mxu0 0
        %1253 = vmatprep.subr.bf16.mxu0 0
        %1254 = vmatpush1.bf16.xpose.msra.mxu0 0
        %1255 = vmatprep.subr.bf16.mxu0 0
        %1256 = vmatpush1.bf16.xpose.msra.mxu0 0
        %1257 = vmatprep.subr.bf16.mxu0 0
        %1258 = vmatpush1.bf16.xpose.msra.mxu0 %v1241
        %1259 = vmatprep.subr.bf16.mxu0 0
        %1260 = vmatpush2.bf16.xpose.msra.mxu0 0
        %1261 = vmatprep.subr.bf16.mxu0 0
        %1262 = vmatpush2.bf16.xpose.msra.mxu0 0
        %1263 = vmatprep.subr.bf16.mxu0 0
        %1264 = vmatpush2.bf16.xpose.msra.mxu0 0
        %1265 = vmatprep.subr.bf16.mxu0 0
        %1266 = vmatpush2.bf16.xpose.msra.mxu0 0
        %1267 = vmatprep.subr.bf16.mxu0 0
        %1268 = vmatpush2.bf16.xpose.msra.mxu0 0
        %1269 = vmatprep.subr.bf16.mxu0 0
        %1270 = vmatpush2.bf16.xpose.msra.mxu0 0
        %1271 = vmatprep.subr.bf16.mxu0 0
        %1272 = vmatpush2.bf16.xpose.msra.mxu0 0
        %1273 = vmatprep.subr.bf16.mxu0 0
        %1274 = vmatpush2.bf16.xpose.msra.mxu0 0
        %1275 = vmatprep.mubr.bf16.mxu0 0
        %1276 = vmatmul.mubr.bf16.gmra.mxu0 %v1238
        %v1277 = vpop.f32.mrf.mxu0
        %v1278 = vadd.f32 0.0, %v1277
        %v1279 = vpop.f32.mrf.mxu0
        %v1280 = vpop.f32.mrf.mxu0
        %v1281 = vadd.f32 0.0, %v1280
        %v1282 = vpop.f32.mrf.mxu0
        %1283 = vdwg.mxu0
        %v1285 = vsel %vm954, %v937, 0
        %v1288 = vsel %vm954, %v945, 0
        %1290 = vmatprep.subr.bf16.mxu0 0
        %1291 = vmatpush1.bf16.xpose.msra.mxu0 0
        %1292 = vmatprep.subr.bf16.mxu0 0
        %1293 = vmatpush1.bf16.xpose.msra.mxu0 0
        %1294 = vmatprep.subr.bf16.mxu0 0
        %1295 = vmatpush1.bf16.xpose.msra.mxu0 0
        %1296 = vmatprep.subr.bf16.mxu0 0
        %1297 = vmatpush1.bf16.xpose.msra.mxu0 0
        %1298 = vmatprep.subr.bf16.mxu0 0
        %1299 = vmatpush1.bf16.xpose.msra.mxu0 0
        %1300 = vmatprep.subr.bf16.mxu0 0
        %1301 = vmatpush1.bf16.xpose.msra.mxu0 0
        %1302 = vmatprep.subr.bf16.mxu0 0
        %1303 = vmatpush1.bf16.xpose.msra.mxu0 0
        %1304 = vmatprep.subr.bf16.mxu0 0
        %1305 = vmatpush1.bf16.xpose.msra.mxu0 %v1288
        %1306 = vmatprep.subr.bf16.mxu0 0
        %1307 = vmatpush2.bf16.xpose.msra.mxu0 0
        %1308 = vmatprep.subr.bf16.mxu0 0
        %1309 = vmatpush2.bf16.xpose.msra.mxu0 0
        %1310 = vmatprep.subr.bf16.mxu0 0
        %1311 = vmatpush2.bf16.xpose.msra.mxu0 0
        %1312 = vmatprep.subr.bf16.mxu0 0
        %1313 = vmatpush2.bf16.xpose.msra.mxu0 0
        %1314 = vmatprep.subr.bf16.mxu0 0
        %1315 = vmatpush2.bf16.xpose.msra.mxu0 0
        %1316 = vmatprep.subr.bf16.mxu0 0
        %1317 = vmatpush2.bf16.xpose.msra.mxu0 0
        %1318 = vmatprep.subr.bf16.mxu0 0
        %1319 = vmatpush2.bf16.xpose.msra.mxu0 0
        %1320 = vmatprep.subr.bf16.mxu0 0
        %1321 = vmatpush2.bf16.xpose.msra.mxu0 0
        %1322 = vmatprep.mubr.bf16.mxu0 0
        %1323 = vmatmul.mubr.bf16.gmra.mxu0 %v1285
        %v1324 = vpop.f32.mrf.mxu0
        %v1325 = vadd.f32 0.0, %v1324
        %v1326 = vpop.f32.mrf.mxu0
        %v1327 = vpop.f32.mrf.mxu0
        %v1328 = vadd.f32 0.0, %v1327
        %v1329 = vpop.f32.mrf.mxu0
        %1330 = vdwg.mxu0
        %v1331 = vmul.f32 %v996, 0.17677669
        %v1332 = vmul.f32 %v999, 0.17677669
        %v1333 = vmul.f32 %v1043, 0.17677669
        %v1334 = vmul.f32 %v1046, 0.17677669
        %v1335 = vmul.f32 %v1090, 0.17677669
        %v1336 = vmul.f32 %v1093, 0.17677669
        %v1337 = vmul.f32 %v1137, 0.17677669
        %v1338 = vmul.f32 %v1140, 0.17677669
        %v1339 = vmul.f32 %v1184, 0.17677669
        %v1340 = vmul.f32 %v1187, 0.17677669
        %v1341 = vmul.f32 %v1231, 0.17677669
        %v1342 = vmul.f32 %v1234, 0.17677669
        %v1343 = vmul.f32 %v1278, 0.17677669
        %v1344 = vmul.f32 %v1281, 0.17677669
        %v1345 = vmul.f32 %v1325, 0.17677669
        %v1346 = vmul.f32 %v1328, 0.17677669
        %v1347 = vadd.f32 %v1331, %v519
        %v1348 = vadd.f32 %v1332, %v520
        %v1349 = vadd.f32 %v1333, %v521
        %v1350 = vadd.f32 %v1334, %v522
        %v1351 = vadd.f32 %v1335, %v523
        %v1352 = vadd.f32 %v1336, %v524
        %v1353 = vadd.f32 %v1337, %v525
        %v1354 = vadd.f32 %v1338, %v526
        %v1355 = vadd.f32 %v1339, %v527
        %v1356 = vadd.f32 %v1340, %v528
        %v1357 = vadd.f32 %v1341, %v529
        %v1358 = vadd.f32 %v1342, %v530
        %v1359 = vadd.f32 %v1343, %v531
        %v1360 = vadd.f32 %v1344, %v532
        %v1361 = vadd.f32 %v1345, %v533
        %v1362 = vadd.f32 %v1346, %v534
        %vm1363 = vcmask 130048
        %v1364 = vsel %vm1363, %v1347, -inf
        %1365 = vmax.xlane.f32.xlu0 %v1364
        %v1366 = vpop.xlane.xlu0 %1365
        %v1367 = vsel %vm1363, %v1348, -inf
        %1368 = vmax.xlane.f32.xlu0 %v1367
        %v1369 = vpop.xlane.xlu0 %1368
        %v1370 = vsel %vm1363, %v1349, -inf
        %1371 = vmax.xlane.f32.xlu0 %v1370
        %v1372 = vpop.xlane.xlu0 %1371
        %v1373 = vsel %vm1363, %v1350, -inf
        %1374 = vmax.xlane.f32.xlu0 %v1373
        %v1375 = vpop.xlane.xlu0 %1374
        %v1376 = vsel %vm1363, %v1351, -inf
        %1377 = vmax.xlane.f32.xlu0 %v1376
        %v1378 = vpop.xlane.xlu0 %1377
        %v1379 = vsel %vm1363, %v1352, -inf
        %1380 = vmax.xlane.f32.xlu0 %v1379
        %v1381 = vpop.xlane.xlu0 %1380
        %v1382 = vsel %vm1363, %v1353, -inf
        %1383 = vmax.xlane.f32.xlu0 %v1382
        %v1384 = vpop.xlane.xlu0 %1383
        %v1385 = vsel %vm1363, %v1354, -inf
        %1386 = vmax.xlane.f32.xlu0 %v1385
        %v1387 = vpop.xlane.xlu0 %1386
        %v1388 = vsel %vm1363, %v1355, -inf
        %1389 = vmax.xlane.f32.xlu0 %v1388
        %v1390 = vpop.xlane.xlu0 %1389
        %v1391 = vsel %vm1363, %v1356, -inf
        %1392 = vmax.xlane.f32.xlu0 %v1391
        %v1393 = vpop.xlane.xlu0 %1392
        %v1394 = vsel %vm1363, %v1357, -inf
        %1395 = vmax.xlane.f32.xlu0 %v1394
        %v1396 = vpop.xlane.xlu0 %1395
        %v1397 = vsel %vm1363, %v1358, -inf
        %1398 = vmax.xlane.f32.xlu0 %v1397
        %v1399 = vpop.xlane.xlu0 %1398
        %v1400 = vsel %vm1363, %v1359, -inf
        %1401 = vmax.xlane.f32.xlu0 %v1400
        %v1402 = vpop.xlane.xlu0 %1401
        %v1403 = vsel %vm1363, %v1360, -inf
        %1404 = vmax.xlane.f32.xlu0 %v1403
        %v1405 = vpop.xlane.xlu0 %1404
        %v1406 = vsel %vm1363, %v1361, -inf
        %1407 = vmax.xlane.f32.xlu0 %v1406
        %v1408 = vpop.xlane.xlu0 %1407
        %v1409 = vsel %vm1363, %v1362, -inf
        %1410 = vmax.xlane.f32.xlu0 %v1409
        %v1411 = vpop.xlane.xlu0 %1410
        %v1412 = vsub.f32 %v1347, %v1366
        %v1413 = vsub.f32 %v1348, %v1369
        %v1414 = vsub.f32 %v1349, %v1372
        %v1415 = vsub.f32 %v1350, %v1375
        %v1416 = vsub.f32 %v1351, %v1378
        %v1417 = vsub.f32 %v1352, %v1381
        %v1418 = vsub.f32 %v1353, %v1384
        %v1419 = vsub.f32 %v1354, %v1387
        %v1420 = vsub.f32 %v1355, %v1390
        %v1421 = vsub.f32 %v1356, %v1393
        %v1422 = vsub.f32 %v1357, %v1396
        %v1423 = vsub.f32 %v1358, %v1399
        %v1424 = vsub.f32 %v1359, %v1402
        %v1425 = vsub.f32 %v1360, %v1405
        %v1426 = vsub.f32 %v1361, %v1408
        %v1427 = vsub.f32 %v1362, %v1411
        %v1428 = vmul.f32 %v1412, 1.442695
        %v1429 = vpow.pop %v1428
        %v1430 = vmul.f32 %v1413, 1.442695
        %v1431 = vpow.pop %v1430
        %v1432 = vmul.f32 %v1414, 1.442695
        %v1433 = vpow.pop %v1432
        %v1434 = vmul.f32 %v1415, 1.442695
        %v1435 = vpow.pop %v1434
        %v1436 = vmul.f32 %v1416, 1.442695
        %v1437 = vpow.pop %v1436
        %v1438 = vmul.f32 %v1417, 1.442695
        %v1439 = vpow.pop %v1438
        %v1440 = vmul.f32 %v1418, 1.442695
        %v1441 = vpow.pop %v1440
        %v1442 = vmul.f32 %v1419, 1.442695
        %v1443 = vpow.pop %v1442
        %v1444 = vmul.f32 %v1420, 1.442695
        %v1445 = vpow.pop %v1444
        %v1446 = vmul.f32 %v1421, 1.442695
        %v1447 = vpow.pop %v1446
        %v1448 = vmul.f32 %v1422, 1.442695
        %v1449 = vpow.pop %v1448
        %v1450 = vmul.f32 %v1423, 1.442695
        %v1451 = vpow.pop %v1450
        %v1452 = vmul.f32 %v1424, 1.442695
        %v1453 = vpow.pop %v1452
        %v1454 = vmul.f32 %v1425, 1.442695
        %v1455 = vpow.pop %v1454
        %v1456 = vmul.f32 %v1426, 1.442695
        %v1457 = vpow.pop %v1456
        %v1458 = vmul.f32 %v1427, 1.442695
        %v1459 = vpow.pop %v1458
        %v1460 = vsel %vm1363, %v1429, 0.0
        %1461 = vadd.xlane.f32.xlu0 %v1460
        %v1462 = vpop.xlane.xlu0 %1461
        %v1463 = vsel %vm1363, %v1431, 0.0
        %1464 = vadd.xlane.f32.xlu0 %v1463
        %v1465 = vpop.xlane.xlu0 %1464
        %v1466 = vsel %vm1363, %v1433, 0.0
        %1467 = vadd.xlane.f32.xlu0 %v1466
        %v1468 = vpop.xlane.xlu0 %1467
        %v1469 = vsel %vm1363, %v1435, 0.0
        %1470 = vadd.xlane.f32.xlu0 %v1469
        %v1471 = vpop.xlane.xlu0 %1470
        %v1472 = vsel %vm1363, %v1437, 0.0
        %1473 = vadd.xlane.f32.xlu0 %v1472
        %v1474 = vpop.xlane.xlu0 %1473
        %v1475 = vsel %vm1363, %v1439, 0.0
        %1476 = vadd.xlane.f32.xlu0 %v1475
        %v1477 = vpop.xlane.xlu0 %1476
        %v1478 = vsel %vm1363, %v1441, 0.0
        %1479 = vadd.xlane.f32.xlu0 %v1478
        %v1480 = vpop.xlane.xlu0 %1479
        %v1481 = vsel %vm1363, %v1443, 0.0
        %1482 = vadd.xlane.f32.xlu0 %v1481
        %v1483 = vpop.xlane.xlu0 %1482
        %v1484 = vsel %vm1363, %v1445, 0.0
        %1485 = vadd.xlane.f32.xlu0 %v1484
        %v1486 = vpop.xlane.xlu0 %1485
        %v1487 = vsel %vm1363, %v1447, 0.0
        %1488 = vadd.xlane.f32.xlu0 %v1487
        %v1489 = vpop.xlane.xlu0 %1488
        %v1490 = vsel %vm1363, %v1449, 0.0
        %1491 = vadd.xlane.f32.xlu0 %v1490
        %v1492 = vpop.xlane.xlu0 %1491
        %v1493 = vsel %vm1363, %v1451, 0.0
        %1494 = vadd.xlane.f32.xlu0 %v1493
        %v1495 = vpop.xlane.xlu0 %1494
        %v1496 = vsel %vm1363, %v1453, 0.0
        %1497 = vadd.xlane.f32.xlu0 %v1496
        %v1498 = vpop.xlane.xlu0 %1497
        %v1499 = vsel %vm1363, %v1455, 0.0
        %1500 = vadd.xlane.f32.xlu0 %v1499
        %v1501 = vpop.xlane.xlu0 %1500
        %v1502 = vsel %vm1363, %v1457, 0.0
        %1503 = vadd.xlane.f32.xlu0 %v1502
        %v1504 = vpop.xlane.xlu0 %1503
        %v1505 = vsel %vm1363, %v1459, 0.0
        %1506 = vadd.xlane.f32.xlu0 %v1505
        %v1507 = vpop.xlane.xlu0 %1506
        %v1508 = vrcp.pop %v1462
        %v1509 = vrcp.pop %v1465
        %v1510 = vrcp.pop %v1468
        %v1511 = vrcp.pop %v1471
        %v1512 = vrcp.pop %v1474
        %v1513 = vrcp.pop %v1477
        %v1514 = vrcp.pop %v1480
        %v1515 = vrcp.pop %v1483
        %v1516 = vrcp.pop %v1486
        %v1517 = vrcp.pop %v1489
        %v1518 = vrcp.pop %v1492
        %v1519 = vrcp.pop %v1495
        %v1520 = vrcp.pop %v1498
        %v1521 = vrcp.pop %v1501
        %v1522 = vrcp.pop %v1504
        %v1523 = vrcp.pop %v1507
        %v1524 = vmul.f32 %v1429, %v1508
        %v1525 = vmul.f32 %v1431, %v1509
        %v1526 = vmul.f32 %v1433, %v1510
        %v1527 = vmul.f32 %v1435, %v1511
        %v1528 = vmul.f32 %v1437, %v1512
        %v1529 = vmul.f32 %v1439, %v1513
        %v1530 = vmul.f32 %v1441, %v1514
        %v1531 = vmul.f32 %v1443, %v1515
        %v1532 = vmul.f32 %v1445, %v1516
        %v1533 = vmul.f32 %v1447, %v1517
        %v1534 = vmul.f32 %v1449, %v1518
        %v1535 = vmul.f32 %v1451, %v1519
        %v1536 = vmul.f32 %v1453, %v1520
        %v1537 = vmul.f32 %v1455, %v1521
        %v1538 = vmul.f32 %v1457, %v1522
        %v1539 = vmul.f32 %v1459, %v1523
        %v1540 = vpack.c.bf16 %v1525, %v1524
        %v1541 = vpack.c.bf16 %v1527, %v1526
        %v1542 = vpack.c.bf16 %v1529, %v1528
        %v1543 = vpack.c.bf16 %v1531, %v1530
        %v1544 = vpack.c.bf16 %v1533, %v1532
        %v1545 = vpack.c.bf16 %v1535, %v1534
        %v1546 = vpack.c.bf16 %v1537, %v1536
        %v1547 = vpack.c.bf16 %v1539, %v1538
        %v1549 = vsel %vm1363, %v1540, 0
        %1551 = vmatprep.subr.bf16.mxu0 0
        %1552 = vmatpush1.bf16.msra.mxu0 0
        %1553 = vmatprep.subr.bf16.mxu0 0
        %1554 = vmatpush1.bf16.msra.mxu0 0
        %1555 = vmatprep.subr.bf16.mxu0 0
        %1556 = vmatpush1.bf16.msra.mxu0 0
        %1557 = vmatprep.subr.bf16.mxu0 0
        %1558 = vmatpush1.bf16.msra.mxu0 0
        %1559 = vmatprep.subr.bf16.mxu0 0
        %1560 = vmatpush1.bf16.msra.mxu0 0
        %1561 = vmatprep.subr.bf16.mxu0 0
        %1562 = vmatpush1.bf16.msra.mxu0 0
        %1563 = vmatprep.subr.bf16.mxu0 0
        %1564 = vmatpush1.bf16.msra.mxu0 0
        %1565 = vmatprep.subr.bf16.mxu0 0
        %1566 = vmatpush1.bf16.msra.mxu0 %v946
        %1567 = vmatprep.subr.bf16.mxu0 0
        %1568 = vmatpush2.bf16.msra.mxu0 0
        %1569 = vmatprep.subr.bf16.mxu0 0
        %1570 = vmatpush2.bf16.msra.mxu0 0
        %1571 = vmatprep.subr.bf16.mxu0 0
        %1572 = vmatpush2.bf16.msra.mxu0 0
        %1573 = vmatprep.subr.bf16.mxu0 0
        %1574 = vmatpush2.bf16.msra.mxu0 0
        %1575 = vmatprep.subr.bf16.mxu0 0
        %1576 = vmatpush2.bf16.msra.mxu0 0
        %1577 = vmatprep.subr.bf16.mxu0 0
        %1578 = vmatpush2.bf16.msra.mxu0 0
        %1579 = vmatprep.subr.bf16.mxu0 0
        %1580 = vmatpush2.bf16.msra.mxu0 0
        %1581 = vmatprep.subr.bf16.mxu0 0
        %1582 = vmatpush2.bf16.msra.mxu0 0
        %1583 = vmatprep.mubr.bf16.mxu0 0
        %1584 = vmatmul.mubr.bf16.gmra.mxu0 %v1549
        %v1585 = vpop.f32.mrf.mxu0
        %v1586 = vadd.f32 0.0, %v1585
        %v1587 = vpop.f32.mrf.mxu0
        %v1588 = vpop.f32.mrf.mxu0
        %v1589 = vadd.f32 0.0, %v1588
        %v1590 = vpop.f32.mrf.mxu0
        %1591 = vdwg.mxu0
        %v1593 = vsel %vm1363, %v1541, 0
        %1595 = vmatprep.subr.bf16.mxu0 0
        %1596 = vmatpush1.bf16.msra.mxu0 0
        %1597 = vmatprep.subr.bf16.mxu0 0
        %1598 = vmatpush1.bf16.msra.mxu0 0
        %1599 = vmatprep.subr.bf16.mxu0 0
        %1600 = vmatpush1.bf16.msra.mxu0 0
        %1601 = vmatprep.subr.bf16.mxu0 0
        %1602 = vmatpush1.bf16.msra.mxu0 0
        %1603 = vmatprep.subr.bf16.mxu0 0
        %1604 = vmatpush1.bf16.msra.mxu0 0
        %1605 = vmatprep.subr.bf16.mxu0 0
        %1606 = vmatpush1.bf16.msra.mxu0 0
        %1607 = vmatprep.subr.bf16.mxu0 0
        %1608 = vmatpush1.bf16.msra.mxu0 0
        %1609 = vmatprep.subr.bf16.mxu0 0
        %1610 = vmatpush1.bf16.msra.mxu0 %v947
        %1611 = vmatprep.subr.bf16.mxu0 0
        %1612 = vmatpush2.bf16.msra.mxu0 0
        %1613 = vmatprep.subr.bf16.mxu0 0
        %1614 = vmatpush2.bf16.msra.mxu0 0
        %1615 = vmatprep.subr.bf16.mxu0 0
        %1616 = vmatpush2.bf16.msra.mxu0 0
        %1617 = vmatprep.subr.bf16.mxu0 0
        %1618 = vmatpush2.bf16.msra.mxu0 0
        %1619 = vmatprep.subr.bf16.mxu0 0
        %1620 = vmatpush2.bf16.msra.mxu0 0
        %1621 = vmatprep.subr.bf16.mxu0 0
        %1622 = vmatpush2.bf16.msra.mxu0 0
        %1623 = vmatprep.subr.bf16.mxu0 0
        %1624 = vmatpush2.bf16.msra.mxu0 0
        %1625 = vmatprep.subr.bf16.mxu0 0
        %1626 = vmatpush2.bf16.msra.mxu0 0
        %1627 = vmatprep.mubr.bf16.mxu0 0
        %1628 = vmatmul.mubr.bf16.gmra.mxu0 %v1593
        %v1629 = vpop.f32.mrf.mxu0
        %v1630 = vadd.f32 0.0, %v1629
        %v1631 = vpop.f32.mrf.mxu0
        %v1632 = vpop.f32.mrf.mxu0
        %v1633 = vadd.f32 0.0, %v1632
        %v1634 = vpop.f32.mrf.mxu0
        %1635 = vdwg.mxu0
        %v1637 = vsel %vm1363, %v1542, 0
        %1639 = vmatprep.subr.bf16.mxu0 0
        %1640 = vmatpush1.bf16.msra.mxu0 0
        %1641 = vmatprep.subr.bf16.mxu0 0
        %1642 = vmatpush1.bf16.msra.mxu0 0
        %1643 = vmatprep.subr.bf16.mxu0 0
        %1644 = vmatpush1.bf16.msra.mxu0 0
        %1645 = vmatprep.subr.bf16.mxu0 0
        %1646 = vmatpush1.bf16.msra.mxu0 0
        %1647 = vmatprep.subr.bf16.mxu0 0
        %1648 = vmatpush1.bf16.msra.mxu0 0
        %1649 = vmatprep.subr.bf16.mxu0 0
        %1650 = vmatpush1.bf16.msra.mxu0 0
        %1651 = vmatprep.subr.bf16.mxu0 0
        %1652 = vmatpush1.bf16.msra.mxu0 0
        %1653 = vmatprep.subr.bf16.mxu0 0
        %1654 = vmatpush1.bf16.msra.mxu0 %v948
        %1655 = vmatprep.subr.bf16.mxu0 0
        %1656 = vmatpush2.bf16.msra.mxu0 0
        %1657 = vmatprep.subr.bf16.mxu0 0
        %1658 = vmatpush2.bf16.msra.mxu0 0
        %1659 = vmatprep.subr.bf16.mxu0 0
        %1660 = vmatpush2.bf16.msra.mxu0 0
        %1661 = vmatprep.subr.bf16.mxu0 0
        %1662 = vmatpush2.bf16.msra.mxu0 0
        %1663 = vmatprep.subr.bf16.mxu0 0
        %1664 = vmatpush2.bf16.msra.mxu0 0
        %1665 = vmatprep.subr.bf16.mxu0 0
        %1666 = vmatpush2.bf16.msra.mxu0 0
        %1667 = vmatprep.subr.bf16.mxu0 0
        %1668 = vmatpush2.bf16.msra.mxu0 0
        %1669 = vmatprep.subr.bf16.mxu0 0
        %1670 = vmatpush2.bf16.msra.mxu0 0
        %1671 = vmatprep.mubr.bf16.mxu0 0
        %1672 = vmatmul.mubr.bf16.gmra.mxu0 %v1637
        %v1673 = vpop.f32.mrf.mxu0
        %v1674 = vadd.f32 0.0, %v1673
        %v1675 = vpop.f32.mrf.mxu0
        %v1676 = vpop.f32.mrf.mxu0
        %v1677 = vadd.f32 0.0, %v1676
        %v1678 = vpop.f32.mrf.mxu0
        %1679 = vdwg.mxu0
        %v1681 = vsel %vm1363, %v1543, 0
        %1683 = vmatprep.subr.bf16.mxu0 0
        %1684 = vmatpush1.bf16.msra.mxu0 0
        %1685 = vmatprep.subr.bf16.mxu0 0
        %1686 = vmatpush1.bf16.msra.mxu0 0
        %1687 = vmatprep.subr.bf16.mxu0 0
        %1688 = vmatpush1.bf16.msra.mxu0 0
        %1689 = vmatprep.subr.bf16.mxu0 0
        %1690 = vmatpush1.bf16.msra.mxu0 0
        %1691 = vmatprep.subr.bf16.mxu0 0
        %1692 = vmatpush1.bf16.msra.mxu0 0
        %1693 = vmatprep.subr.bf16.mxu0 0
        %1694 = vmatpush1.bf16.msra.mxu0 0
        %1695 = vmatprep.subr.bf16.mxu0 0
        %1696 = vmatpush1.bf16.msra.mxu0 0
        %1697 = vmatprep.subr.bf16.mxu0 0
        %1698 = vmatpush1.bf16.msra.mxu0 %v949
        %1699 = vmatprep.subr.bf16.mxu0 0
        %1700 = vmatpush2.bf16.msra.mxu0 0
        %1701 = vmatprep.subr.bf16.mxu0 0
        %1702 = vmatpush2.bf16.msra.mxu0 0
        %1703 = vmatprep.subr.bf16.mxu0 0
        %1704 = vmatpush2.bf16.msra.mxu0 0
        %1705 = vmatprep.subr.bf16.mxu0 0
        %1706 = vmatpush2.bf16.msra.mxu0 0
        %1707 = vmatprep.subr.bf16.mxu0 0
        %1708 = vmatpush2.bf16.msra.mxu0 0
        %1709 = vmatprep.subr.bf16.mxu0 0
        %1710 = vmatpush2.bf16.msra.mxu0 0
        %1711 = vmatprep.subr.bf16.mxu0 0
        %1712 = vmatpush2.bf16.msra.mxu0 0
        %1713 = vmatprep.subr.bf16.mxu0 0
        %1714 = vmatpush2.bf16.msra.mxu0 0
        %1715 = vmatprep.mubr.bf16.mxu0 0
        %1716 = vmatmul.mubr.bf16.gmra.mxu0 %v1681
        %v1717 = vpop.f32.mrf.mxu0
        %v1718 = vadd.f32 0.0, %v1717
        %v1719 = vpop.f32.mrf.mxu0
        %v1720 = vpop.f32.mrf.mxu0
        %v1721 = vadd.f32 0.0, %v1720
        %v1722 = vpop.f32.mrf.mxu0
        %1723 = vdwg.mxu0
        %v1725 = vsel %vm1363, %v1544, 0
        %1727 = vmatprep.subr.bf16.mxu0 0
        %1728 = vmatpush1.bf16.msra.mxu0 0
        %1729 = vmatprep.subr.bf16.mxu0 0
        %1730 = vmatpush1.bf16.msra.mxu0 0
        %1731 = vmatprep.subr.bf16.mxu0 0
        %1732 = vmatpush1.bf16.msra.mxu0 0
        %1733 = vmatprep.subr.bf16.mxu0 0
        %1734 = vmatpush1.bf16.msra.mxu0 0
        %1735 = vmatprep.subr.bf16.mxu0 0
        %1736 = vmatpush1.bf16.msra.mxu0 0
        %1737 = vmatprep.subr.bf16.mxu0 0
        %1738 = vmatpush1.bf16.msra.mxu0 0
        %1739 = vmatprep.subr.bf16.mxu0 0
        %1740 = vmatpush1.bf16.msra.mxu0 0
        %1741 = vmatprep.subr.bf16.mxu0 0
        %1742 = vmatpush1.bf16.msra.mxu0 %v950
        %1743 = vmatprep.subr.bf16.mxu0 0
        %1744 = vmatpush2.bf16.msra.mxu0 0
        %1745 = vmatprep.subr.bf16.mxu0 0
        %1746 = vmatpush2.bf16.msra.mxu0 0
        %1747 = vmatprep.subr.bf16.mxu0 0
        %1748 = vmatpush2.bf16.msra.mxu0 0
        %1749 = vmatprep.subr.bf16.mxu0 0
        %1750 = vmatpush2.bf16.msra.mxu0 0
        %1751 = vmatprep.subr.bf16.mxu0 0
        %1752 = vmatpush2.bf16.msra.mxu0 0
        %1753 = vmatprep.subr.bf16.mxu0 0
        %1754 = vmatpush2.bf16.msra.mxu0 0
        %1755 = vmatprep.subr.bf16.mxu0 0
        %1756 = vmatpush2.bf16.msra.mxu0 0
        %1757 = vmatprep.subr.bf16.mxu0 0
        %1758 = vmatpush2.bf16.msra.mxu0 0
        %1759 = vmatprep.mubr.bf16.mxu0 0
        %1760 = vmatmul.mubr.bf16.gmra.mxu0 %v1725
        %v1761 = vpop.f32.mrf.mxu0
        %v1762 = vadd.f32 0.0, %v1761
        %v1763 = vpop.f32.mrf.mxu0
        %v1764 = vpop.f32.mrf.mxu0
        %v1765 = vadd.f32 0.0, %v1764
        %v1766 = vpop.f32.mrf.mxu0
        %1767 = vdwg.mxu0
        %v1769 = vsel %vm1363, %v1545, 0
        %1771 = vmatprep.subr.bf16.mxu0 0
        %1772 = vmatpush1.bf16.msra.mxu0 0
        %1773 = vmatprep.subr.bf16.mxu0 0
        %1774 = vmatpush1.bf16.msra.mxu0 0
        %1775 = vmatprep.subr.bf16.mxu0 0
        %1776 = vmatpush1.bf16.msra.mxu0 0
        %1777 = vmatprep.subr.bf16.mxu0 0
        %1778 = vmatpush1.bf16.msra.mxu0 0
        %1779 = vmatprep.subr.bf16.mxu0 0
        %1780 = vmatpush1.bf16.msra.mxu0 0
        %1781 = vmatprep.subr.bf16.mxu0 0
        %1782 = vmatpush1.bf16.msra.mxu0 0
        %1783 = vmatprep.subr.bf16.mxu0 0
        %1784 = vmatpush1.bf16.msra.mxu0 0
        %1785 = vmatprep.subr.bf16.mxu0 0
        %1786 = vmatpush1.bf16.msra.mxu0 %v951
        %1787 = vmatprep.subr.bf16.mxu0 0
        %1788 = vmatpush2.bf16.msra.mxu0 0
        %1789 = vmatprep.subr.bf16.mxu0 0
        %1790 = vmatpush2.bf16.msra.mxu0 0
        %1791 = vmatprep.subr.bf16.mxu0 0
        %1792 = vmatpush2.bf16.msra.mxu0 0
        %1793 = vmatprep.subr.bf16.mxu0 0
        %1794 = vmatpush2.bf16.msra.mxu0 0
        %1795 = vmatprep.subr.bf16.mxu0 0
        %1796 = vmatpush2.bf16.msra.mxu0 0
        %1797 = vmatprep.subr.bf16.mxu0 0
        %1798 = vmatpush2.bf16.msra.mxu0 0
        %1799 = vmatprep.subr.bf16.mxu0 0
        %1800 = vmatpush2.bf16.msra.mxu0 0
        %1801 = vmatprep.subr.bf16.mxu0 0
        %1802 = vmatpush2.bf16.msra.mxu0 0
        %1803 = vmatprep.mubr.bf16.mxu0 0
        %1804 = vmatmul.mubr.bf16.gmra.mxu0 %v1769
        %v1805 = vpop.f32.mrf.mxu0
        %v1806 = vadd.f32 0.0, %v1805
        %v1807 = vpop.f32.mrf.mxu0
        %v1808 = vpop.f32.mrf.mxu0
        %v1809 = vadd.f32 0.0, %v1808
        %v1810 = vpop.f32.mrf.mxu0
        %1811 = vdwg.mxu0
        %v1813 = vsel %vm1363, %v1546, 0
        %1815 = vmatprep.subr.bf16.mxu0 0
        %1816 = vmatpush1.bf16.msra.mxu0 0
        %1817 = vmatprep.subr.bf16.mxu0 0
        %1818 = vmatpush1.bf16.msra.mxu0 0
        %1819 = vmatprep.subr.bf16.mxu0 0
        %1820 = vmatpush1.bf16.msra.mxu0 0
        %1821 = vmatprep.subr.bf16.mxu0 0
        %1822 = vmatpush1.bf16.msra.mxu0 0
        %1823 = vmatprep.subr.bf16.mxu0 0
        %1824 = vmatpush1.bf16.msra.mxu0 0
        %1825 = vmatprep.subr.bf16.mxu0 0
        %1826 = vmatpush1.bf16.msra.mxu0 0
        %1827 = vmatprep.subr.bf16.mxu0 0
        %1828 = vmatpush1.bf16.msra.mxu0 0
        %1829 = vmatprep.subr.bf16.mxu0 0
        %1830 = vmatpush1.bf16.msra.mxu0 %v952
        %1831 = vmatprep.subr.bf16.mxu0 0
        %1832 = vmatpush2.bf16.msra.mxu0 0
        %1833 = vmatprep.subr.bf16.mxu0 0
        %1834 = vmatpush2.bf16.msra.mxu0 0
        %1835 = vmatprep.subr.bf16.mxu0 0
        %1836 = vmatpush2.bf16.msra.mxu0 0
        %1837 = vmatprep.subr.bf16.mxu0 0
        %1838 = vmatpush2.bf16.msra.mxu0 0
        %1839 = vmatprep.subr.bf16.mxu0 0
        %1840 = vmatpush2.bf16.msra.mxu0 0
        %1841 = vmatprep.subr.bf16.mxu0 0
        %1842 = vmatpush2.bf16.msra.mxu0 0
        %1843 = vmatprep.subr.bf16.mxu0 0
        %1844 = vmatpush2.bf16.msra.mxu0 0
        %1845 = vmatprep.subr.bf16.mxu0 0
        %1846 = vmatpush2.bf16.msra.mxu0 0
        %1847 = vmatprep.mubr.bf16.mxu0 0
        %1848 = vmatmul.mubr.bf16.gmra.mxu0 %v1813
        %v1849 = vpop.f32.mrf.mxu0
        %v1850 = vadd.f32 0.0, %v1849
        %v1851 = vpop.f32.mrf.mxu0
        %v1852 = vpop.f32.mrf.mxu0
        %v1853 = vadd.f32 0.0, %v1852
        %v1854 = vpop.f32.mrf.mxu0
        %1855 = vdwg.mxu0
        %v1857 = vsel %vm1363, %v1547, 0
        %1859 = vmatprep.subr.bf16.mxu0 0
        %1860 = vmatpush1.bf16.msra.mxu0 0
        %1861 = vmatprep.subr.bf16.mxu0 0
        %1862 = vmatpush1.bf16.msra.mxu0 0
        %1863 = vmatprep.subr.bf16.mxu0 0
        %1864 = vmatpush1.bf16.msra.mxu0 0
        %1865 = vmatprep.subr.bf16.mxu0 0
        %1866 = vmatpush1.bf16.msra.mxu0 0
        %1867 = vmatprep.subr.bf16.mxu0 0
        %1868 = vmatpush1.bf16.msra.mxu0 0
        %1869 = vmatprep.subr.bf16.mxu0 0
        %1870 = vmatpush1.bf16.msra.mxu0 0
        %1871 = vmatprep.subr.bf16.mxu0 0
        %1872 = vmatpush1.bf16.msra.mxu0 0
        %1873 = vmatprep.subr.bf16.mxu0 0
        %1874 = vmatpush1.bf16.msra.mxu0 %v953
        %1875 = vmatprep.subr.bf16.mxu0 0
        %1876 = vmatpush2.bf16.msra.mxu0 0
        %1877 = vmatprep.subr.bf16.mxu0 0
        %1878 = vmatpush2.bf16.msra.mxu0 0
        %1879 = vmatprep.subr.bf16.mxu0 0
        %1880 = vmatpush2.bf16.msra.mxu0 0
        %1881 = vmatprep.subr.bf16.mxu0 0
        %1882 = vmatpush2.bf16.msra.mxu0 0
        %1883 = vmatprep.subr.bf16.mxu0 0
        %1884 = vmatpush2.bf16.msra.mxu0 0
        %1885 = vmatprep.subr.bf16.mxu0 0
        %1886 = vmatpush2.bf16.msra.mxu0 0
        %1887 = vmatprep.subr.bf16.mxu0 0
        %1888 = vmatpush2.bf16.msra.mxu0 0
        %1889 = vmatprep.subr.bf16.mxu0 0
        %1890 = vmatpush2.bf16.msra.mxu0 0
        %1891 = vmatprep.mubr.bf16.mxu0 0
        %1892 = vmatmul.mubr.bf16.gmra.mxu0 %v1857
        %v1893 = vpop.f32.mrf.mxu0
        %v1894 = vadd.f32 0.0, %v1893
        %v1895 = vpop.f32.mrf.mxu0
        %v1896 = vpop.f32.mrf.mxu0
        %v1897 = vadd.f32 0.0, %v1896
        %v1898 = vpop.f32.mrf.mxu0
        %1899 = vdwg.mxu0
        %1901 = vrot.lane.b32.xlu0 %v930, 96
        %v1902 = vpop.permute.xlu0 %1901
        %1904 = vrot.lane.b32.xlu0 %v938, 96
        %v1905 = vpop.permute.xlu0 %1904
        %v1907 = vsel %vm954, %v1902, 0
        %v1910 = vsel %vm954, %v1905, 0
        %1912 = vmatprep.subr.bf16.mxu0 0
        %1913 = vmatpush1.bf16.xpose.msra.mxu0 0
        %1914 = vmatprep.subr.bf16.mxu0 0
        %1915 = vmatpush1.bf16.xpose.msra.mxu0 0
        %1916 = vmatprep.subr.bf16.mxu0 0
        %1917 = vmatpush1.bf16.xpose.msra.mxu0 0
        %1918 = vmatprep.subr.bf16.mxu0 0
        %1919 = vmatpush1.bf16.xpose.msra.mxu0 0
        %1920 = vmatprep.subr.bf16.mxu0 0
        %1921 = vmatpush1.bf16.xpose.msra.mxu0 0
        %1922 = vmatprep.subr.bf16.mxu0 0
        %1923 = vmatpush1.bf16.xpose.msra.mxu0 0
        %1924 = vmatprep.subr.bf16.mxu0 0
        %1925 = vmatpush1.bf16.xpose.msra.mxu0 0
        %1926 = vmatprep.subr.bf16.mxu0 0
        %1927 = vmatpush1.bf16.xpose.msra.mxu0 %v1910
        %1928 = vmatprep.subr.bf16.mxu0 0
        %1929 = vmatpush2.bf16.xpose.msra.mxu0 0
        %1930 = vmatprep.subr.bf16.mxu0 0
        %1931 = vmatpush2.bf16.xpose.msra.mxu0 0
        %1932 = vmatprep.subr.bf16.mxu0 0
        %1933 = vmatpush2.bf16.xpose.msra.mxu0 0
        %1934 = vmatprep.subr.bf16.mxu0 0
        %1935 = vmatpush2.bf16.xpose.msra.mxu0 0
        %1936 = vmatprep.subr.bf16.mxu0 0
        %1937 = vmatpush2.bf16.xpose.msra.mxu0 0
        %1938 = vmatprep.subr.bf16.mxu0 0
        %1939 = vmatpush2.bf16.xpose.msra.mxu0 0
        %1940 = vmatprep.subr.bf16.mxu0 0
        %1941 = vmatpush2.bf16.xpose.msra.mxu0 0
        %1942 = vmatprep.subr.bf16.mxu0 0
        %1943 = vmatpush2.bf16.xpose.msra.mxu0 0
        %1944 = vmatprep.mubr.bf16.mxu0 0
        %1945 = vmatmul.mubr.bf16.gmra.mxu0 %v1907
        %v1946 = vpop.f32.mrf.mxu0
        %v1947 = vadd.f32 0.0, %v1946
        %v1948 = vpop.f32.mrf.mxu0
        %v1949 = vpop.f32.mrf.mxu0
        %v1950 = vadd.f32 0.0, %v1949
        %v1951 = vpop.f32.mrf.mxu0
        %1952 = vdwg.mxu0
        %1954 = vrot.lane.b32.xlu0 %v931, 96
        %v1955 = vpop.permute.xlu0 %1954
        %1957 = vrot.lane.b32.xlu0 %v939, 96
        %v1958 = vpop.permute.xlu0 %1957
        %v1960 = vsel %vm954, %v1955, 0
        %v1963 = vsel %vm954, %v1958, 0
        %1965 = vmatprep.subr.bf16.mxu0 0
        %1966 = vmatpush1.bf16.xpose.msra.mxu0 0
        %1967 = vmatprep.subr.bf16.mxu0 0
        %1968 = vmatpush1.bf16.xpose.msra.mxu0 0
        %1969 = vmatprep.subr.bf16.mxu0 0
        %1970 = vmatpush1.bf16.xpose.msra.mxu0 0
        %1971 = vmatprep.subr.bf16.mxu0 0
        %1972 = vmatpush1.bf16.xpose.msra.mxu0 0
        %1973 = vmatprep.subr.bf16.mxu0 0
        %1974 = vmatpush1.bf16.xpose.msra.mxu0 0
        %1975 = vmatprep.subr.bf16.mxu0 0
        %1976 = vmatpush1.bf16.xpose.msra.mxu0 0
        %1977 = vmatprep.subr.bf16.mxu0 0
        %1978 = vmatpush1.bf16.xpose.msra.mxu0 0
        %1979 = vmatprep.subr.bf16.mxu0 0
        %1980 = vmatpush1.bf16.xpose.msra.mxu0 %v1963
        %1981 = vmatprep.subr.bf16.mxu0 0
        %1982 = vmatpush2.bf16.xpose.msra.mxu0 0
        %1983 = vmatprep.subr.bf16.mxu0 0
        %1984 = vmatpush2.bf16.xpose.msra.mxu0 0
        %1985 = vmatprep.subr.bf16.mxu0 0
        %1986 = vmatpush2.bf16.xpose.msra.mxu0 0
        %1987 = vmatprep.subr.bf16.mxu0 0
        %1988 = vmatpush2.bf16.xpose.msra.mxu0 0
        %1989 = vmatprep.subr.bf16.mxu0 0
        %1990 = vmatpush2.bf16.xpose.msra.mxu0 0
        %1991 = vmatprep.subr.bf16.mxu0 0
        %1992 = vmatpush2.bf16.xpose.msra.mxu0 0
        %1993 = vmatprep.subr.bf16.mxu0 0
        %1994 = vmatpush2.bf16.xpose.msra.mxu0 0
        %1995 = vmatprep.subr.bf16.mxu0 0
        %1996 = vmatpush2.bf16.xpose.msra.mxu0 0
        %1997 = vmatprep.mubr.bf16.mxu0 0
        %1998 = vmatmul.mubr.bf16.gmra.mxu0 %v1960
        %v1999 = vpop.f32.mrf.mxu0
        %v2000 = vadd.f32 0.0, %v1999
        %v2001 = vpop.f32.mrf.mxu0
        %v2002 = vpop.f32.mrf.mxu0
        %v2003 = vadd.f32 0.0, %v2002
        %v2004 = vpop.f32.mrf.mxu0
        %2005 = vdwg.mxu0
        %2007 = vrot.lane.b32.xlu0 %v932, 96
        %v2008 = vpop.permute.xlu0 %2007
        %2010 = vrot.lane.b32.xlu0 %v940, 96
        %v2011 = vpop.permute.xlu0 %2010
        %v2013 = vsel %vm954, %v2008, 0
        %v2016 = vsel %vm954, %v2011, 0
        %2018 = vmatprep.subr.bf16.mxu0 0
        %2019 = vmatpush1.bf16.xpose.msra.mxu0 0
        %2020 = vmatprep.subr.bf16.mxu0 0
        %2021 = vmatpush1.bf16.xpose.msra.mxu0 0
        %2022 = vmatprep.subr.bf16.mxu0 0
        %2023 = vmatpush1.bf16.xpose.msra.mxu0 0
        %2024 = vmatprep.subr.bf16.mxu0 0
        %2025 = vmatpush1.bf16.xpose.msra.mxu0 0
        %2026 = vmatprep.subr.bf16.mxu0 0
        %2027 = vmatpush1.bf16.xpose.msra.mxu0 0
        %2028 = vmatprep.subr.bf16.mxu0 0
        %2029 = vmatpush1.bf16.xpose.msra.mxu0 0
        %2030 = vmatprep.subr.bf16.mxu0 0
        %2031 = vmatpush1.bf16.xpose.msra.mxu0 0
        %2032 = vmatprep.subr.bf16.mxu0 0
        %2033 = vmatpush1.bf16.xpose.msra.mxu0 %v2016
        %2034 = vmatprep.subr.bf16.mxu0 0
        %2035 = vmatpush2.bf16.xpose.msra.mxu0 0
        %2036 = vmatprep.subr.bf16.mxu0 0
        %2037 = vmatpush2.bf16.xpose.msra.mxu0 0
        %2038 = vmatprep.subr.bf16.mxu0 0
        %2039 = vmatpush2.bf16.xpose.msra.mxu0 0
        %2040 = vmatprep.subr.bf16.mxu0 0
        %2041 = vmatpush2.bf16.xpose.msra.mxu0 0
        %2042 = vmatprep.subr.bf16.mxu0 0
        %2043 = vmatpush2.bf16.xpose.msra.mxu0 0
        %2044 = vmatprep.subr.bf16.mxu0 0
        %2045 = vmatpush2.bf16.xpose.msra.mxu0 0
        %2046 = vmatprep.subr.bf16.mxu0 0
        %2047 = vmatpush2.bf16.xpose.msra.mxu0 0
        %2048 = vmatprep.subr.bf16.mxu0 0
        %2049 = vmatpush2.bf16.xpose.msra.mxu0 0
        %2050 = vmatprep.mubr.bf16.mxu0 0
        %2051 = vmatmul.mubr.bf16.gmra.mxu0 %v2013
        %v2052 = vpop.f32.mrf.mxu0
        %v2053 = vadd.f32 0.0, %v2052
        %v2054 = vpop.f32.mrf.mxu0
        %v2055 = vpop.f32.mrf.mxu0
        %v2056 = vadd.f32 0.0, %v2055
        %v2057 = vpop.f32.mrf.mxu0
        %2058 = vdwg.mxu0
        %2060 = vrot.lane.b32.xlu0 %v933, 96
        %v2061 = vpop.permute.xlu0 %2060
        %2063 = vrot.lane.b32.xlu0 %v941, 96
        %v2064 = vpop.permute.xlu0 %2063
        %v2066 = vsel %vm954, %v2061, 0
        %v2069 = vsel %vm954, %v2064, 0
        %2071 = vmatprep.subr.bf16.mxu0 0
        %2072 = vmatpush1.bf16.xpose.msra.mxu0 0
        %2073 = vmatprep.subr.bf16.mxu0 0
        %2074 = vmatpush1.bf16.xpose.msra.mxu0 0
        %2075 = vmatprep.subr.bf16.mxu0 0
        %2076 = vmatpush1.bf16.xpose.msra.mxu0 0
        %2077 = vmatprep.subr.bf16.mxu0 0
        %2078 = vmatpush1.bf16.xpose.msra.mxu0 0
        %2079 = vmatprep.subr.bf16.mxu0 0
        %2080 = vmatpush1.bf16.xpose.msra.mxu0 0
        %2081 = vmatprep.subr.bf16.mxu0 0
        %2082 = vmatpush1.bf16.xpose.msra.mxu0 0
        %2083 = vmatprep.subr.bf16.mxu0 0
        %2084 = vmatpush1.bf16.xpose.msra.mxu0 0
        %2085 = vmatprep.subr.bf16.mxu0 0
        %2086 = vmatpush1.bf16.xpose.msra.mxu0 %v2069
        %2087 = vmatprep.subr.bf16.mxu0 0
        %2088 = vmatpush2.bf16.xpose.msra.mxu0 0
        %2089 = vmatprep.subr.bf16.mxu0 0
        %2090 = vmatpush2.bf16.xpose.msra.mxu0 0
        %2091 = vmatprep.subr.bf16.mxu0 0
        %2092 = vmatpush2.bf16.xpose.msra.mxu0 0
        %2093 = vmatprep.subr.bf16.mxu0 0
        %2094 = vmatpush2.bf16.xpose.msra.mxu0 0
        %2095 = vmatprep.subr.bf16.mxu0 0
        %2096 = vmatpush2.bf16.xpose.msra.mxu0 0
        %2097 = vmatprep.subr.bf16.mxu0 0
        %2098 = vmatpush2.bf16.xpose.msra.mxu0 0
        %2099 = vmatprep.subr.bf16.mxu0 0
        %2100 = vmatpush2.bf16.xpose.msra.mxu0 0
        %2101 = vmatprep.subr.bf16.mxu0 0
        %2102 = vmatpush2.bf16.xpose.msra.mxu0 0
        %2103 = vmatprep.mubr.bf16.mxu0 0
        %2104 = vmatmul.mubr.bf16.gmra.mxu0 %v2066
        %v2105 = vpop.f32.mrf.mxu0
        %v2106 = vadd.f32 0.0, %v2105
        %v2107 = vpop.f32.mrf.mxu0
        %v2108 = vpop.f32.mrf.mxu0
        %v2109 = vadd.f32 0.0, %v2108
        %v2110 = vpop.f32.mrf.mxu0
        %2111 = vdwg.mxu0
        %2113 = vrot.lane.b32.xlu0 %v934, 96
        %v2114 = vpop.permute.xlu0 %2113
        %2116 = vrot.lane.b32.xlu0 %v942, 96
        %v2117 = vpop.permute.xlu0 %2116
        %v2119 = vsel %vm954, %v2114, 0
        %v2122 = vsel %vm954, %v2117, 0
        %2124 = vmatprep.subr.bf16.mxu0 0
        %2125 = vmatpush1.bf16.xpose.msra.mxu0 0
        %2126 = vmatprep.subr.bf16.mxu0 0
        %2127 = vmatpush1.bf16.xpose.msra.mxu0 0
        %2128 = vmatprep.subr.bf16.mxu0 0
        %2129 = vmatpush1.bf16.xpose.msra.mxu0 0
        %2130 = vmatprep.subr.bf16.mxu0 0
        %2131 = vmatpush1.bf16.xpose.msra.mxu0 0
        %2132 = vmatprep.subr.bf16.mxu0 0
        %2133 = vmatpush1.bf16.xpose.msra.mxu0 0
        %2134 = vmatprep.subr.bf16.mxu0 0
        %2135 = vmatpush1.bf16.xpose.msra.mxu0 0
        %2136 = vmatprep.subr.bf16.mxu0 0
        %2137 = vmatpush1.bf16.xpose.msra.mxu0 0
        %2138 = vmatprep.subr.bf16.mxu0 0
        %2139 = vmatpush1.bf16.xpose.msra.mxu0 %v2122
        %2140 = vmatprep.subr.bf16.mxu0 0
        %2141 = vmatpush2.bf16.xpose.msra.mxu0 0
        %2142 = vmatprep.subr.bf16.mxu0 0
        %2143 = vmatpush2.bf16.xpose.msra.mxu0 0
        %2144 = vmatprep.subr.bf16.mxu0 0
        %2145 = vmatpush2.bf16.xpose.msra.mxu0 0
        %2146 = vmatprep.subr.bf16.mxu0 0
        %2147 = vmatpush2.bf16.xpose.msra.mxu0 0
        %2148 = vmatprep.subr.bf16.mxu0 0
        %2149 = vmatpush2.bf16.xpose.msra.mxu0 0
        %2150 = vmatprep.subr.bf16.mxu0 0
        %2151 = vmatpush2.bf16.xpose.msra.mxu0 0
        %2152 = vmatprep.subr.bf16.mxu0 0
        %2153 = vmatpush2.bf16.xpose.msra.mxu0 0
        %2154 = vmatprep.subr.bf16.mxu0 0
        %2155 = vmatpush2.bf16.xpose.msra.mxu0 0
        %2156 = vmatprep.mubr.bf16.mxu0 0
        %2157 = vmatmul.mubr.bf16.gmra.mxu0 %v2119
        %v2158 = vpop.f32.mrf.mxu0
        %v2159 = vadd.f32 0.0, %v2158
        %v2160 = vpop.f32.mrf.mxu0
        %v2161 = vpop.f32.mrf.mxu0
        %v2162 = vadd.f32 0.0, %v2161
        %v2163 = vpop.f32.mrf.mxu0
        %2164 = vdwg.mxu0
        %2166 = vrot.lane.b32.xlu0 %v935, 96
        %v2167 = vpop.permute.xlu0 %2166
        %2169 = vrot.lane.b32.xlu0 %v943, 96
        %v2170 = vpop.permute.xlu0 %2169
        %v2172 = vsel %vm954, %v2167, 0
        %v2175 = vsel %vm954, %v2170, 0
        %2177 = vmatprep.subr.bf16.mxu0 0
        %2178 = vmatpush1.bf16.xpose.msra.mxu0 0
        %2179 = vmatprep.subr.bf16.mxu0 0
        %2180 = vmatpush1.bf16.xpose.msra.mxu0 0
        %2181 = vmatprep.subr.bf16.mxu0 0
        %2182 = vmatpush1.bf16.xpose.msra.mxu0 0
        %2183 = vmatprep.subr.bf16.mxu0 0
        %2184 = vmatpush1.bf16.xpose.msra.mxu0 0
        %2185 = vmatprep.subr.bf16.mxu0 0
        %2186 = vmatpush1.bf16.xpose.msra.mxu0 0
        %2187 = vmatprep.subr.bf16.mxu0 0
        %2188 = vmatpush1.bf16.xpose.msra.mxu0 0
        %2189 = vmatprep.subr.bf16.mxu0 0
        %2190 = vmatpush1.bf16.xpose.msra.mxu0 0
        %2191 = vmatprep.subr.bf16.mxu0 0
        %2192 = vmatpush1.bf16.xpose.msra.mxu0 %v2175
        %2193 = vmatprep.subr.bf16.mxu0 0
        %2194 = vmatpush2.bf16.xpose.msra.mxu0 0
        %2195 = vmatprep.subr.bf16.mxu0 0
        %2196 = vmatpush2.bf16.xpose.msra.mxu0 0
        %2197 = vmatprep.subr.bf16.mxu0 0
        %2198 = vmatpush2.bf16.xpose.msra.mxu0 0
        %2199 = vmatprep.subr.bf16.mxu0 0
        %2200 = vmatpush2.bf16.xpose.msra.mxu0 0
        %2201 = vmatprep.subr.bf16.mxu0 0
        %2202 = vmatpush2.bf16.xpose.msra.mxu0 0
        %2203 = vmatprep.subr.bf16.mxu0 0
        %2204 = vmatpush2.bf16.xpose.msra.mxu0 0
        %2205 = vmatprep.subr.bf16.mxu0 0
        %2206 = vmatpush2.bf16.xpose.msra.mxu0 0
        %2207 = vmatprep.subr.bf16.mxu0 0
        %2208 = vmatpush2.bf16.xpose.msra.mxu0 0
        %2209 = vmatprep.mubr.bf16.mxu0 0
        %2210 = vmatmul.mubr.bf16.gmra.mxu0 %v2172
        %v2211 = vpop.f32.mrf.mxu0
        %v2212 = vadd.f32 0.0, %v2211
        %v2213 = vpop.f32.mrf.mxu0
        %v2214 = vpop.f32.mrf.mxu0
        %v2215 = vadd.f32 0.0, %v2214
        %v2216 = vpop.f32.mrf.mxu0
        %2217 = vdwg.mxu0
        %2219 = vrot.lane.b32.xlu0 %v936, 96
        %v2220 = vpop.permute.xlu0 %2219
        %2222 = vrot.lane.b32.xlu0 %v944, 96
        %v2223 = vpop.permute.xlu0 %2222
        %v2225 = vsel %vm954, %v2220, 0
        %v2228 = vsel %vm954, %v2223, 0
        %2230 = vmatprep.subr.bf16.mxu0 0
        %2231 = vmatpush1.bf16.xpose.msra.mxu0 0
        %2232 = vmatprep.subr.bf16.mxu0 0
        %2233 = vmatpush1.bf16.xpose.msra.mxu0 0
        %2234 = vmatprep.subr.bf16.mxu0 0
        %2235 = vmatpush1.bf16.xpose.msra.mxu0 0
        %2236 = vmatprep.subr.bf16.mxu0 0
        %2237 = vmatpush1.bf16.xpose.msra.mxu0 0
        %2238 = vmatprep.subr.bf16.mxu0 0
        %2239 = vmatpush1.bf16.xpose.msra.mxu0 0
        %2240 = vmatprep.subr.bf16.mxu0 0
        %2241 = vmatpush1.bf16.xpose.msra.mxu0 0
        %2242 = vmatprep.subr.bf16.mxu0 0
        %2243 = vmatpush1.bf16.xpose.msra.mxu0 0
        %2244 = vmatprep.subr.bf16.mxu0 0
        %2245 = vmatpush1.bf16.xpose.msra.mxu0 %v2228
        %2246 = vmatprep.subr.bf16.mxu0 0
        %2247 = vmatpush2.bf16.xpose.msra.mxu0 0
        %2248 = vmatprep.subr.bf16.mxu0 0
        %2249 = vmatpush2.bf16.xpose.msra.mxu0 0
        %2250 = vmatprep.subr.bf16.mxu0 0
        %2251 = vmatpush2.bf16.xpose.msra.mxu0 0
        %2252 = vmatprep.subr.bf16.mxu0 0
        %2253 = vmatpush2.bf16.xpose.msra.mxu0 0
        %2254 = vmatprep.subr.bf16.mxu0 0
        %2255 = vmatpush2.bf16.xpose.msra.mxu0 0
        %2256 = vmatprep.subr.bf16.mxu0 0
        %2257 = vmatpush2.bf16.xpose.msra.mxu0 0
        %2258 = vmatprep.subr.bf16.mxu0 0
        %2259 = vmatpush2.bf16.xpose.msra.mxu0 0
        %2260 = vmatprep.subr.bf16.mxu0 0
        %2261 = vmatpush2.bf16.xpose.msra.mxu0 0
        %2262 = vmatprep.mubr.bf16.mxu0 0
        %2263 = vmatmul.mubr.bf16.gmra.mxu0 %v2225
        %v2264 = vpop.f32.mrf.mxu0
        %v2265 = vadd.f32 0.0, %v2264
        %v2266 = vpop.f32.mrf.mxu0
        %v2267 = vpop.f32.mrf.mxu0
        %v2268 = vadd.f32 0.0, %v2267
        %v2269 = vpop.f32.mrf.mxu0
        %2270 = vdwg.mxu0
        %2272 = vrot.lane.b32.xlu0 %v937, 96
        %v2273 = vpop.permute.xlu0 %2272
        %2275 = vrot.lane.b32.xlu0 %v945, 96
        %v2276 = vpop.permute.xlu0 %2275
        %v2278 = vsel %vm954, %v2273, 0
        %v2281 = vsel %vm954, %v2276, 0
        %2283 = vmatprep.subr.bf16.mxu0 0
        %2284 = vmatpush1.bf16.xpose.msra.mxu0 0
        %2285 = vmatprep.subr.bf16.mxu0 0
        %2286 = vmatpush1.bf16.xpose.msra.mxu0 0
        %2287 = vmatprep.subr.bf16.mxu0 0
        %2288 = vmatpush1.bf16.xpose.msra.mxu0 0
        %2289 = vmatprep.subr.bf16.mxu0 0
        %2290 = vmatpush1.bf16.xpose.msra.mxu0 0
        %2291 = vmatprep.subr.bf16.mxu0 0
        %2292 = vmatpush1.bf16.xpose.msra.mxu0 0
        %2293 = vmatprep.subr.bf16.mxu0 0
        %2294 = vmatpush1.bf16.xpose.msra.mxu0 0
        %2295 = vmatprep.subr.bf16.mxu0 0
        %2296 = vmatpush1.bf16.xpose.msra.mxu0 0
        %2297 = vmatprep.subr.bf16.mxu0 0
        %2298 = vmatpush1.bf16.xpose.msra.mxu0 %v2281
        %2299 = vmatprep.subr.bf16.mxu0 0
        %2300 = vmatpush2.bf16.xpose.msra.mxu0 0
        %2301 = vmatprep.subr.bf16.mxu0 0
        %2302 = vmatpush2.bf16.xpose.msra.mxu0 0
        %2303 = vmatprep.subr.bf16.mxu0 0
        %2304 = vmatpush2.bf16.xpose.msra.mxu0 0
        %2305 = vmatprep.subr.bf16.mxu0 0
        %2306 = vmatpush2.bf16.xpose.msra.mxu0 0
        %2307 = vmatprep.subr.bf16.mxu0 0
        %2308 = vmatpush2.bf16.xpose.msra.mxu0 0
        %2309 = vmatprep.subr.bf16.mxu0 0
        %2310 = vmatpush2.bf16.xpose.msra.mxu0 0
        %2311 = vmatprep.subr.bf16.mxu0 0
        %2312 = vmatpush2.bf16.xpose.msra.mxu0 0
        %2313 = vmatprep.subr.bf16.mxu0 0
        %2314 = vmatpush2.bf16.xpose.msra.mxu0 0
        %2315 = vmatprep.mubr.bf16.mxu0 0
        %2316 = vmatmul.mubr.bf16.gmra.mxu0 %v2278
        %v2317 = vpop.f32.mrf.mxu0
        %v2318 = vadd.f32 0.0, %v2317
        %v2319 = vpop.f32.mrf.mxu0
        %v2320 = vpop.f32.mrf.mxu0
        %v2321 = vadd.f32 0.0, %v2320
        %v2322 = vpop.f32.mrf.mxu0
        %2323 = vdwg.mxu0
        %v2324 = vmul.f32 %v1947, 0.17677669
        %v2325 = vmul.f32 %v1950, 0.17677669
        %v2326 = vmul.f32 %v2000, 0.17677669
        %v2327 = vmul.f32 %v2003, 0.17677669
        %v2328 = vmul.f32 %v2053, 0.17677669
        %v2329 = vmul.f32 %v2056, 0.17677669
        %v2330 = vmul.f32 %v2106, 0.17677669
        %v2331 = vmul.f32 %v2109, 0.17677669
        %v2332 = vmul.f32 %v2159, 0.17677669
        %v2333 = vmul.f32 %v2162, 0.17677669
        %v2334 = vmul.f32 %v2212, 0.17677669
        %v2335 = vmul.f32 %v2215, 0.17677669
        %v2336 = vmul.f32 %v2265, 0.17677669
        %v2337 = vmul.f32 %v2268, 0.17677669
        %v2338 = vmul.f32 %v2318, 0.17677669
        %v2339 = vmul.f32 %v2321, 0.17677669
        %v2340 = vadd.f32 %v2324, %v519
        %v2341 = vadd.f32 %v2325, %v520
        %v2342 = vadd.f32 %v2326, %v521
        %v2343 = vadd.f32 %v2327, %v522
        %v2344 = vadd.f32 %v2328, %v523
        %v2345 = vadd.f32 %v2329, %v524
        %v2346 = vadd.f32 %v2330, %v525
        %v2347 = vadd.f32 %v2331, %v526
        %v2348 = vadd.f32 %v2332, %v527
        %v2349 = vadd.f32 %v2333, %v528
        %v2350 = vadd.f32 %v2334, %v529
        %v2351 = vadd.f32 %v2335, %v530
        %v2352 = vadd.f32 %v2336, %v531
        %v2353 = vadd.f32 %v2337, %v532
        %v2354 = vadd.f32 %v2338, %v533
        %v2355 = vadd.f32 %v2339, %v534
        %v2356 = vsel %vm1363, %v2340, -inf
        %2357 = vmax.xlane.f32.xlu0 %v2356
        %v2358 = vpop.xlane.xlu0 %2357
        %v2359 = vsel %vm1363, %v2341, -inf
        %2360 = vmax.xlane.f32.xlu0 %v2359
        %v2361 = vpop.xlane.xlu0 %2360
        %v2362 = vsel %vm1363, %v2342, -inf
        %2363 = vmax.xlane.f32.xlu0 %v2362
        %v2364 = vpop.xlane.xlu0 %2363
        %v2365 = vsel %vm1363, %v2343, -inf
        %2366 = vmax.xlane.f32.xlu0 %v2365
        %v2367 = vpop.xlane.xlu0 %2366
        %v2368 = vsel %vm1363, %v2344, -inf
        %2369 = vmax.xlane.f32.xlu0 %v2368
        %v2370 = vpop.xlane.xlu0 %2369
        %v2371 = vsel %vm1363, %v2345, -inf
        %2372 = vmax.xlane.f32.xlu0 %v2371
        %v2373 = vpop.xlane.xlu0 %2372
        %v2374 = vsel %vm1363, %v2346, -inf
        %2375 = vmax.xlane.f32.xlu0 %v2374
        %v2376 = vpop.xlane.xlu0 %2375
        %v2377 = vsel %vm1363, %v2347, -inf
        %2378 = vmax.xlane.f32.xlu0 %v2377
        %v2379 = vpop.xlane.xlu0 %2378
        %v2380 = vsel %vm1363, %v2348, -inf
        %2381 = vmax.xlane.f32.xlu0 %v2380
        %v2382 = vpop.xlane.xlu0 %2381
        %v2383 = vsel %vm1363, %v2349, -inf
        %2384 = vmax.xlane.f32.xlu0 %v2383
        %v2385 = vpop.xlane.xlu0 %2384
        %v2386 = vsel %vm1363, %v2350, -inf
        %2387 = vmax.xlane.f32.xlu0 %v2386
        %v2388 = vpop.xlane.xlu0 %2387
        %v2389 = vsel %vm1363, %v2351, -inf
        %2390 = vmax.xlane.f32.xlu0 %v2389
        %v2391 = vpop.xlane.xlu0 %2390
        %v2392 = vsel %vm1363, %v2352, -inf
        %2393 = vmax.xlane.f32.xlu0 %v2392
        %v2394 = vpop.xlane.xlu0 %2393
        %v2395 = vsel %vm1363, %v2353, -inf
        %2396 = vmax.xlane.f32.xlu0 %v2395
        %v2397 = vpop.xlane.xlu0 %2396
        %v2398 = vsel %vm1363, %v2354, -inf
        %2399 = vmax.xlane.f32.xlu0 %v2398
        %v2400 = vpop.xlane.xlu0 %2399
        %v2401 = vsel %vm1363, %v2355, -inf
        %2402 = vmax.xlane.f32.xlu0 %v2401
        %v2403 = vpop.xlane.xlu0 %2402
        %v2404 = vsub.f32 %v2340, %v2358
        %v2405 = vsub.f32 %v2341, %v2361
        %v2406 = vsub.f32 %v2342, %v2364
        %v2407 = vsub.f32 %v2343, %v2367
        %v2408 = vsub.f32 %v2344, %v2370
        %v2409 = vsub.f32 %v2345, %v2373
        %v2410 = vsub.f32 %v2346, %v2376
        %v2411 = vsub.f32 %v2347, %v2379
        %v2412 = vsub.f32 %v2348, %v2382
        %v2413 = vsub.f32 %v2349, %v2385
        %v2414 = vsub.f32 %v2350, %v2388
        %v2415 = vsub.f32 %v2351, %v2391
        %v2416 = vsub.f32 %v2352, %v2394
        %v2417 = vsub.f32 %v2353, %v2397
        %v2418 = vsub.f32 %v2354, %v2400
        %v2419 = vsub.f32 %v2355, %v2403
        %v2420 = vmul.f32 %v2404, 1.442695
        %v2421 = vpow.pop %v2420
        %v2422 = vmul.f32 %v2405, 1.442695
        %v2423 = vpow.pop %v2422
        %v2424 = vmul.f32 %v2406, 1.442695
        %v2425 = vpow.pop %v2424
        %v2426 = vmul.f32 %v2407, 1.442695
        %v2427 = vpow.pop %v2426
        %v2428 = vmul.f32 %v2408, 1.442695
        %v2429 = vpow.pop %v2428
        %v2430 = vmul.f32 %v2409, 1.442695
        %v2431 = vpow.pop %v2430
        %v2432 = vmul.f32 %v2410, 1.442695
        %v2433 = vpow.pop %v2432
        %v2434 = vmul.f32 %v2411, 1.442695
        %v2435 = vpow.pop %v2434
        %v2436 = vmul.f32 %v2412, 1.442695
        %v2437 = vpow.pop %v2436
        %v2438 = vmul.f32 %v2413, 1.442695
        %v2439 = vpow.pop %v2438
        %v2440 = vmul.f32 %v2414, 1.442695
        %v2441 = vpow.pop %v2440
        %v2442 = vmul.f32 %v2415, 1.442695
        %v2443 = vpow.pop %v2442
        %v2444 = vmul.f32 %v2416, 1.442695
        %v2445 = vpow.pop %v2444
        %v2446 = vmul.f32 %v2417, 1.442695
        %v2447 = vpow.pop %v2446
        %v2448 = vmul.f32 %v2418, 1.442695
        %v2449 = vpow.pop %v2448
        %v2450 = vmul.f32 %v2419, 1.442695
        %v2451 = vpow.pop %v2450
        %v2452 = vsel %vm1363, %v2421, 0.0
        %2453 = vadd.xlane.f32.xlu0 %v2452
        %v2454 = vpop.xlane.xlu0 %2453
        %v2455 = vsel %vm1363, %v2423, 0.0
        %2456 = vadd.xlane.f32.xlu0 %v2455
        %v2457 = vpop.xlane.xlu0 %2456
        %v2458 = vsel %vm1363, %v2425, 0.0
        %2459 = vadd.xlane.f32.xlu0 %v2458
        %v2460 = vpop.xlane.xlu0 %2459
        %v2461 = vsel %vm1363, %v2427, 0.0
        %2462 = vadd.xlane.f32.xlu0 %v2461
        %v2463 = vpop.xlane.xlu0 %2462
        %v2464 = vsel %vm1363, %v2429, 0.0
        %2465 = vadd.xlane.f32.xlu0 %v2464
        %v2466 = vpop.xlane.xlu0 %2465
        %v2467 = vsel %vm1363, %v2431, 0.0
        %2468 = vadd.xlane.f32.xlu0 %v2467
        %v2469 = vpop.xlane.xlu0 %2468
        %v2470 = vsel %vm1363, %v2433, 0.0
        %2471 = vadd.xlane.f32.xlu0 %v2470
        %v2472 = vpop.xlane.xlu0 %2471
        %v2473 = vsel %vm1363, %v2435, 0.0
        %2474 = vadd.xlane.f32.xlu0 %v2473
        %v2475 = vpop.xlane.xlu0 %2474
        %v2476 = vsel %vm1363, %v2437, 0.0
        %2477 = vadd.xlane.f32.xlu0 %v2476
        %v2478 = vpop.xlane.xlu0 %2477
        %v2479 = vsel %vm1363, %v2439, 0.0
        %2480 = vadd.xlane.f32.xlu0 %v2479
        %v2481 = vpop.xlane.xlu0 %2480
        %v2482 = vsel %vm1363, %v2441, 0.0
        %2483 = vadd.xlane.f32.xlu0 %v2482
        %v2484 = vpop.xlane.xlu0 %2483
        %v2485 = vsel %vm1363, %v2443, 0.0
        %2486 = vadd.xlane.f32.xlu0 %v2485
        %v2487 = vpop.xlane.xlu0 %2486
        %v2488 = vsel %vm1363, %v2445, 0.0
        %2489 = vadd.xlane.f32.xlu0 %v2488
        %v2490 = vpop.xlane.xlu0 %2489
        %v2491 = vsel %vm1363, %v2447, 0.0
        %2492 = vadd.xlane.f32.xlu0 %v2491
        %v2493 = vpop.xlane.xlu0 %2492
        %v2494 = vsel %vm1363, %v2449, 0.0
        %2495 = vadd.xlane.f32.xlu0 %v2494
        %v2496 = vpop.xlane.xlu0 %2495
        %v2497 = vsel %vm1363, %v2451, 0.0
        %2498 = vadd.xlane.f32.xlu0 %v2497
        %v2499 = vpop.xlane.xlu0 %2498
        %v2500 = vrcp.pop %v2454
        %v2501 = vrcp.pop %v2457
        %v2502 = vrcp.pop %v2460
        %v2503 = vrcp.pop %v2463
        %v2504 = vrcp.pop %v2466
        %v2505 = vrcp.pop %v2469
        %v2506 = vrcp.pop %v2472
        %v2507 = vrcp.pop %v2475
        %v2508 = vrcp.pop %v2478
        %v2509 = vrcp.pop %v2481
        %v2510 = vrcp.pop %v2484
        %v2511 = vrcp.pop %v2487
        %v2512 = vrcp.pop %v2490
        %v2513 = vrcp.pop %v2493
        %v2514 = vrcp.pop %v2496
        %v2515 = vrcp.pop %v2499
        %v2516 = vmul.f32 %v2421, %v2500
        %v2517 = vmul.f32 %v2423, %v2501
        %v2518 = vmul.f32 %v2425, %v2502
        %v2519 = vmul.f32 %v2427, %v2503
        %v2520 = vmul.f32 %v2429, %v2504
        %v2521 = vmul.f32 %v2431, %v2505
        %v2522 = vmul.f32 %v2433, %v2506
        %v2523 = vmul.f32 %v2435, %v2507
        %v2524 = vmul.f32 %v2437, %v2508
        %v2525 = vmul.f32 %v2439, %v2509
        %v2526 = vmul.f32 %v2441, %v2510
        %v2527 = vmul.f32 %v2443, %v2511
        %v2528 = vmul.f32 %v2445, %v2512
        %v2529 = vmul.f32 %v2447, %v2513
        %v2530 = vmul.f32 %v2449, %v2514
        %v2531 = vmul.f32 %v2451, %v2515
        %v2532 = vpack.c.bf16 %v2517, %v2516
        %v2533 = vpack.c.bf16 %v2519, %v2518
        %v2534 = vpack.c.bf16 %v2521, %v2520
        %v2535 = vpack.c.bf16 %v2523, %v2522
        %v2536 = vpack.c.bf16 %v2525, %v2524
        %v2537 = vpack.c.bf16 %v2527, %v2526
        %v2538 = vpack.c.bf16 %v2529, %v2528
        %v2539 = vpack.c.bf16 %v2531, %v2530
        %2541 = vrot.lane.b32.xlu0 %v946, 96
        %v2542 = vpop.permute.xlu0 %2541
        %v2545 = vsel %vm1363, %v2532, 0
        %2547 = vmatprep.subr.bf16.mxu0 0
        %2548 = vmatpush1.bf16.msra.mxu0 0
        %2549 = vmatprep.subr.bf16.mxu0 0
        %2550 = vmatpush1.bf16.msra.mxu0 0
        %2551 = vmatprep.subr.bf16.mxu0 0
        %2552 = vmatpush1.bf16.msra.mxu0 0
        %2553 = vmatprep.subr.bf16.mxu0 0
        %2554 = vmatpush1.bf16.msra.mxu0 0
        %2555 = vmatprep.subr.bf16.mxu0 0
        %2556 = vmatpush1.bf16.msra.mxu0 0
        %2557 = vmatprep.subr.bf16.mxu0 0
        %2558 = vmatpush1.bf16.msra.mxu0 0
        %2559 = vmatprep.subr.bf16.mxu0 0
        %2560 = vmatpush1.bf16.msra.mxu0 0
        %2561 = vmatprep.subr.bf16.mxu0 0
        %2562 = vmatpush1.bf16.msra.mxu0 %v2542
        %2563 = vmatprep.subr.bf16.mxu0 0
        %2564 = vmatpush2.bf16.msra.mxu0 0
        %2565 = vmatprep.subr.bf16.mxu0 0
        %2566 = vmatpush2.bf16.msra.mxu0 0
        %2567 = vmatprep.subr.bf16.mxu0 0
        %2568 = vmatpush2.bf16.msra.mxu0 0
        %2569 = vmatprep.subr.bf16.mxu0 0
        %2570 = vmatpush2.bf16.msra.mxu0 0
        %2571 = vmatprep.subr.bf16.mxu0 0
        %2572 = vmatpush2.bf16.msra.mxu0 0
        %2573 = vmatprep.subr.bf16.mxu0 0
        %2574 = vmatpush2.bf16.msra.mxu0 0
        %2575 = vmatprep.subr.bf16.mxu0 0
        %2576 = vmatpush2.bf16.msra.mxu0 0
        %2577 = vmatprep.subr.bf16.mxu0 0
        %2578 = vmatpush2.bf16.msra.mxu0 0
        %2579 = vmatprep.mubr.bf16.mxu0 0
        %2580 = vmatmul.mubr.bf16.gmra.mxu0 %v2545
        %v2581 = vpop.f32.mrf.mxu0
        %v2582 = vadd.f32 0.0, %v2581
        %v2583 = vpop.f32.mrf.mxu0
        %v2584 = vpop.f32.mrf.mxu0
        %v2585 = vadd.f32 0.0, %v2584
        %v2586 = vpop.f32.mrf.mxu0
        %2587 = vdwg.mxu0
        %2589 = vrot.lane.b32.xlu0 %v947, 96
        %v2590 = vpop.permute.xlu0 %2589
        %v2593 = vsel %vm1363, %v2533, 0
        %2595 = vmatprep.subr.bf16.mxu0 0
        %2596 = vmatpush1.bf16.msra.mxu0 0
        %2597 = vmatprep.subr.bf16.mxu0 0
        %2598 = vmatpush1.bf16.msra.mxu0 0
        %2599 = vmatprep.subr.bf16.mxu0 0
        %2600 = vmatpush1.bf16.msra.mxu0 0
        %2601 = vmatprep.subr.bf16.mxu0 0
        %2602 = vmatpush1.bf16.msra.mxu0 0
        %2603 = vmatprep.subr.bf16.mxu0 0
        %2604 = vmatpush1.bf16.msra.mxu0 0
        %2605 = vmatprep.subr.bf16.mxu0 0
        %2606 = vmatpush1.bf16.msra.mxu0 0
        %2607 = vmatprep.subr.bf16.mxu0 0
        %2608 = vmatpush1.bf16.msra.mxu0 0
        %2609 = vmatprep.subr.bf16.mxu0 0
        %2610 = vmatpush1.bf16.msra.mxu0 %v2590
        %2611 = vmatprep.subr.bf16.mxu0 0
        %2612 = vmatpush2.bf16.msra.mxu0 0
        %2613 = vmatprep.subr.bf16.mxu0 0
        %2614 = vmatpush2.bf16.msra.mxu0 0
        %2615 = vmatprep.subr.bf16.mxu0 0
        %2616 = vmatpush2.bf16.msra.mxu0 0
        %2617 = vmatprep.subr.bf16.mxu0 0
        %2618 = vmatpush2.bf16.msra.mxu0 0
        %2619 = vmatprep.subr.bf16.mxu0 0
        %2620 = vmatpush2.bf16.msra.mxu0 0
        %2621 = vmatprep.subr.bf16.mxu0 0
        %2622 = vmatpush2.bf16.msra.mxu0 0
        %2623 = vmatprep.subr.bf16.mxu0 0
        %2624 = vmatpush2.bf16.msra.mxu0 0
        %2625 = vmatprep.subr.bf16.mxu0 0
        %2626 = vmatpush2.bf16.msra.mxu0 0
        %2627 = vmatprep.mubr.bf16.mxu0 0
        %2628 = vmatmul.mubr.bf16.gmra.mxu0 %v2593
        %v2629 = vpop.f32.mrf.mxu0
        %v2630 = vadd.f32 0.0, %v2629
        %v2631 = vpop.f32.mrf.mxu0
        %v2632 = vpop.f32.mrf.mxu0
        %v2633 = vadd.f32 0.0, %v2632
        %v2634 = vpop.f32.mrf.mxu0
        %2635 = vdwg.mxu0
        %2637 = vrot.lane.b32.xlu0 %v948, 96
        %v2638 = vpop.permute.xlu0 %2637
        %v2641 = vsel %vm1363, %v2534, 0
        %2643 = vmatprep.subr.bf16.mxu0 0
        %2644 = vmatpush1.bf16.msra.mxu0 0
        %2645 = vmatprep.subr.bf16.mxu0 0
        %2646 = vmatpush1.bf16.msra.mxu0 0
        %2647 = vmatprep.subr.bf16.mxu0 0
        %2648 = vmatpush1.bf16.msra.mxu0 0
        %2649 = vmatprep.subr.bf16.mxu0 0
        %2650 = vmatpush1.bf16.msra.mxu0 0
        %2651 = vmatprep.subr.bf16.mxu0 0
        %2652 = vmatpush1.bf16.msra.mxu0 0
        %2653 = vmatprep.subr.bf16.mxu0 0
        %2654 = vmatpush1.bf16.msra.mxu0 0
        %2655 = vmatprep.subr.bf16.mxu0 0
        %2656 = vmatpush1.bf16.msra.mxu0 0
        %2657 = vmatprep.subr.bf16.mxu0 0
        %2658 = vmatpush1.bf16.msra.mxu0 %v2638
        %2659 = vmatprep.subr.bf16.mxu0 0
        %2660 = vmatpush2.bf16.msra.mxu0 0
        %2661 = vmatprep.subr.bf16.mxu0 0
        %2662 = vmatpush2.bf16.msra.mxu0 0
        %2663 = vmatprep.subr.bf16.mxu0 0
        %2664 = vmatpush2.bf16.msra.mxu0 0
        %2665 = vmatprep.subr.bf16.mxu0 0
        %2666 = vmatpush2.bf16.msra.mxu0 0
        %2667 = vmatprep.subr.bf16.mxu0 0
        %2668 = vmatpush2.bf16.msra.mxu0 0
        %2669 = vmatprep.subr.bf16.mxu0 0
        %2670 = vmatpush2.bf16.msra.mxu0 0
        %2671 = vmatprep.subr.bf16.mxu0 0
        %2672 = vmatpush2.bf16.msra.mxu0 0
        %2673 = vmatprep.subr.bf16.mxu0 0
        %2674 = vmatpush2.bf16.msra.mxu0 0
        %2675 = vmatprep.mubr.bf16.mxu0 0
        %2676 = vmatmul.mubr.bf16.gmra.mxu0 %v2641
        %v2677 = vpop.f32.mrf.mxu0
        %v2678 = vadd.f32 0.0, %v2677
        %v2679 = vpop.f32.mrf.mxu0
        %v2680 = vpop.f32.mrf.mxu0
        %v2681 = vadd.f32 0.0, %v2680
        %v2682 = vpop.f32.mrf.mxu0
        %2683 = vdwg.mxu0
        %2685 = vrot.lane.b32.xlu0 %v949, 96
        %v2686 = vpop.permute.xlu0 %2685
        %v2689 = vsel %vm1363, %v2535, 0
        %2691 = vmatprep.subr.bf16.mxu0 0
        %2692 = vmatpush1.bf16.msra.mxu0 0
        %2693 = vmatprep.subr.bf16.mxu0 0
        %2694 = vmatpush1.bf16.msra.mxu0 0
        %2695 = vmatprep.subr.bf16.mxu0 0
        %2696 = vmatpush1.bf16.msra.mxu0 0
        %2697 = vmatprep.subr.bf16.mxu0 0
        %2698 = vmatpush1.bf16.msra.mxu0 0
        %2699 = vmatprep.subr.bf16.mxu0 0
        %2700 = vmatpush1.bf16.msra.mxu0 0
        %2701 = vmatprep.subr.bf16.mxu0 0
        %2702 = vmatpush1.bf16.msra.mxu0 0
        %2703 = vmatprep.subr.bf16.mxu0 0
        %2704 = vmatpush1.bf16.msra.mxu0 0
        %2705 = vmatprep.subr.bf16.mxu0 0
        %2706 = vmatpush1.bf16.msra.mxu0 %v2686
        %2707 = vmatprep.subr.bf16.mxu0 0
        %2708 = vmatpush2.bf16.msra.mxu0 0
        %2709 = vmatprep.subr.bf16.mxu0 0
        %2710 = vmatpush2.bf16.msra.mxu0 0
        %2711 = vmatprep.subr.bf16.mxu0 0
        %2712 = vmatpush2.bf16.msra.mxu0 0
        %2713 = vmatprep.subr.bf16.mxu0 0
        %2714 = vmatpush2.bf16.msra.mxu0 0
        %2715 = vmatprep.subr.bf16.mxu0 0
        %2716 = vmatpush2.bf16.msra.mxu0 0
        %2717 = vmatprep.subr.bf16.mxu0 0
        %2718 = vmatpush2.bf16.msra.mxu0 0
        %2719 = vmatprep.subr.bf16.mxu0 0
        %2720 = vmatpush2.bf16.msra.mxu0 0
        %2721 = vmatprep.subr.bf16.mxu0 0
        %2722 = vmatpush2.bf16.msra.mxu0 0
        %2723 = vmatprep.mubr.bf16.mxu0 0
        %2724 = vmatmul.mubr.bf16.gmra.mxu0 %v2689
        %v2725 = vpop.f32.mrf.mxu0
        %v2726 = vadd.f32 0.0, %v2725
        %v2727 = vpop.f32.mrf.mxu0
        %v2728 = vpop.f32.mrf.mxu0
        %v2729 = vadd.f32 0.0, %v2728
        %v2730 = vpop.f32.mrf.mxu0
        %2731 = vdwg.mxu0
        %2733 = vrot.lane.b32.xlu0 %v950, 96
        %v2734 = vpop.permute.xlu0 %2733
        %v2737 = vsel %vm1363, %v2536, 0
        %2739 = vmatprep.subr.bf16.mxu0 0
        %2740 = vmatpush1.bf16.msra.mxu0 0
        %2741 = vmatprep.subr.bf16.mxu0 0
        %2742 = vmatpush1.bf16.msra.mxu0 0
        %2743 = vmatprep.subr.bf16.mxu0 0
        %2744 = vmatpush1.bf16.msra.mxu0 0
        %2745 = vmatprep.subr.bf16.mxu0 0
        %2746 = vmatpush1.bf16.msra.mxu0 0
        %2747 = vmatprep.subr.bf16.mxu0 0
        %2748 = vmatpush1.bf16.msra.mxu0 0
        %2749 = vmatprep.subr.bf16.mxu0 0
        %2750 = vmatpush1.bf16.msra.mxu0 0
        %2751 = vmatprep.subr.bf16.mxu0 0
        %2752 = vmatpush1.bf16.msra.mxu0 0
        %2753 = vmatprep.subr.bf16.mxu0 0
        %2754 = vmatpush1.bf16.msra.mxu0 %v2734
        %2755 = vmatprep.subr.bf16.mxu0 0
        %2756 = vmatpush2.bf16.msra.mxu0 0
        %2757 = vmatprep.subr.bf16.mxu0 0
        %2758 = vmatpush2.bf16.msra.mxu0 0
        %2759 = vmatprep.subr.bf16.mxu0 0
        %2760 = vmatpush2.bf16.msra.mxu0 0
        %2761 = vmatprep.subr.bf16.mxu0 0
        %2762 = vmatpush2.bf16.msra.mxu0 0
        %2763 = vmatprep.subr.bf16.mxu0 0
        %2764 = vmatpush2.bf16.msra.mxu0 0
        %2765 = vmatprep.subr.bf16.mxu0 0
        %2766 = vmatpush2.bf16.msra.mxu0 0
        %2767 = vmatprep.subr.bf16.mxu0 0
        %2768 = vmatpush2.bf16.msra.mxu0 0
        %2769 = vmatprep.subr.bf16.mxu0 0
        %2770 = vmatpush2.bf16.msra.mxu0 0
        %2771 = vmatprep.mubr.bf16.mxu0 0
        %2772 = vmatmul.mubr.bf16.gmra.mxu0 %v2737
        %v2773 = vpop.f32.mrf.mxu0
        %v2774 = vadd.f32 0.0, %v2773
        %v2775 = vpop.f32.mrf.mxu0
        %v2776 = vpop.f32.mrf.mxu0
        %v2777 = vadd.f32 0.0, %v2776
        %v2778 = vpop.f32.mrf.mxu0
        %2779 = vdwg.mxu0
        %2781 = vrot.lane.b32.xlu0 %v951, 96
        %v2782 = vpop.permute.xlu0 %2781
        %v2785 = vsel %vm1363, %v2537, 0
        %2787 = vmatprep.subr.bf16.mxu0 0
        %2788 = vmatpush1.bf16.msra.mxu0 0
        %2789 = vmatprep.subr.bf16.mxu0 0
        %2790 = vmatpush1.bf16.msra.mxu0 0
        %2791 = vmatprep.subr.bf16.mxu0 0
        %2792 = vmatpush1.bf16.msra.mxu0 0
        %2793 = vmatprep.subr.bf16.mxu0 0
        %2794 = vmatpush1.bf16.msra.mxu0 0
        %2795 = vmatprep.subr.bf16.mxu0 0
        %2796 = vmatpush1.bf16.msra.mxu0 0
        %2797 = vmatprep.subr.bf16.mxu0 0
        %2798 = vmatpush1.bf16.msra.mxu0 0
        %2799 = vmatprep.subr.bf16.mxu0 0
        %2800 = vmatpush1.bf16.msra.mxu0 0
        %2801 = vmatprep.subr.bf16.mxu0 0
        %2802 = vmatpush1.bf16.msra.mxu0 %v2782
        %2803 = vmatprep.subr.bf16.mxu0 0
        %2804 = vmatpush2.bf16.msra.mxu0 0
        %2805 = vmatprep.subr.bf16.mxu0 0
        %2806 = vmatpush2.bf16.msra.mxu0 0
        %2807 = vmatprep.subr.bf16.mxu0 0
        %2808 = vmatpush2.bf16.msra.mxu0 0
        %2809 = vmatprep.subr.bf16.mxu0 0
        %2810 = vmatpush2.bf16.msra.mxu0 0
        %2811 = vmatprep.subr.bf16.mxu0 0
        %2812 = vmatpush2.bf16.msra.mxu0 0
        %2813 = vmatprep.subr.bf16.mxu0 0
        %2814 = vmatpush2.bf16.msra.mxu0 0
        %2815 = vmatprep.subr.bf16.mxu0 0
        %2816 = vmatpush2.bf16.msra.mxu0 0
        %2817 = vmatprep.subr.bf16.mxu0 0
        %2818 = vmatpush2.bf16.msra.mxu0 0
        %2819 = vmatprep.mubr.bf16.mxu0 0
        %2820 = vmatmul.mubr.bf16.gmra.mxu0 %v2785
        %v2821 = vpop.f32.mrf.mxu0
        %v2822 = vadd.f32 0.0, %v2821
        %v2823 = vpop.f32.mrf.mxu0
        %v2824 = vpop.f32.mrf.mxu0
        %v2825 = vadd.f32 0.0, %v2824
        %v2826 = vpop.f32.mrf.mxu0
        %2827 = vdwg.mxu0
        %2829 = vrot.lane.b32.xlu0 %v952, 96
        %v2830 = vpop.permute.xlu0 %2829
        %v2833 = vsel %vm1363, %v2538, 0
        %2835 = vmatprep.subr.bf16.mxu0 0
        %2836 = vmatpush1.bf16.msra.mxu0 0
        %2837 = vmatprep.subr.bf16.mxu0 0
        %2838 = vmatpush1.bf16.msra.mxu0 0
        %2839 = vmatprep.subr.bf16.mxu0 0
        %2840 = vmatpush1.bf16.msra.mxu0 0
        %2841 = vmatprep.subr.bf16.mxu0 0
        %2842 = vmatpush1.bf16.msra.mxu0 0
        %2843 = vmatprep.subr.bf16.mxu0 0
        %2844 = vmatpush1.bf16.msra.mxu0 0
        %2845 = vmatprep.subr.bf16.mxu0 0
        %2846 = vmatpush1.bf16.msra.mxu0 0
        %2847 = vmatprep.subr.bf16.mxu0 0
        %2848 = vmatpush1.bf16.msra.mxu0 0
        %2849 = vmatprep.subr.bf16.mxu0 0
        %2850 = vmatpush1.bf16.msra.mxu0 %v2830
        %2851 = vmatprep.subr.bf16.mxu0 0
        %2852 = vmatpush2.bf16.msra.mxu0 0
        %2853 = vmatprep.subr.bf16.mxu0 0
        %2854 = vmatpush2.bf16.msra.mxu0 0
        %2855 = vmatprep.subr.bf16.mxu0 0
        %2856 = vmatpush2.bf16.msra.mxu0 0
        %2857 = vmatprep.subr.bf16.mxu0 0
        %2858 = vmatpush2.bf16.msra.mxu0 0
        %2859 = vmatprep.subr.bf16.mxu0 0
        %2860 = vmatpush2.bf16.msra.mxu0 0
        %2861 = vmatprep.subr.bf16.mxu0 0
        %2862 = vmatpush2.bf16.msra.mxu0 0
        %2863 = vmatprep.subr.bf16.mxu0 0
        %2864 = vmatpush2.bf16.msra.mxu0 0
        %2865 = vmatprep.subr.bf16.mxu0 0
        %2866 = vmatpush2.bf16.msra.mxu0 0
        %2867 = vmatprep.mubr.bf16.mxu0 0
        %2868 = vmatmul.mubr.bf16.gmra.mxu0 %v2833
        %v2869 = vpop.f32.mrf.mxu0
        %v2870 = vadd.f32 0.0, %v2869
        %v2871 = vpop.f32.mrf.mxu0
        %v2872 = vpop.f32.mrf.mxu0
        %v2873 = vadd.f32 0.0, %v2872
        %v2874 = vpop.f32.mrf.mxu0
        %2875 = vdwg.mxu0
        %2877 = vrot.lane.b32.xlu0 %v953, 96
        %v2878 = vpop.permute.xlu0 %2877
        %v2881 = vsel %vm1363, %v2539, 0
        %2883 = vmatprep.subr.bf16.mxu0 0
        %2884 = vmatpush1.bf16.msra.mxu0 0
        %2885 = vmatprep.subr.bf16.mxu0 0
        %2886 = vmatpush1.bf16.msra.mxu0 0
        %2887 = vmatprep.subr.bf16.mxu0 0
        %2888 = vmatpush1.bf16.msra.mxu0 0
        %2889 = vmatprep.subr.bf16.mxu0 0
        %2890 = vmatpush1.bf16.msra.mxu0 0
        %2891 = vmatprep.subr.bf16.mxu0 0
        %2892 = vmatpush1.bf16.msra.mxu0 0
        %2893 = vmatprep.subr.bf16.mxu0 0
        %2894 = vmatpush1.bf16.msra.mxu0 0
        %2895 = vmatprep.subr.bf16.mxu0 0
        %2896 = vmatpush1.bf16.msra.mxu0 0
        %2897 = vmatprep.subr.bf16.mxu0 0
        %2898 = vmatpush1.bf16.msra.mxu0 %v2878
        %2899 = vmatprep.subr.bf16.mxu0 0
        %2900 = vmatpush2.bf16.msra.mxu0 0
        %2901 = vmatprep.subr.bf16.mxu0 0
        %2902 = vmatpush2.bf16.msra.mxu0 0
        %2903 = vmatprep.subr.bf16.mxu0 0
        %2904 = vmatpush2.bf16.msra.mxu0 0
        %2905 = vmatprep.subr.bf16.mxu0 0
        %2906 = vmatpush2.bf16.msra.mxu0 0
        %2907 = vmatprep.subr.bf16.mxu0 0
        %2908 = vmatpush2.bf16.msra.mxu0 0
        %2909 = vmatprep.subr.bf16.mxu0 0
        %2910 = vmatpush2.bf16.msra.mxu0 0
        %2911 = vmatprep.subr.bf16.mxu0 0
        %2912 = vmatpush2.bf16.msra.mxu0 0
        %2913 = vmatprep.subr.bf16.mxu0 0
        %2914 = vmatpush2.bf16.msra.mxu0 0
        %2915 = vmatprep.mubr.bf16.mxu0 0
        %2916 = vmatmul.mubr.bf16.gmra.mxu0 %v2881
        %v2917 = vpop.f32.mrf.mxu0
        %v2918 = vadd.f32 0.0, %v2917
        %v2919 = vpop.f32.mrf.mxu0
        %v2920 = vpop.f32.mrf.mxu0
        %v2921 = vadd.f32 0.0, %v2920
        %v2922 = vpop.f32.mrf.mxu0
        %2923 = vdwg.mxu0
        %2924 = vrot.lane.b32.xlu0 %v930, 64
        %v2925 = vpop.permute.xlu0 %2924
        %2926 = vrot.lane.b32.xlu0 %v938, 64
        %v2927 = vpop.permute.xlu0 %2926
        %v2929 = vsel %vm954, %v2925, 0
        %v2932 = vsel %vm954, %v2927, 0
        %2934 = vmatprep.subr.bf16.mxu0 0
        %2935 = vmatpush1.bf16.xpose.msra.mxu0 0
        %2936 = vmatprep.subr.bf16.mxu0 0
        %2937 = vmatpush1.bf16.xpose.msra.mxu0 0
        %2938 = vmatprep.subr.bf16.mxu0 0
        %2939 = vmatpush1.bf16.xpose.msra.mxu0 0
        %2940 = vmatprep.subr.bf16.mxu0 0
        %2941 = vmatpush1.bf16.xpose.msra.mxu0 0
        %2942 = vmatprep.subr.bf16.mxu0 0
        %2943 = vmatpush1.bf16.xpose.msra.mxu0 0
        %2944 = vmatprep.subr.bf16.mxu0 0
        %2945 = vmatpush1.bf16.xpose.msra.mxu0 0
        %2946 = vmatprep.subr.bf16.mxu0 0
        %2947 = vmatpush1.bf16.xpose.msra.mxu0 0
        %2948 = vmatprep.subr.bf16.mxu0 0
        %2949 = vmatpush1.bf16.xpose.msra.mxu0 %v2932
        %2950 = vmatprep.subr.bf16.mxu0 0
        %2951 = vmatpush2.bf16.xpose.msra.mxu0 0
        %2952 = vmatprep.subr.bf16.mxu0 0
        %2953 = vmatpush2.bf16.xpose.msra.mxu0 0
        %2954 = vmatprep.subr.bf16.mxu0 0
        %2955 = vmatpush2.bf16.xpose.msra.mxu0 0
        %2956 = vmatprep.subr.bf16.mxu0 0
        %2957 = vmatpush2.bf16.xpose.msra.mxu0 0
        %2958 = vmatprep.subr.bf16.mxu0 0
        %2959 = vmatpush2.bf16.xpose.msra.mxu0 0
        %2960 = vmatprep.subr.bf16.mxu0 0
        %2961 = vmatpush2.bf16.xpose.msra.mxu0 0
        %2962 = vmatprep.subr.bf16.mxu0 0
        %2963 = vmatpush2.bf16.xpose.msra.mxu0 0
        %2964 = vmatprep.subr.bf16.mxu0 0
        %2965 = vmatpush2.bf16.xpose.msra.mxu0 0
        %2966 = vmatprep.mubr.bf16.mxu0 0
        %2967 = vmatmul.mubr.bf16.gmra.mxu0 %v2929
        %v2968 = vpop.f32.mrf.mxu0
        %v2969 = vadd.f32 0.0, %v2968
        %v2970 = vpop.f32.mrf.mxu0
        %v2971 = vpop.f32.mrf.mxu0
        %v2972 = vadd.f32 0.0, %v2971
        %v2973 = vpop.f32.mrf.mxu0
        %2974 = vdwg.mxu0
        %2975 = vrot.lane.b32.xlu0 %v931, 64
        %v2976 = vpop.permute.xlu0 %2975
        %2977 = vrot.lane.b32.xlu0 %v939, 64
        %v2978 = vpop.permute.xlu0 %2977
        %v2980 = vsel %vm954, %v2976, 0
        %v2983 = vsel %vm954, %v2978, 0
        %2985 = vmatprep.subr.bf16.mxu0 0
        %2986 = vmatpush1.bf16.xpose.msra.mxu0 0
        %2987 = vmatprep.subr.bf16.mxu0 0
        %2988 = vmatpush1.bf16.xpose.msra.mxu0 0
        %2989 = vmatprep.subr.bf16.mxu0 0
        %2990 = vmatpush1.bf16.xpose.msra.mxu0 0
        %2991 = vmatprep.subr.bf16.mxu0 0
        %2992 = vmatpush1.bf16.xpose.msra.mxu0 0
        %2993 = vmatprep.subr.bf16.mxu0 0
        %2994 = vmatpush1.bf16.xpose.msra.mxu0 0
        %2995 = vmatprep.subr.bf16.mxu0 0
        %2996 = vmatpush1.bf16.xpose.msra.mxu0 0
        %2997 = vmatprep.subr.bf16.mxu0 0
        %2998 = vmatpush1.bf16.xpose.msra.mxu0 0
        %2999 = vmatprep.subr.bf16.mxu0 0
        %3000 = vmatpush1.bf16.xpose.msra.mxu0 %v2983
        %3001 = vmatprep.subr.bf16.mxu0 0
        %3002 = vmatpush2.bf16.xpose.msra.mxu0 0
        %3003 = vmatprep.subr.bf16.mxu0 0
        %3004 = vmatpush2.bf16.xpose.msra.mxu0 0
        %3005 = vmatprep.subr.bf16.mxu0 0
        %3006 = vmatpush2.bf16.xpose.msra.mxu0 0
        %3007 = vmatprep.subr.bf16.mxu0 0
        %3008 = vmatpush2.bf16.xpose.msra.mxu0 0
        %3009 = vmatprep.subr.bf16.mxu0 0
        %3010 = vmatpush2.bf16.xpose.msra.mxu0 0
        %3011 = vmatprep.subr.bf16.mxu0 0
        %3012 = vmatpush2.bf16.xpose.msra.mxu0 0
        %3013 = vmatprep.subr.bf16.mxu0 0
        %3014 = vmatpush2.bf16.xpose.msra.mxu0 0
        %3015 = vmatprep.subr.bf16.mxu0 0
        %3016 = vmatpush2.bf16.xpose.msra.mxu0 0
        %3017 = vmatprep.mubr.bf16.mxu0 0
        %3018 = vmatmul.mubr.bf16.gmra.mxu0 %v2980
        %v3019 = vpop.f32.mrf.mxu0
        %v3020 = vadd.f32 0.0, %v3019
        %v3021 = vpop.f32.mrf.mxu0
        %v3022 = vpop.f32.mrf.mxu0
        %v3023 = vadd.f32 0.0, %v3022
        %v3024 = vpop.f32.mrf.mxu0
        %3025 = vdwg.mxu0
        %3026 = vrot.lane.b32.xlu0 %v932, 64
        %v3027 = vpop.permute.xlu0 %3026
        %3028 = vrot.lane.b32.xlu0 %v940, 64
        %v3029 = vpop.permute.xlu0 %3028
        %v3031 = vsel %vm954, %v3027, 0
        %v3034 = vsel %vm954, %v3029, 0
        %3036 = vmatprep.subr.bf16.mxu0 0
        %3037 = vmatpush1.bf16.xpose.msra.mxu0 0
        %3038 = vmatprep.subr.bf16.mxu0 0
        %3039 = vmatpush1.bf16.xpose.msra.mxu0 0
        %3040 = vmatprep.subr.bf16.mxu0 0
        %3041 = vmatpush1.bf16.xpose.msra.mxu0 0
        %3042 = vmatprep.subr.bf16.mxu0 0
        %3043 = vmatpush1.bf16.xpose.msra.mxu0 0
        %3044 = vmatprep.subr.bf16.mxu0 0
        %3045 = vmatpush1.bf16.xpose.msra.mxu0 0
        %3046 = vmatprep.subr.bf16.mxu0 0
        %3047 = vmatpush1.bf16.xpose.msra.mxu0 0
        %3048 = vmatprep.subr.bf16.mxu0 0
        %3049 = vmatpush1.bf16.xpose.msra.mxu0 0
        %3050 = vmatprep.subr.bf16.mxu0 0
        %3051 = vmatpush1.bf16.xpose.msra.mxu0 %v3034
        %3052 = vmatprep.subr.bf16.mxu0 0
        %3053 = vmatpush2.bf16.xpose.msra.mxu0 0
        %3054 = vmatprep.subr.bf16.mxu0 0
        %3055 = vmatpush2.bf16.xpose.msra.mxu0 0
        %3056 = vmatprep.subr.bf16.mxu0 0
        %3057 = vmatpush2.bf16.xpose.msra.mxu0 0
        %3058 = vmatprep.subr.bf16.mxu0 0
        %3059 = vmatpush2.bf16.xpose.msra.mxu0 0
        %3060 = vmatprep.subr.bf16.mxu0 0
        %3061 = vmatpush2.bf16.xpose.msra.mxu0 0
        %3062 = vmatprep.subr.bf16.mxu0 0
        %3063 = vmatpush2.bf16.xpose.msra.mxu0 0
        %3064 = vmatprep.subr.bf16.mxu0 0
        %3065 = vmatpush2.bf16.xpose.msra.mxu0 0
        %3066 = vmatprep.subr.bf16.mxu0 0
        %3067 = vmatpush2.bf16.xpose.msra.mxu0 0
        %3068 = vmatprep.mubr.bf16.mxu0 0
        %3069 = vmatmul.mubr.bf16.gmra.mxu0 %v3031
        %v3070 = vpop.f32.mrf.mxu0
        %v3071 = vadd.f32 0.0, %v3070
        %v3072 = vpop.f32.mrf.mxu0
        %v3073 = vpop.f32.mrf.mxu0
        %v3074 = vadd.f32 0.0, %v3073
        %v3075 = vpop.f32.mrf.mxu0
        %3076 = vdwg.mxu0
        %3077 = vrot.lane.b32.xlu0 %v933, 64
        %v3078 = vpop.permute.xlu0 %3077
        %3079 = vrot.lane.b32.xlu0 %v941, 64
        %v3080 = vpop.permute.xlu0 %3079
        %v3082 = vsel %vm954, %v3078, 0
        %v3085 = vsel %vm954, %v3080, 0
        %3087 = vmatprep.subr.bf16.mxu0 0
        %3088 = vmatpush1.bf16.xpose.msra.mxu0 0
        %3089 = vmatprep.subr.bf16.mxu0 0
        %3090 = vmatpush1.bf16.xpose.msra.mxu0 0
        %3091 = vmatprep.subr.bf16.mxu0 0
        %3092 = vmatpush1.bf16.xpose.msra.mxu0 0
        %3093 = vmatprep.subr.bf16.mxu0 0
        %3094 = vmatpush1.bf16.xpose.msra.mxu0 0
        %3095 = vmatprep.subr.bf16.mxu0 0
        %3096 = vmatpush1.bf16.xpose.msra.mxu0 0
        %3097 = vmatprep.subr.bf16.mxu0 0
        %3098 = vmatpush1.bf16.xpose.msra.mxu0 0
        %3099 = vmatprep.subr.bf16.mxu0 0
        %3100 = vmatpush1.bf16.xpose.msra.mxu0 0
        %3101 = vmatprep.subr.bf16.mxu0 0
        %3102 = vmatpush1.bf16.xpose.msra.mxu0 %v3085
        %3103 = vmatprep.subr.bf16.mxu0 0
        %3104 = vmatpush2.bf16.xpose.msra.mxu0 0
        %3105 = vmatprep.subr.bf16.mxu0 0
        %3106 = vmatpush2.bf16.xpose.msra.mxu0 0
        %3107 = vmatprep.subr.bf16.mxu0 0
        %3108 = vmatpush2.bf16.xpose.msra.mxu0 0
        %3109 = vmatprep.subr.bf16.mxu0 0
        %3110 = vmatpush2.bf16.xpose.msra.mxu0 0
        %3111 = vmatprep.subr.bf16.mxu0 0
        %3112 = vmatpush2.bf16.xpose.msra.mxu0 0
        %3113 = vmatprep.subr.bf16.mxu0 0
        %3114 = vmatpush2.bf16.xpose.msra.mxu0 0
        %3115 = vmatprep.subr.bf16.mxu0 0
        %3116 = vmatpush2.bf16.xpose.msra.mxu0 0
        %3117 = vmatprep.subr.bf16.mxu0 0
        %3118 = vmatpush2.bf16.xpose.msra.mxu0 0
        %3119 = vmatprep.mubr.bf16.mxu0 0
        %3120 = vmatmul.mubr.bf16.gmra.mxu0 %v3082
        %v3121 = vpop.f32.mrf.mxu0
        %v3122 = vadd.f32 0.0, %v3121
        %v3123 = vpop.f32.mrf.mxu0
        %v3124 = vpop.f32.mrf.mxu0
        %v3125 = vadd.f32 0.0, %v3124
        %v3126 = vpop.f32.mrf.mxu0
        %3127 = vdwg.mxu0
        %3128 = vrot.lane.b32.xlu0 %v934, 64
        %v3129 = vpop.permute.xlu0 %3128
        %3130 = vrot.lane.b32.xlu0 %v942, 64
        %v3131 = vpop.permute.xlu0 %3130
        %v3133 = vsel %vm954, %v3129, 0
        %v3136 = vsel %vm954, %v3131, 0
        %3138 = vmatprep.subr.bf16.mxu0 0
        %3139 = vmatpush1.bf16.xpose.msra.mxu0 0
        %3140 = vmatprep.subr.bf16.mxu0 0
        %3141 = vmatpush1.bf16.xpose.msra.mxu0 0
        %3142 = vmatprep.subr.bf16.mxu0 0
        %3143 = vmatpush1.bf16.xpose.msra.mxu0 0
        %3144 = vmatprep.subr.bf16.mxu0 0
        %3145 = vmatpush1.bf16.xpose.msra.mxu0 0
        %3146 = vmatprep.subr.bf16.mxu0 0
        %3147 = vmatpush1.bf16.xpose.msra.mxu0 0
        %3148 = vmatprep.subr.bf16.mxu0 0
        %3149 = vmatpush1.bf16.xpose.msra.mxu0 0
        %3150 = vmatprep.subr.bf16.mxu0 0
        %3151 = vmatpush1.bf16.xpose.msra.mxu0 0
        %3152 = vmatprep.subr.bf16.mxu0 0
        %3153 = vmatpush1.bf16.xpose.msra.mxu0 %v3136
        %3154 = vmatprep.subr.bf16.mxu0 0
        %3155 = vmatpush2.bf16.xpose.msra.mxu0 0
        %3156 = vmatprep.subr.bf16.mxu0 0
        %3157 = vmatpush2.bf16.xpose.msra.mxu0 0
        %3158 = vmatprep.subr.bf16.mxu0 0
        %3159 = vmatpush2.bf16.xpose.msra.mxu0 0
        %3160 = vmatprep.subr.bf16.mxu0 0
        %3161 = vmatpush2.bf16.xpose.msra.mxu0 0
        %3162 = vmatprep.subr.bf16.mxu0 0
        %3163 = vmatpush2.bf16.xpose.msra.mxu0 0
        %3164 = vmatprep.subr.bf16.mxu0 0
        %3165 = vmatpush2.bf16.xpose.msra.mxu0 0
        %3166 = vmatprep.subr.bf16.mxu0 0
        %3167 = vmatpush2.bf16.xpose.msra.mxu0 0
        %3168 = vmatprep.subr.bf16.mxu0 0
        %3169 = vmatpush2.bf16.xpose.msra.mxu0 0
        %3170 = vmatprep.mubr.bf16.mxu0 0
        %3171 = vmatmul.mubr.bf16.gmra.mxu0 %v3133
        %v3172 = vpop.f32.mrf.mxu0
        %v3173 = vadd.f32 0.0, %v3172
        %v3174 = vpop.f32.mrf.mxu0
        %v3175 = vpop.f32.mrf.mxu0
        %v3176 = vadd.f32 0.0, %v3175
        %v3177 = vpop.f32.mrf.mxu0
        %3178 = vdwg.mxu0
        %3179 = vrot.lane.b32.xlu0 %v935, 64
        %v3180 = vpop.permute.xlu0 %3179
        %3181 = vrot.lane.b32.xlu0 %v943, 64
        %v3182 = vpop.permute.xlu0 %3181
        %v3184 = vsel %vm954, %v3180, 0
        %v3187 = vsel %vm954, %v3182, 0
        %3189 = vmatprep.subr.bf16.mxu0 0
        %3190 = vmatpush1.bf16.xpose.msra.mxu0 0
        %3191 = vmatprep.subr.bf16.mxu0 0
        %3192 = vmatpush1.bf16.xpose.msra.mxu0 0
        %3193 = vmatprep.subr.bf16.mxu0 0
        %3194 = vmatpush1.bf16.xpose.msra.mxu0 0
        %3195 = vmatprep.subr.bf16.mxu0 0
        %3196 = vmatpush1.bf16.xpose.msra.mxu0 0
        %3197 = vmatprep.subr.bf16.mxu0 0
        %3198 = vmatpush1.bf16.xpose.msra.mxu0 0
        %3199 = vmatprep.subr.bf16.mxu0 0
        %3200 = vmatpush1.bf16.xpose.msra.mxu0 0
        %3201 = vmatprep.subr.bf16.mxu0 0
        %3202 = vmatpush1.bf16.xpose.msra.mxu0 0
        %3203 = vmatprep.subr.bf16.mxu0 0
        %3204 = vmatpush1.bf16.xpose.msra.mxu0 %v3187
        %3205 = vmatprep.subr.bf16.mxu0 0
        %3206 = vmatpush2.bf16.xpose.msra.mxu0 0
        %3207 = vmatprep.subr.bf16.mxu0 0
        %3208 = vmatpush2.bf16.xpose.msra.mxu0 0
        %3209 = vmatprep.subr.bf16.mxu0 0
        %3210 = vmatpush2.bf16.xpose.msra.mxu0 0
        %3211 = vmatprep.subr.bf16.mxu0 0
        %3212 = vmatpush2.bf16.xpose.msra.mxu0 0
        %3213 = vmatprep.subr.bf16.mxu0 0
        %3214 = vmatpush2.bf16.xpose.msra.mxu0 0
        %3215 = vmatprep.subr.bf16.mxu0 0
        %3216 = vmatpush2.bf16.xpose.msra.mxu0 0
        %3217 = vmatprep.subr.bf16.mxu0 0
        %3218 = vmatpush2.bf16.xpose.msra.mxu0 0
        %3219 = vmatprep.subr.bf16.mxu0 0
        %3220 = vmatpush2.bf16.xpose.msra.mxu0 0
        %3221 = vmatprep.mubr.bf16.mxu0 0
        %3222 = vmatmul.mubr.bf16.gmra.mxu0 %v3184
        %v3223 = vpop.f32.mrf.mxu0
        %v3224 = vadd.f32 0.0, %v3223
        %v3225 = vpop.f32.mrf.mxu0
        %v3226 = vpop.f32.mrf.mxu0
        %v3227 = vadd.f32 0.0, %v3226
        %v3228 = vpop.f32.mrf.mxu0
        %3229 = vdwg.mxu0
        %3230 = vrot.lane.b32.xlu0 %v936, 64
        %v3231 = vpop.permute.xlu0 %3230
        %3232 = vrot.lane.b32.xlu0 %v944, 64
        %v3233 = vpop.permute.xlu0 %3232
        %v3235 = vsel %vm954, %v3231, 0
        %v3238 = vsel %vm954, %v3233, 0
        %3240 = vmatprep.subr.bf16.mxu0 0
        %3241 = vmatpush1.bf16.xpose.msra.mxu0 0
        %3242 = vmatprep.subr.bf16.mxu0 0
        %3243 = vmatpush1.bf16.xpose.msra.mxu0 0
        %3244 = vmatprep.subr.bf16.mxu0 0
        %3245 = vmatpush1.bf16.xpose.msra.mxu0 0
        %3246 = vmatprep.subr.bf16.mxu0 0
        %3247 = vmatpush1.bf16.xpose.msra.mxu0 0
        %3248 = vmatprep.subr.bf16.mxu0 0
        %3249 = vmatpush1.bf16.xpose.msra.mxu0 0
        %3250 = vmatprep.subr.bf16.mxu0 0
        %3251 = vmatpush1.bf16.xpose.msra.mxu0 0
        %3252 = vmatprep.subr.bf16.mxu0 0
        %3253 = vmatpush1.bf16.xpose.msra.mxu0 0
        %3254 = vmatprep.subr.bf16.mxu0 0
        %3255 = vmatpush1.bf16.xpose.msra.mxu0 %v3238
        %3256 = vmatprep.subr.bf16.mxu0 0
        %3257 = vmatpush2.bf16.xpose.msra.mxu0 0
        %3258 = vmatprep.subr.bf16.mxu0 0
        %3259 = vmatpush2.bf16.xpose.msra.mxu0 0
        %3260 = vmatprep.subr.bf16.mxu0 0
        %3261 = vmatpush2.bf16.xpose.msra.mxu0 0
        %3262 = vmatprep.subr.bf16.mxu0 0
        %3263 = vmatpush2.bf16.xpose.msra.mxu0 0
        %3264 = vmatprep.subr.bf16.mxu0 0
        %3265 = vmatpush2.bf16.xpose.msra.mxu0 0
        %3266 = vmatprep.subr.bf16.mxu0 0
        %3267 = vmatpush2.bf16.xpose.msra.mxu0 0
        %3268 = vmatprep.subr.bf16.mxu0 0
        %3269 = vmatpush2.bf16.xpose.msra.mxu0 0
        %3270 = vmatprep.subr.bf16.mxu0 0
        %3271 = vmatpush2.bf16.xpose.msra.mxu0 0
        %3272 = vmatprep.mubr.bf16.mxu0 0
        %3273 = vmatmul.mubr.bf16.gmra.mxu0 %v3235
        %v3274 = vpop.f32.mrf.mxu0
        %v3275 = vadd.f32 0.0, %v3274
        %v3276 = vpop.f32.mrf.mxu0
        %v3277 = vpop.f32.mrf.mxu0
        %v3278 = vadd.f32 0.0, %v3277
        %v3279 = vpop.f32.mrf.mxu0
        %3280 = vdwg.mxu0
        %3281 = vrot.lane.b32.xlu0 %v937, 64
        %v3282 = vpop.permute.xlu0 %3281
        %3283 = vrot.lane.b32.xlu0 %v945, 64
        %v3284 = vpop.permute.xlu0 %3283
        %v3286 = vsel %vm954, %v3282, 0
        %v3289 = vsel %vm954, %v3284, 0
        %3291 = vmatprep.subr.bf16.mxu0 0
        %3292 = vmatpush1.bf16.xpose.msra.mxu0 0
        %3293 = vmatprep.subr.bf16.mxu0 0
        %3294 = vmatpush1.bf16.xpose.msra.mxu0 0
        %3295 = vmatprep.subr.bf16.mxu0 0
        %3296 = vmatpush1.bf16.xpose.msra.mxu0 0
        %3297 = vmatprep.subr.bf16.mxu0 0
        %3298 = vmatpush1.bf16.xpose.msra.mxu0 0
        %3299 = vmatprep.subr.bf16.mxu0 0
        %3300 = vmatpush1.bf16.xpose.msra.mxu0 0
        %3301 = vmatprep.subr.bf16.mxu0 0
        %3302 = vmatpush1.bf16.xpose.msra.mxu0 0
        %3303 = vmatprep.subr.bf16.mxu0 0
        %3304 = vmatpush1.bf16.xpose.msra.mxu0 0
        %3305 = vmatprep.subr.bf16.mxu0 0
        %3306 = vmatpush1.bf16.xpose.msra.mxu0 %v3289
        %3307 = vmatprep.subr.bf16.mxu0 0
        %3308 = vmatpush2.bf16.xpose.msra.mxu0 0
        %3309 = vmatprep.subr.bf16.mxu0 0
        %3310 = vmatpush2.bf16.xpose.msra.mxu0 0
        %3311 = vmatprep.subr.bf16.mxu0 0
        %3312 = vmatpush2.bf16.xpose.msra.mxu0 0
        %3313 = vmatprep.subr.bf16.mxu0 0
        %3314 = vmatpush2.bf16.xpose.msra.mxu0 0
        %3315 = vmatprep.subr.bf16.mxu0 0
        %3316 = vmatpush2.bf16.xpose.msra.mxu0 0
        %3317 = vmatprep.subr.bf16.mxu0 0
        %3318 = vmatpush2.bf16.xpose.msra.mxu0 0
        %3319 = vmatprep.subr.bf16.mxu0 0
        %3320 = vmatpush2.bf16.xpose.msra.mxu0 0
        %3321 = vmatprep.subr.bf16.mxu0 0
        %3322 = vmatpush2.bf16.xpose.msra.mxu0 0
        %3323 = vmatprep.mubr.bf16.mxu0 0
        %3324 = vmatmul.mubr.bf16.gmra.mxu0 %v3286
        %v3325 = vpop.f32.mrf.mxu0
        %v3326 = vadd.f32 0.0, %v3325
        %v3327 = vpop.f32.mrf.mxu0
        %v3328 = vpop.f32.mrf.mxu0
        %v3329 = vadd.f32 0.0, %v3328
        %v3330 = vpop.f32.mrf.mxu0
        %3331 = vdwg.mxu0
        %v3332 = vmul.f32 %v2969, 0.17677669
        %v3333 = vmul.f32 %v2972, 0.17677669
        %v3334 = vmul.f32 %v3020, 0.17677669
        %v3335 = vmul.f32 %v3023, 0.17677669
        %v3336 = vmul.f32 %v3071, 0.17677669
        %v3337 = vmul.f32 %v3074, 0.17677669
        %v3338 = vmul.f32 %v3122, 0.17677669
        %v3339 = vmul.f32 %v3125, 0.17677669
        %v3340 = vmul.f32 %v3173, 0.17677669
        %v3341 = vmul.f32 %v3176, 0.17677669
        %v3342 = vmul.f32 %v3224, 0.17677669
        %v3343 = vmul.f32 %v3227, 0.17677669
        %v3344 = vmul.f32 %v3275, 0.17677669
        %v3345 = vmul.f32 %v3278, 0.17677669
        %v3346 = vmul.f32 %v3326, 0.17677669
        %v3347 = vmul.f32 %v3329, 0.17677669
        %v3348 = vadd.f32 %v3332, %v519
        %v3349 = vadd.f32 %v3333, %v520
        %v3350 = vadd.f32 %v3334, %v521
        %v3351 = vadd.f32 %v3335, %v522
        %v3352 = vadd.f32 %v3336, %v523
        %v3353 = vadd.f32 %v3337, %v524
        %v3354 = vadd.f32 %v3338, %v525
        %v3355 = vadd.f32 %v3339, %v526
        %v3356 = vadd.f32 %v3340, %v527
        %v3357 = vadd.f32 %v3341, %v528
        %v3358 = vadd.f32 %v3342, %v529
        %v3359 = vadd.f32 %v3343, %v530
        %v3360 = vadd.f32 %v3344, %v531
        %v3361 = vadd.f32 %v3345, %v532
        %v3362 = vadd.f32 %v3346, %v533
        %v3363 = vadd.f32 %v3347, %v534
        %v3364 = vsel %vm1363, %v3348, -inf
        %3365 = vmax.xlane.f32.xlu0 %v3364
        %v3366 = vpop.xlane.xlu0 %3365
        %v3367 = vsel %vm1363, %v3349, -inf
        %3368 = vmax.xlane.f32.xlu0 %v3367
        %v3369 = vpop.xlane.xlu0 %3368
        %v3370 = vsel %vm1363, %v3350, -inf
        %3371 = vmax.xlane.f32.xlu0 %v3370
        %v3372 = vpop.xlane.xlu0 %3371
        %v3373 = vsel %vm1363, %v3351, -inf
        %3374 = vmax.xlane.f32.xlu0 %v3373
        %v3375 = vpop.xlane.xlu0 %3374
        %v3376 = vsel %vm1363, %v3352, -inf
        %3377 = vmax.xlane.f32.xlu0 %v3376
        %v3378 = vpop.xlane.xlu0 %3377
        %v3379 = vsel %vm1363, %v3353, -inf
        %3380 = vmax.xlane.f32.xlu0 %v3379
        %v3381 = vpop.xlane.xlu0 %3380
        %v3382 = vsel %vm1363, %v3354, -inf
        %3383 = vmax.xlane.f32.xlu0 %v3382
        %v3384 = vpop.xlane.xlu0 %3383
        %v3385 = vsel %vm1363, %v3355, -inf
        %3386 = vmax.xlane.f32.xlu0 %v3385
        %v3387 = vpop.xlane.xlu0 %3386
        %v3388 = vsel %vm1363, %v3356, -inf
        %3389 = vmax.xlane.f32.xlu0 %v3388
        %v3390 = vpop.xlane.xlu0 %3389
        %v3391 = vsel %vm1363, %v3357, -inf
        %3392 = vmax.xlane.f32.xlu0 %v3391
        %v3393 = vpop.xlane.xlu0 %3392
        %v3394 = vsel %vm1363, %v3358, -inf
        %3395 = vmax.xlane.f32.xlu0 %v3394
        %v3396 = vpop.xlane.xlu0 %3395
        %v3397 = vsel %vm1363, %v3359, -inf
        %3398 = vmax.xlane.f32.xlu0 %v3397
        %v3399 = vpop.xlane.xlu0 %3398
        %v3400 = vsel %vm1363, %v3360, -inf
        %3401 = vmax.xlane.f32.xlu0 %v3400
        %v3402 = vpop.xlane.xlu0 %3401
        %v3403 = vsel %vm1363, %v3361, -inf
        %3404 = vmax.xlane.f32.xlu0 %v3403
        %v3405 = vpop.xlane.xlu0 %3404
        %v3406 = vsel %vm1363, %v3362, -inf
        %3407 = vmax.xlane.f32.xlu0 %v3406
        %v3408 = vpop.xlane.xlu0 %3407
        %v3409 = vsel %vm1363, %v3363, -inf
        %3410 = vmax.xlane.f32.xlu0 %v3409
        %v3411 = vpop.xlane.xlu0 %3410
        %v3412 = vsub.f32 %v3348, %v3366
        %v3413 = vsub.f32 %v3349, %v3369
        %v3414 = vsub.f32 %v3350, %v3372
        %v3415 = vsub.f32 %v3351, %v3375
        %v3416 = vsub.f32 %v3352, %v3378
        %v3417 = vsub.f32 %v3353, %v3381
        %v3418 = vsub.f32 %v3354, %v3384
        %v3419 = vsub.f32 %v3355, %v3387
        %v3420 = vsub.f32 %v3356, %v3390
        %v3421 = vsub.f32 %v3357, %v3393
        %v3422 = vsub.f32 %v3358, %v3396
        %v3423 = vsub.f32 %v3359, %v3399
        %v3424 = vsub.f32 %v3360, %v3402
        %v3425 = vsub.f32 %v3361, %v3405
        %v3426 = vsub.f32 %v3362, %v3408
        %v3427 = vsub.f32 %v3363, %v3411
        %v3428 = vmul.f32 %v3412, 1.442695
        %v3429 = vpow.pop %v3428
        %v3430 = vmul.f32 %v3413, 1.442695
        %v3431 = vpow.pop %v3430
        %v3432 = vmul.f32 %v3414, 1.442695
        %v3433 = vpow.pop %v3432
        %v3434 = vmul.f32 %v3415, 1.442695
        %v3435 = vpow.pop %v3434
        %v3436 = vmul.f32 %v3416, 1.442695
        %v3437 = vpow.pop %v3436
        %v3438 = vmul.f32 %v3417, 1.442695
        %v3439 = vpow.pop %v3438
        %v3440 = vmul.f32 %v3418, 1.442695
        %v3441 = vpow.pop %v3440
        %v3442 = vmul.f32 %v3419, 1.442695
        %v3443 = vpow.pop %v3442
        %v3444 = vmul.f32 %v3420, 1.442695
        %v3445 = vpow.pop %v3444
        %v3446 = vmul.f32 %v3421, 1.442695
        %v3447 = vpow.pop %v3446
        %v3448 = vmul.f32 %v3422, 1.442695
        %v3449 = vpow.pop %v3448
        %v3450 = vmul.f32 %v3423, 1.442695
        %v3451 = vpow.pop %v3450
        %v3452 = vmul.f32 %v3424, 1.442695
        %v3453 = vpow.pop %v3452
        %v3454 = vmul.f32 %v3425, 1.442695
        %v3455 = vpow.pop %v3454
        %v3456 = vmul.f32 %v3426, 1.442695
        %v3457 = vpow.pop %v3456
        %v3458 = vmul.f32 %v3427, 1.442695
        %v3459 = vpow.pop %v3458
        %v3460 = vsel %vm1363, %v3429, 0.0
        %3461 = vadd.xlane.f32.xlu0 %v3460
        %v3462 = vpop.xlane.xlu0 %3461
        %v3463 = vsel %vm1363, %v3431, 0.0
        %3464 = vadd.xlane.f32.xlu0 %v3463
        %v3465 = vpop.xlane.xlu0 %3464
        %v3466 = vsel %vm1363, %v3433, 0.0
        %3467 = vadd.xlane.f32.xlu0 %v3466
        %v3468 = vpop.xlane.xlu0 %3467
        %v3469 = vsel %vm1363, %v3435, 0.0
        %3470 = vadd.xlane.f32.xlu0 %v3469
        %v3471 = vpop.xlane.xlu0 %3470
        %v3472 = vsel %vm1363, %v3437, 0.0
        %3473 = vadd.xlane.f32.xlu0 %v3472
        %v3474 = vpop.xlane.xlu0 %3473
        %v3475 = vsel %vm1363, %v3439, 0.0
        %3476 = vadd.xlane.f32.xlu0 %v3475
        %v3477 = vpop.xlane.xlu0 %3476
        %v3478 = vsel %vm1363, %v3441, 0.0
        %3479 = vadd.xlane.f32.xlu0 %v3478
        %v3480 = vpop.xlane.xlu0 %3479
        %v3481 = vsel %vm1363, %v3443, 0.0
        %3482 = vadd.xlane.f32.xlu0 %v3481
        %v3483 = vpop.xlane.xlu0 %3482
        %v3484 = vsel %vm1363, %v3445, 0.0
        %3485 = vadd.xlane.f32.xlu0 %v3484
        %v3486 = vpop.xlane.xlu0 %3485
        %v3487 = vsel %vm1363, %v3447, 0.0
        %3488 = vadd.xlane.f32.xlu0 %v3487
        %v3489 = vpop.xlane.xlu0 %3488
        %v3490 = vsel %vm1363, %v3449, 0.0
        %3491 = vadd.xlane.f32.xlu0 %v3490
        %v3492 = vpop.xlane.xlu0 %3491
        %v3493 = vsel %vm1363, %v3451, 0.0
        %3494 = vadd.xlane.f32.xlu0 %v3493
        %v3495 = vpop.xlane.xlu0 %3494
        %v3496 = vsel %vm1363, %v3453, 0.0
        %3497 = vadd.xlane.f32.xlu0 %v3496
        %v3498 = vpop.xlane.xlu0 %3497
        %v3499 = vsel %vm1363, %v3455, 0.0
        %3500 = vadd.xlane.f32.xlu0 %v3499
        %v3501 = vpop.xlane.xlu0 %3500
        %v3502 = vsel %vm1363, %v3457, 0.0
        %3503 = vadd.xlane.f32.xlu0 %v3502
        %v3504 = vpop.xlane.xlu0 %3503
        %v3505 = vsel %vm1363, %v3459, 0.0
        %3506 = vadd.xlane.f32.xlu0 %v3505
        %v3507 = vpop.xlane.xlu0 %3506
        %v3508 = vrcp.pop %v3462
        %v3509 = vrcp.pop %v3465
        %v3510 = vrcp.pop %v3468
        %v3511 = vrcp.pop %v3471
        %v3512 = vrcp.pop %v3474
        %v3513 = vrcp.pop %v3477
        %v3514 = vrcp.pop %v3480
        %v3515 = vrcp.pop %v3483
        %v3516 = vrcp.pop %v3486
        %v3517 = vrcp.pop %v3489
        %v3518 = vrcp.pop %v3492
        %v3519 = vrcp.pop %v3495
        %v3520 = vrcp.pop %v3498
        %v3521 = vrcp.pop %v3501
        %v3522 = vrcp.pop %v3504
        %v3523 = vrcp.pop %v3507
        %v3524 = vmul.f32 %v3429, %v3508
        %v3525 = vmul.f32 %v3431, %v3509
        %v3526 = vmul.f32 %v3433, %v3510
        %v3527 = vmul.f32 %v3435, %v3511
        %v3528 = vmul.f32 %v3437, %v3512
        %v3529 = vmul.f32 %v3439, %v3513
        %v3530 = vmul.f32 %v3441, %v3514
        %v3531 = vmul.f32 %v3443, %v3515
        %v3532 = vmul.f32 %v3445, %v3516
        %v3533 = vmul.f32 %v3447, %v3517
        %v3534 = vmul.f32 %v3449, %v3518
        %v3535 = vmul.f32 %v3451, %v3519
        %v3536 = vmul.f32 %v3453, %v3520
        %v3537 = vmul.f32 %v3455, %v3521
        %v3538 = vmul.f32 %v3457, %v3522
        %v3539 = vmul.f32 %v3459, %v3523
        %v3540 = vpack.c.bf16 %v3525, %v3524
        %v3541 = vpack.c.bf16 %v3527, %v3526
        %v3542 = vpack.c.bf16 %v3529, %v3528
        %v3543 = vpack.c.bf16 %v3531, %v3530
        %v3544 = vpack.c.bf16 %v3533, %v3532
        %v3545 = vpack.c.bf16 %v3535, %v3534
        %v3546 = vpack.c.bf16 %v3537, %v3536
        %v3547 = vpack.c.bf16 %v3539, %v3538
        %3548 = vrot.lane.b32.xlu0 %v946, 64
        %v3549 = vpop.permute.xlu0 %3548
        %v3552 = vsel %vm1363, %v3540, 0
        %3554 = vmatprep.subr.bf16.mxu0 0
        %3555 = vmatpush1.bf16.msra.mxu0 0
        %3556 = vmatprep.subr.bf16.mxu0 0
        %3557 = vmatpush1.bf16.msra.mxu0 0
        %3558 = vmatprep.subr.bf16.mxu0 0
        %3559 = vmatpush1.bf16.msra.mxu0 0
        %3560 = vmatprep.subr.bf16.mxu0 0
        %3561 = vmatpush1.bf16.msra.mxu0 0
        %3562 = vmatprep.subr.bf16.mxu0 0
        %3563 = vmatpush1.bf16.msra.mxu0 0
        %3564 = vmatprep.subr.bf16.mxu0 0
        %3565 = vmatpush1.bf16.msra.mxu0 0
        %3566 = vmatprep.subr.bf16.mxu0 0
        %3567 = vmatpush1.bf16.msra.mxu0 0
        %3568 = vmatprep.subr.bf16.mxu0 0
        %3569 = vmatpush1.bf16.msra.mxu0 %v3549
        %3570 = vmatprep.subr.bf16.mxu0 0
        %3571 = vmatpush2.bf16.msra.mxu0 0
        %3572 = vmatprep.subr.bf16.mxu0 0
        %3573 = vmatpush2.bf16.msra.mxu0 0
        %3574 = vmatprep.subr.bf16.mxu0 0
        %3575 = vmatpush2.bf16.msra.mxu0 0
        %3576 = vmatprep.subr.bf16.mxu0 0
        %3577 = vmatpush2.bf16.msra.mxu0 0
        %3578 = vmatprep.subr.bf16.mxu0 0
        %3579 = vmatpush2.bf16.msra.mxu0 0
        %3580 = vmatprep.subr.bf16.mxu0 0
        %3581 = vmatpush2.bf16.msra.mxu0 0
        %3582 = vmatprep.subr.bf16.mxu0 0
        %3583 = vmatpush2.bf16.msra.mxu0 0
        %3584 = vmatprep.subr.bf16.mxu0 0
        %3585 = vmatpush2.bf16.msra.mxu0 0
        %3586 = vmatprep.mubr.bf16.mxu0 0
        %3587 = vmatmul.mubr.bf16.gmra.mxu0 %v3552
        %v3588 = vpop.f32.mrf.mxu0
        %v3589 = vadd.f32 0.0, %v3588
        %v3590 = vpop.f32.mrf.mxu0
        %v3591 = vpop.f32.mrf.mxu0
        %v3592 = vadd.f32 0.0, %v3591
        %v3593 = vpop.f32.mrf.mxu0
        %3594 = vdwg.mxu0
        %3595 = vrot.lane.b32.xlu0 %v947, 64
        %v3596 = vpop.permute.xlu0 %3595
        %v3599 = vsel %vm1363, %v3541, 0
        %3601 = vmatprep.subr.bf16.mxu0 0
        %3602 = vmatpush1.bf16.msra.mxu0 0
        %3603 = vmatprep.subr.bf16.mxu0 0
        %3604 = vmatpush1.bf16.msra.mxu0 0
        %3605 = vmatprep.subr.bf16.mxu0 0
        %3606 = vmatpush1.bf16.msra.mxu0 0
        %3607 = vmatprep.subr.bf16.mxu0 0
        %3608 = vmatpush1.bf16.msra.mxu0 0
        %3609 = vmatprep.subr.bf16.mxu0 0
        %3610 = vmatpush1.bf16.msra.mxu0 0
        %3611 = vmatprep.subr.bf16.mxu0 0
        %3612 = vmatpush1.bf16.msra.mxu0 0
        %3613 = vmatprep.subr.bf16.mxu0 0
        %3614 = vmatpush1.bf16.msra.mxu0 0
        %3615 = vmatprep.subr.bf16.mxu0 0
        %3616 = vmatpush1.bf16.msra.mxu0 %v3596
        %3617 = vmatprep.subr.bf16.mxu0 0
        %3618 = vmatpush2.bf16.msra.mxu0 0
        %3619 = vmatprep.subr.bf16.mxu0 0
        %3620 = vmatpush2.bf16.msra.mxu0 0
        %3621 = vmatprep.subr.bf16.mxu0 0
        %3622 = vmatpush2.bf16.msra.mxu0 0
        %3623 = vmatprep.subr.bf16.mxu0 0
        %3624 = vmatpush2.bf16.msra.mxu0 0
        %3625 = vmatprep.subr.bf16.mxu0 0
        %3626 = vmatpush2.bf16.msra.mxu0 0
        %3627 = vmatprep.subr.bf16.mxu0 0
        %3628 = vmatpush2.bf16.msra.mxu0 0
        %3629 = vmatprep.subr.bf16.mxu0 0
        %3630 = vmatpush2.bf16.msra.mxu0 0
        %3631 = vmatprep.subr.bf16.mxu0 0
        %3632 = vmatpush2.bf16.msra.mxu0 0
        %3633 = vmatprep.mubr.bf16.mxu0 0
        %3634 = vmatmul.mubr.bf16.gmra.mxu0 %v3599
        %v3635 = vpop.f32.mrf.mxu0
        %v3636 = vadd.f32 0.0, %v3635
        %v3637 = vpop.f32.mrf.mxu0
        %v3638 = vpop.f32.mrf.mxu0
        %v3639 = vadd.f32 0.0, %v3638
        %v3640 = vpop.f32.mrf.mxu0
        %3641 = vdwg.mxu0
        %3642 = vrot.lane.b32.xlu0 %v948, 64
        %v3643 = vpop.permute.xlu0 %3642
        %v3646 = vsel %vm1363, %v3542, 0
        %3648 = vmatprep.subr.bf16.mxu0 0
        %3649 = vmatpush1.bf16.msra.mxu0 0
        %3650 = vmatprep.subr.bf16.mxu0 0
        %3651 = vmatpush1.bf16.msra.mxu0 0
        %3652 = vmatprep.subr.bf16.mxu0 0
        %3653 = vmatpush1.bf16.msra.mxu0 0
        %3654 = vmatprep.subr.bf16.mxu0 0
        %3655 = vmatpush1.bf16.msra.mxu0 0
        %3656 = vmatprep.subr.bf16.mxu0 0
        %3657 = vmatpush1.bf16.msra.mxu0 0
        %3658 = vmatprep.subr.bf16.mxu0 0
        %3659 = vmatpush1.bf16.msra.mxu0 0
        %3660 = vmatprep.subr.bf16.mxu0 0
        %3661 = vmatpush1.bf16.msra.mxu0 0
        %3662 = vmatprep.subr.bf16.mxu0 0
        %3663 = vmatpush1.bf16.msra.mxu0 %v3643
        %3664 = vmatprep.subr.bf16.mxu0 0
        %3665 = vmatpush2.bf16.msra.mxu0 0
        %3666 = vmatprep.subr.bf16.mxu0 0
        %3667 = vmatpush2.bf16.msra.mxu0 0
        %3668 = vmatprep.subr.bf16.mxu0 0
        %3669 = vmatpush2.bf16.msra.mxu0 0
        %3670 = vmatprep.subr.bf16.mxu0 0
        %3671 = vmatpush2.bf16.msra.mxu0 0
        %3672 = vmatprep.subr.bf16.mxu0 0
        %3673 = vmatpush2.bf16.msra.mxu0 0
        %3674 = vmatprep.subr.bf16.mxu0 0
        %3675 = vmatpush2.bf16.msra.mxu0 0
        %3676 = vmatprep.subr.bf16.mxu0 0
        %3677 = vmatpush2.bf16.msra.mxu0 0
        %3678 = vmatprep.subr.bf16.mxu0 0
        %3679 = vmatpush2.bf16.msra.mxu0 0
        %3680 = vmatprep.mubr.bf16.mxu0 0
        %3681 = vmatmul.mubr.bf16.gmra.mxu0 %v3646
        %v3682 = vpop.f32.mrf.mxu0
        %v3683 = vadd.f32 0.0, %v3682
        %v3684 = vpop.f32.mrf.mxu0
        %v3685 = vpop.f32.mrf.mxu0
        %v3686 = vadd.f32 0.0, %v3685
        %v3687 = vpop.f32.mrf.mxu0
        %3688 = vdwg.mxu0
        %3689 = vrot.lane.b32.xlu0 %v949, 64
        %v3690 = vpop.permute.xlu0 %3689
        %v3693 = vsel %vm1363, %v3543, 0
        %3695 = vmatprep.subr.bf16.mxu0 0
        %3696 = vmatpush1.bf16.msra.mxu0 0
        %3697 = vmatprep.subr.bf16.mxu0 0
        %3698 = vmatpush1.bf16.msra.mxu0 0
        %3699 = vmatprep.subr.bf16.mxu0 0
        %3700 = vmatpush1.bf16.msra.mxu0 0
        %3701 = vmatprep.subr.bf16.mxu0 0
        %3702 = vmatpush1.bf16.msra.mxu0 0
        %3703 = vmatprep.subr.bf16.mxu0 0
        %3704 = vmatpush1.bf16.msra.mxu0 0
        %3705 = vmatprep.subr.bf16.mxu0 0
        %3706 = vmatpush1.bf16.msra.mxu0 0
        %3707 = vmatprep.subr.bf16.mxu0 0
        %3708 = vmatpush1.bf16.msra.mxu0 0
        %3709 = vmatprep.subr.bf16.mxu0 0
        %3710 = vmatpush1.bf16.msra.mxu0 %v3690
        %3711 = vmatprep.subr.bf16.mxu0 0
        %3712 = vmatpush2.bf16.msra.mxu0 0
        %3713 = vmatprep.subr.bf16.mxu0 0
        %3714 = vmatpush2.bf16.msra.mxu0 0
        %3715 = vmatprep.subr.bf16.mxu0 0
        %3716 = vmatpush2.bf16.msra.mxu0 0
        %3717 = vmatprep.subr.bf16.mxu0 0
        %3718 = vmatpush2.bf16.msra.mxu0 0
        %3719 = vmatprep.subr.bf16.mxu0 0
        %3720 = vmatpush2.bf16.msra.mxu0 0
        %3721 = vmatprep.subr.bf16.mxu0 0
        %3722 = vmatpush2.bf16.msra.mxu0 0
        %3723 = vmatprep.subr.bf16.mxu0 0
        %3724 = vmatpush2.bf16.msra.mxu0 0
        %3725 = vmatprep.subr.bf16.mxu0 0
        %3726 = vmatpush2.bf16.msra.mxu0 0
        %3727 = vmatprep.mubr.bf16.mxu0 0
        %3728 = vmatmul.mubr.bf16.gmra.mxu0 %v3693
        %v3729 = vpop.f32.mrf.mxu0
        %v3730 = vadd.f32 0.0, %v3729
        %v3731 = vpop.f32.mrf.mxu0
        %v3732 = vpop.f32.mrf.mxu0
        %v3733 = vadd.f32 0.0, %v3732
        %v3734 = vpop.f32.mrf.mxu0
        %3735 = vdwg.mxu0
        %3736 = vrot.lane.b32.xlu0 %v950, 64
        %v3737 = vpop.permute.xlu0 %3736
        %v3740 = vsel %vm1363, %v3544, 0
        %3742 = vmatprep.subr.bf16.mxu0 0
        %3743 = vmatpush1.bf16.msra.mxu0 0
        %3744 = vmatprep.subr.bf16.mxu0 0
        %3745 = vmatpush1.bf16.msra.mxu0 0
        %3746 = vmatprep.subr.bf16.mxu0 0
        %3747 = vmatpush1.bf16.msra.mxu0 0
        %3748 = vmatprep.subr.bf16.mxu0 0
        %3749 = vmatpush1.bf16.msra.mxu0 0
        %3750 = vmatprep.subr.bf16.mxu0 0
        %3751 = vmatpush1.bf16.msra.mxu0 0
        %3752 = vmatprep.subr.bf16.mxu0 0
        %3753 = vmatpush1.bf16.msra.mxu0 0
        %3754 = vmatprep.subr.bf16.mxu0 0
        %3755 = vmatpush1.bf16.msra.mxu0 0
        %3756 = vmatprep.subr.bf16.mxu0 0
        %3757 = vmatpush1.bf16.msra.mxu0 %v3737
        %3758 = vmatprep.subr.bf16.mxu0 0
        %3759 = vmatpush2.bf16.msra.mxu0 0
        %3760 = vmatprep.subr.bf16.mxu0 0
        %3761 = vmatpush2.bf16.msra.mxu0 0
        %3762 = vmatprep.subr.bf16.mxu0 0
        %3763 = vmatpush2.bf16.msra.mxu0 0
        %3764 = vmatprep.subr.bf16.mxu0 0
        %3765 = vmatpush2.bf16.msra.mxu0 0
        %3766 = vmatprep.subr.bf16.mxu0 0
        %3767 = vmatpush2.bf16.msra.mxu0 0
        %3768 = vmatprep.subr.bf16.mxu0 0
        %3769 = vmatpush2.bf16.msra.mxu0 0
        %3770 = vmatprep.subr.bf16.mxu0 0
        %3771 = vmatpush2.bf16.msra.mxu0 0
        %3772 = vmatprep.subr.bf16.mxu0 0
        %3773 = vmatpush2.bf16.msra.mxu0 0
        %3774 = vmatprep.mubr.bf16.mxu0 0
        %3775 = vmatmul.mubr.bf16.gmra.mxu0 %v3740
        %v3776 = vpop.f32.mrf.mxu0
        %v3777 = vadd.f32 0.0, %v3776
        %v3778 = vpop.f32.mrf.mxu0
        %v3779 = vpop.f32.mrf.mxu0
        %v3780 = vadd.f32 0.0, %v3779
        %v3781 = vpop.f32.mrf.mxu0
        %3782 = vdwg.mxu0
        %3783 = vrot.lane.b32.xlu0 %v951, 64
        %v3784 = vpop.permute.xlu0 %3783
        %v3787 = vsel %vm1363, %v3545, 0
        %3789 = vmatprep.subr.bf16.mxu0 0
        %3790 = vmatpush1.bf16.msra.mxu0 0
        %3791 = vmatprep.subr.bf16.mxu0 0
        %3792 = vmatpush1.bf16.msra.mxu0 0
        %3793 = vmatprep.subr.bf16.mxu0 0
        %3794 = vmatpush1.bf16.msra.mxu0 0
        %3795 = vmatprep.subr.bf16.mxu0 0
        %3796 = vmatpush1.bf16.msra.mxu0 0
        %3797 = vmatprep.subr.bf16.mxu0 0
        %3798 = vmatpush1.bf16.msra.mxu0 0
        %3799 = vmatprep.subr.bf16.mxu0 0
        %3800 = vmatpush1.bf16.msra.mxu0 0
        %3801 = vmatprep.subr.bf16.mxu0 0
        %3802 = vmatpush1.bf16.msra.mxu0 0
        %3803 = vmatprep.subr.bf16.mxu0 0
        %3804 = vmatpush1.bf16.msra.mxu0 %v3784
        %3805 = vmatprep.subr.bf16.mxu0 0
        %3806 = vmatpush2.bf16.msra.mxu0 0
        %3807 = vmatprep.subr.bf16.mxu0 0
        %3808 = vmatpush2.bf16.msra.mxu0 0
        %3809 = vmatprep.subr.bf16.mxu0 0
        %3810 = vmatpush2.bf16.msra.mxu0 0
        %3811 = vmatprep.subr.bf16.mxu0 0
        %3812 = vmatpush2.bf16.msra.mxu0 0
        %3813 = vmatprep.subr.bf16.mxu0 0
        %3814 = vmatpush2.bf16.msra.mxu0 0
        %3815 = vmatprep.subr.bf16.mxu0 0
        %3816 = vmatpush2.bf16.msra.mxu0 0
        %3817 = vmatprep.subr.bf16.mxu0 0
        %3818 = vmatpush2.bf16.msra.mxu0 0
        %3819 = vmatprep.subr.bf16.mxu0 0
        %3820 = vmatpush2.bf16.msra.mxu0 0
        %3821 = vmatprep.mubr.bf16.mxu0 0
        %3822 = vmatmul.mubr.bf16.gmra.mxu0 %v3787
        %v3823 = vpop.f32.mrf.mxu0
        %v3824 = vadd.f32 0.0, %v3823
        %v3825 = vpop.f32.mrf.mxu0
        %v3826 = vpop.f32.mrf.mxu0
        %v3827 = vadd.f32 0.0, %v3826
        %v3828 = vpop.f32.mrf.mxu0
        %3829 = vdwg.mxu0
        %3830 = vrot.lane.b32.xlu0 %v952, 64
        %v3831 = vpop.permute.xlu0 %3830
        %v3834 = vsel %vm1363, %v3546, 0
        %3836 = vmatprep.subr.bf16.mxu0 0
        %3837 = vmatpush1.bf16.msra.mxu0 0
        %3838 = vmatprep.subr.bf16.mxu0 0
        %3839 = vmatpush1.bf16.msra.mxu0 0
        %3840 = vmatprep.subr.bf16.mxu0 0
        %3841 = vmatpush1.bf16.msra.mxu0 0
        %3842 = vmatprep.subr.bf16.mxu0 0
        %3843 = vmatpush1.bf16.msra.mxu0 0
        %3844 = vmatprep.subr.bf16.mxu0 0
        %3845 = vmatpush1.bf16.msra.mxu0 0
        %3846 = vmatprep.subr.bf16.mxu0 0
        %3847 = vmatpush1.bf16.msra.mxu0 0
        %3848 = vmatprep.subr.bf16.mxu0 0
        %3849 = vmatpush1.bf16.msra.mxu0 0
        %3850 = vmatprep.subr.bf16.mxu0 0
        %3851 = vmatpush1.bf16.msra.mxu0 %v3831
        %3852 = vmatprep.subr.bf16.mxu0 0
        %3853 = vmatpush2.bf16.msra.mxu0 0
        %3854 = vmatprep.subr.bf16.mxu0 0
        %3855 = vmatpush2.bf16.msra.mxu0 0
        %3856 = vmatprep.subr.bf16.mxu0 0
        %3857 = vmatpush2.bf16.msra.mxu0 0
        %3858 = vmatprep.subr.bf16.mxu0 0
        %3859 = vmatpush2.bf16.msra.mxu0 0
        %3860 = vmatprep.subr.bf16.mxu0 0
        %3861 = vmatpush2.bf16.msra.mxu0 0
        %3862 = vmatprep.subr.bf16.mxu0 0
        %3863 = vmatpush2.bf16.msra.mxu0 0
        %3864 = vmatprep.subr.bf16.mxu0 0
        %3865 = vmatpush2.bf16.msra.mxu0 0
        %3866 = vmatprep.subr.bf16.mxu0 0
        %3867 = vmatpush2.bf16.msra.mxu0 0
        %3868 = vmatprep.mubr.bf16.mxu0 0
        %3869 = vmatmul.mubr.bf16.gmra.mxu0 %v3834
        %v3870 = vpop.f32.mrf.mxu0
        %v3871 = vadd.f32 0.0, %v3870
        %v3872 = vpop.f32.mrf.mxu0
        %v3873 = vpop.f32.mrf.mxu0
        %v3874 = vadd.f32 0.0, %v3873
        %v3875 = vpop.f32.mrf.mxu0
        %3876 = vdwg.mxu0
        %3877 = vrot.lane.b32.xlu0 %v953, 64
        %v3878 = vpop.permute.xlu0 %3877
        %v3881 = vsel %vm1363, %v3547, 0
        %3883 = vmatprep.subr.bf16.mxu0 0
        %3884 = vmatpush1.bf16.msra.mxu0 0
        %3885 = vmatprep.subr.bf16.mxu0 0
        %3886 = vmatpush1.bf16.msra.mxu0 0
        %3887 = vmatprep.subr.bf16.mxu0 0
        %3888 = vmatpush1.bf16.msra.mxu0 0
        %3889 = vmatprep.subr.bf16.mxu0 0
        %3890 = vmatpush1.bf16.msra.mxu0 0
        %3891 = vmatprep.subr.bf16.mxu0 0
        %3892 = vmatpush1.bf16.msra.mxu0 0
        %3893 = vmatprep.subr.bf16.mxu0 0
        %3894 = vmatpush1.bf16.msra.mxu0 0
        %3895 = vmatprep.subr.bf16.mxu0 0
        %3896 = vmatpush1.bf16.msra.mxu0 0
        %3897 = vmatprep.subr.bf16.mxu0 0
        %3898 = vmatpush1.bf16.msra.mxu0 %v3878
        %3899 = vmatprep.subr.bf16.mxu0 0
        %3900 = vmatpush2.bf16.msra.mxu0 0
        %3901 = vmatprep.subr.bf16.mxu0 0
        %3902 = vmatpush2.bf16.msra.mxu0 0
        %3903 = vmatprep.subr.bf16.mxu0 0
        %3904 = vmatpush2.bf16.msra.mxu0 0
        %3905 = vmatprep.subr.bf16.mxu0 0
        %3906 = vmatpush2.bf16.msra.mxu0 0
        %3907 = vmatprep.subr.bf16.mxu0 0
        %3908 = vmatpush2.bf16.msra.mxu0 0
        %3909 = vmatprep.subr.bf16.mxu0 0
        %3910 = vmatpush2.bf16.msra.mxu0 0
        %3911 = vmatprep.subr.bf16.mxu0 0
        %3912 = vmatpush2.bf16.msra.mxu0 0
        %3913 = vmatprep.subr.bf16.mxu0 0
        %3914 = vmatpush2.bf16.msra.mxu0 0
        %3915 = vmatprep.mubr.bf16.mxu0 0
        %3916 = vmatmul.mubr.bf16.gmra.mxu0 %v3881
        %v3917 = vpop.f32.mrf.mxu0
        %v3918 = vadd.f32 0.0, %v3917
        %v3919 = vpop.f32.mrf.mxu0
        %v3920 = vpop.f32.mrf.mxu0
        %v3921 = vadd.f32 0.0, %v3920
        %v3922 = vpop.f32.mrf.mxu0
        %3923 = vdwg.mxu0
        %3924 = vrot.lane.b32.xlu0 %v930, 32
        %v3925 = vpop.permute.xlu0 %3924
        %3926 = vrot.lane.b32.xlu0 %v938, 32
        %v3927 = vpop.permute.xlu0 %3926
        %v3929 = vsel %vm954, %v3925, 0
        %v3932 = vsel %vm954, %v3927, 0
        %3934 = vmatprep.subr.bf16.mxu0 0
        %3935 = vmatpush1.bf16.xpose.msra.mxu0 0
        %3936 = vmatprep.subr.bf16.mxu0 0
        %3937 = vmatpush1.bf16.xpose.msra.mxu0 0
        %3938 = vmatprep.subr.bf16.mxu0 0
        %3939 = vmatpush1.bf16.xpose.msra.mxu0 0
        %3940 = vmatprep.subr.bf16.mxu0 0
        %3941 = vmatpush1.bf16.xpose.msra.mxu0 0
        %3942 = vmatprep.subr.bf16.mxu0 0
        %3943 = vmatpush1.bf16.xpose.msra.mxu0 0
        %3944 = vmatprep.subr.bf16.mxu0 0
        %3945 = vmatpush1.bf16.xpose.msra.mxu0 0
        %3946 = vmatprep.subr.bf16.mxu0 0
        %3947 = vmatpush1.bf16.xpose.msra.mxu0 0
        %3948 = vmatprep.subr.bf16.mxu0 0
        %3949 = vmatpush1.bf16.xpose.msra.mxu0 %v3932
        %3950 = vmatprep.subr.bf16.mxu0 0
        %3951 = vmatpush2.bf16.xpose.msra.mxu0 0
        %3952 = vmatprep.subr.bf16.mxu0 0
        %3953 = vmatpush2.bf16.xpose.msra.mxu0 0
        %3954 = vmatprep.subr.bf16.mxu0 0
        %3955 = vmatpush2.bf16.xpose.msra.mxu0 0
        %3956 = vmatprep.subr.bf16.mxu0 0
        %3957 = vmatpush2.bf16.xpose.msra.mxu0 0
        %3958 = vmatprep.subr.bf16.mxu0 0
        %3959 = vmatpush2.bf16.xpose.msra.mxu0 0
        %3960 = vmatprep.subr.bf16.mxu0 0
        %3961 = vmatpush2.bf16.xpose.msra.mxu0 0
        %3962 = vmatprep.subr.bf16.mxu0 0
        %3963 = vmatpush2.bf16.xpose.msra.mxu0 0
        %3964 = vmatprep.subr.bf16.mxu0 0
        %3965 = vmatpush2.bf16.xpose.msra.mxu0 0
        %3966 = vmatprep.mubr.bf16.mxu0 0
        %3967 = vmatmul.mubr.bf16.gmra.mxu0 %v3929
        %v3968 = vpop.f32.mrf.mxu0
        %v3969 = vadd.f32 0.0, %v3968
        %v3970 = vpop.f32.mrf.mxu0
        %v3971 = vpop.f32.mrf.mxu0
        %v3972 = vadd.f32 0.0, %v3971
        %v3973 = vpop.f32.mrf.mxu0
        %3974 = vdwg.mxu0
        %3975 = vrot.lane.b32.xlu0 %v931, 32
        %v3976 = vpop.permute.xlu0 %3975
        %3977 = vrot.lane.b32.xlu0 %v939, 32
        %v3978 = vpop.permute.xlu0 %3977
        %v3980 = vsel %vm954, %v3976, 0
        %v3983 = vsel %vm954, %v3978, 0
        %3985 = vmatprep.subr.bf16.mxu0 0
        %3986 = vmatpush1.bf16.xpose.msra.mxu0 0
        %3987 = vmatprep.subr.bf16.mxu0 0
        %3988 = vmatpush1.bf16.xpose.msra.mxu0 0
        %3989 = vmatprep.subr.bf16.mxu0 0
        %3990 = vmatpush1.bf16.xpose.msra.mxu0 0
        %3991 = vmatprep.subr.bf16.mxu0 0
        %3992 = vmatpush1.bf16.xpose.msra.mxu0 0
        %3993 = vmatprep.subr.bf16.mxu0 0
        %3994 = vmatpush1.bf16.xpose.msra.mxu0 0
        %3995 = vmatprep.subr.bf16.mxu0 0
        %3996 = vmatpush1.bf16.xpose.msra.mxu0 0
        %3997 = vmatprep.subr.bf16.mxu0 0
        %3998 = vmatpush1.bf16.xpose.msra.mxu0 0
        %3999 = vmatprep.subr.bf16.mxu0 0
        %4000 = vmatpush1.bf16.xpose.msra.mxu0 %v3983
        %4001 = vmatprep.subr.bf16.mxu0 0
        %4002 = vmatpush2.bf16.xpose.msra.mxu0 0
        %4003 = vmatprep.subr.bf16.mxu0 0
        %4004 = vmatpush2.bf16.xpose.msra.mxu0 0
        %4005 = vmatprep.subr.bf16.mxu0 0
        %4006 = vmatpush2.bf16.xpose.msra.mxu0 0
        %4007 = vmatprep.subr.bf16.mxu0 0
        %4008 = vmatpush2.bf16.xpose.msra.mxu0 0
        %4009 = vmatprep.subr.bf16.mxu0 0
        %4010 = vmatpush2.bf16.xpose.msra.mxu0 0
        %4011 = vmatprep.subr.bf16.mxu0 0
        %4012 = vmatpush2.bf16.xpose.msra.mxu0 0
        %4013 = vmatprep.subr.bf16.mxu0 0
        %4014 = vmatpush2.bf16.xpose.msra.mxu0 0
        %4015 = vmatprep.subr.bf16.mxu0 0
        %4016 = vmatpush2.bf16.xpose.msra.mxu0 0
        %4017 = vmatprep.mubr.bf16.mxu0 0
        %4018 = vmatmul.mubr.bf16.gmra.mxu0 %v3980
        %v4019 = vpop.f32.mrf.mxu0
        %v4020 = vadd.f32 0.0, %v4019
        %v4021 = vpop.f32.mrf.mxu0
        %v4022 = vpop.f32.mrf.mxu0
        %v4023 = vadd.f32 0.0, %v4022
        %v4024 = vpop.f32.mrf.mxu0
        %4025 = vdwg.mxu0
        %4026 = vrot.lane.b32.xlu0 %v932, 32
        %v4027 = vpop.permute.xlu0 %4026
        %4028 = vrot.lane.b32.xlu0 %v940, 32
        %v4029 = vpop.permute.xlu0 %4028
        %v4031 = vsel %vm954, %v4027, 0
        %v4034 = vsel %vm954, %v4029, 0
        %4036 = vmatprep.subr.bf16.mxu0 0
        %4037 = vmatpush1.bf16.xpose.msra.mxu0 0
        %4038 = vmatprep.subr.bf16.mxu0 0
        %4039 = vmatpush1.bf16.xpose.msra.mxu0 0
        %4040 = vmatprep.subr.bf16.mxu0 0
        %4041 = vmatpush1.bf16.xpose.msra.mxu0 0
        %4042 = vmatprep.subr.bf16.mxu0 0
        %4043 = vmatpush1.bf16.xpose.msra.mxu0 0
        %4044 = vmatprep.subr.bf16.mxu0 0
        %4045 = vmatpush1.bf16.xpose.msra.mxu0 0
        %4046 = vmatprep.subr.bf16.mxu0 0
        %4047 = vmatpush1.bf16.xpose.msra.mxu0 0
        %4048 = vmatprep.subr.bf16.mxu0 0
        %4049 = vmatpush1.bf16.xpose.msra.mxu0 0
        %4050 = vmatprep.subr.bf16.mxu0 0
        %4051 = vmatpush1.bf16.xpose.msra.mxu0 %v4034
        %4052 = vmatprep.subr.bf16.mxu0 0
        %4053 = vmatpush2.bf16.xpose.msra.mxu0 0
        %4054 = vmatprep.subr.bf16.mxu0 0
        %4055 = vmatpush2.bf16.xpose.msra.mxu0 0
        %4056 = vmatprep.subr.bf16.mxu0 0
        %4057 = vmatpush2.bf16.xpose.msra.mxu0 0
        %4058 = vmatprep.subr.bf16.mxu0 0
        %4059 = vmatpush2.bf16.xpose.msra.mxu0 0
        %4060 = vmatprep.subr.bf16.mxu0 0
        %4061 = vmatpush2.bf16.xpose.msra.mxu0 0
        %4062 = vmatprep.subr.bf16.mxu0 0
        %4063 = vmatpush2.bf16.xpose.msra.mxu0 0
        %4064 = vmatprep.subr.bf16.mxu0 0
        %4065 = vmatpush2.bf16.xpose.msra.mxu0 0
        %4066 = vmatprep.subr.bf16.mxu0 0
        %4067 = vmatpush2.bf16.xpose.msra.mxu0 0
        %4068 = vmatprep.mubr.bf16.mxu0 0
        %4069 = vmatmul.mubr.bf16.gmra.mxu0 %v4031
        %v4070 = vpop.f32.mrf.mxu0
        %v4071 = vadd.f32 0.0, %v4070
        %v4072 = vpop.f32.mrf.mxu0
        %v4073 = vpop.f32.mrf.mxu0
        %v4074 = vadd.f32 0.0, %v4073
        %v4075 = vpop.f32.mrf.mxu0
        %4076 = vdwg.mxu0
        %4077 = vrot.lane.b32.xlu0 %v933, 32
        %v4078 = vpop.permute.xlu0 %4077
        %4079 = vrot.lane.b32.xlu0 %v941, 32
        %v4080 = vpop.permute.xlu0 %4079
        %v4082 = vsel %vm954, %v4078, 0
        %v4085 = vsel %vm954, %v4080, 0
        %4087 = vmatprep.subr.bf16.mxu0 0
        %4088 = vmatpush1.bf16.xpose.msra.mxu0 0
        %4089 = vmatprep.subr.bf16.mxu0 0
        %4090 = vmatpush1.bf16.xpose.msra.mxu0 0
        %4091 = vmatprep.subr.bf16.mxu0 0
        %4092 = vmatpush1.bf16.xpose.msra.mxu0 0
        %4093 = vmatprep.subr.bf16.mxu0 0
        %4094 = vmatpush1.bf16.xpose.msra.mxu0 0
        %4095 = vmatprep.subr.bf16.mxu0 0
        %4096 = vmatpush1.bf16.xpose.msra.mxu0 0
        %4097 = vmatprep.subr.bf16.mxu0 0
        %4098 = vmatpush1.bf16.xpose.msra.mxu0 0
        %4099 = vmatprep.subr.bf16.mxu0 0
        %4100 = vmatpush1.bf16.xpose.msra.mxu0 0
        %4101 = vmatprep.subr.bf16.mxu0 0
        %4102 = vmatpush1.bf16.xpose.msra.mxu0 %v4085
        %4103 = vmatprep.subr.bf16.mxu0 0
        %4104 = vmatpush2.bf16.xpose.msra.mxu0 0
        %4105 = vmatprep.subr.bf16.mxu0 0
        %4106 = vmatpush2.bf16.xpose.msra.mxu0 0
        %4107 = vmatprep.subr.bf16.mxu0 0
        %4108 = vmatpush2.bf16.xpose.msra.mxu0 0
        %4109 = vmatprep.subr.bf16.mxu0 0
        %4110 = vmatpush2.bf16.xpose.msra.mxu0 0
        %4111 = vmatprep.subr.bf16.mxu0 0
        %4112 = vmatpush2.bf16.xpose.msra.mxu0 0
        %4113 = vmatprep.subr.bf16.mxu0 0
        %4114 = vmatpush2.bf16.xpose.msra.mxu0 0
        %4115 = vmatprep.subr.bf16.mxu0 0
        %4116 = vmatpush2.bf16.xpose.msra.mxu0 0
        %4117 = vmatprep.subr.bf16.mxu0 0
        %4118 = vmatpush2.bf16.xpose.msra.mxu0 0
        %4119 = vmatprep.mubr.bf16.mxu0 0
        %4120 = vmatmul.mubr.bf16.gmra.mxu0 %v4082
        %v4121 = vpop.f32.mrf.mxu0
        %v4122 = vadd.f32 0.0, %v4121
        %v4123 = vpop.f32.mrf.mxu0
        %v4124 = vpop.f32.mrf.mxu0
        %v4125 = vadd.f32 0.0, %v4124
        %v4126 = vpop.f32.mrf.mxu0
        %4127 = vdwg.mxu0
        %4128 = vrot.lane.b32.xlu0 %v934, 32
        %v4129 = vpop.permute.xlu0 %4128
        %4130 = vrot.lane.b32.xlu0 %v942, 32
        %v4131 = vpop.permute.xlu0 %4130
        %v4133 = vsel %vm954, %v4129, 0
        %v4136 = vsel %vm954, %v4131, 0
        %4138 = vmatprep.subr.bf16.mxu0 0
        %4139 = vmatpush1.bf16.xpose.msra.mxu0 0
        %4140 = vmatprep.subr.bf16.mxu0 0
        %4141 = vmatpush1.bf16.xpose.msra.mxu0 0
        %4142 = vmatprep.subr.bf16.mxu0 0
        %4143 = vmatpush1.bf16.xpose.msra.mxu0 0
        %4144 = vmatprep.subr.bf16.mxu0 0
        %4145 = vmatpush1.bf16.xpose.msra.mxu0 0
        %4146 = vmatprep.subr.bf16.mxu0 0
        %4147 = vmatpush1.bf16.xpose.msra.mxu0 0
        %4148 = vmatprep.subr.bf16.mxu0 0
        %4149 = vmatpush1.bf16.xpose.msra.mxu0 0
        %4150 = vmatprep.subr.bf16.mxu0 0
        %4151 = vmatpush1.bf16.xpose.msra.mxu0 0
        %4152 = vmatprep.subr.bf16.mxu0 0
        %4153 = vmatpush1.bf16.xpose.msra.mxu0 %v4136
        %4154 = vmatprep.subr.bf16.mxu0 0
        %4155 = vmatpush2.bf16.xpose.msra.mxu0 0
        %4156 = vmatprep.subr.bf16.mxu0 0
        %4157 = vmatpush2.bf16.xpose.msra.mxu0 0
        %4158 = vmatprep.subr.bf16.mxu0 0
        %4159 = vmatpush2.bf16.xpose.msra.mxu0 0
        %4160 = vmatprep.subr.bf16.mxu0 0
        %4161 = vmatpush2.bf16.xpose.msra.mxu0 0
        %4162 = vmatprep.subr.bf16.mxu0 0
        %4163 = vmatpush2.bf16.xpose.msra.mxu0 0
        %4164 = vmatprep.subr.bf16.mxu0 0
        %4165 = vmatpush2.bf16.xpose.msra.mxu0 0
        %4166 = vmatprep.subr.bf16.mxu0 0
        %4167 = vmatpush2.bf16.xpose.msra.mxu0 0
        %4168 = vmatprep.subr.bf16.mxu0 0
        %4169 = vmatpush2.bf16.xpose.msra.mxu0 0
        %4170 = vmatprep.mubr.bf16.mxu0 0
        %4171 = vmatmul.mubr.bf16.gmra.mxu0 %v4133
        %v4172 = vpop.f32.mrf.mxu0
        %v4173 = vadd.f32 0.0, %v4172
        %v4174 = vpop.f32.mrf.mxu0
        %v4175 = vpop.f32.mrf.mxu0
        %v4176 = vadd.f32 0.0, %v4175
        %v4177 = vpop.f32.mrf.mxu0
        %4178 = vdwg.mxu0
        %4179 = vrot.lane.b32.xlu0 %v935, 32
        %v4180 = vpop.permute.xlu0 %4179
        %4181 = vrot.lane.b32.xlu0 %v943, 32
        %v4182 = vpop.permute.xlu0 %4181
        %v4184 = vsel %vm954, %v4180, 0
        %v4187 = vsel %vm954, %v4182, 0
        %4189 = vmatprep.subr.bf16.mxu0 0
        %4190 = vmatpush1.bf16.xpose.msra.mxu0 0
        %4191 = vmatprep.subr.bf16.mxu0 0
        %4192 = vmatpush1.bf16.xpose.msra.mxu0 0
        %4193 = vmatprep.subr.bf16.mxu0 0
        %4194 = vmatpush1.bf16.xpose.msra.mxu0 0
        %4195 = vmatprep.subr.bf16.mxu0 0
        %4196 = vmatpush1.bf16.xpose.msra.mxu0 0
        %4197 = vmatprep.subr.bf16.mxu0 0
        %4198 = vmatpush1.bf16.xpose.msra.mxu0 0
        %4199 = vmatprep.subr.bf16.mxu0 0
        %4200 = vmatpush1.bf16.xpose.msra.mxu0 0
        %4201 = vmatprep.subr.bf16.mxu0 0
        %4202 = vmatpush1.bf16.xpose.msra.mxu0 0
        %4203 = vmatprep.subr.bf16.mxu0 0
        %4204 = vmatpush1.bf16.xpose.msra.mxu0 %v4187
        %4205 = vmatprep.subr.bf16.mxu0 0
        %4206 = vmatpush2.bf16.xpose.msra.mxu0 0
        %4207 = vmatprep.subr.bf16.mxu0 0
        %4208 = vmatpush2.bf16.xpose.msra.mxu0 0
        %4209 = vmatprep.subr.bf16.mxu0 0
        %4210 = vmatpush2.bf16.xpose.msra.mxu0 0
        %4211 = vmatprep.subr.bf16.mxu0 0
        %4212 = vmatpush2.bf16.xpose.msra.mxu0 0
        %4213 = vmatprep.subr.bf16.mxu0 0
        %4214 = vmatpush2.bf16.xpose.msra.mxu0 0
        %4215 = vmatprep.subr.bf16.mxu0 0
        %4216 = vmatpush2.bf16.xpose.msra.mxu0 0
        %4217 = vmatprep.subr.bf16.mxu0 0
        %4218 = vmatpush2.bf16.xpose.msra.mxu0 0
        %4219 = vmatprep.subr.bf16.mxu0 0
        %4220 = vmatpush2.bf16.xpose.msra.mxu0 0
        %4221 = vmatprep.mubr.bf16.mxu0 0
        %4222 = vmatmul.mubr.bf16.gmra.mxu0 %v4184
        %v4223 = vpop.f32.mrf.mxu0
        %v4224 = vadd.f32 0.0, %v4223
        %v4225 = vpop.f32.mrf.mxu0
        %v4226 = vpop.f32.mrf.mxu0
        %v4227 = vadd.f32 0.0, %v4226
        %v4228 = vpop.f32.mrf.mxu0
        %4229 = vdwg.mxu0
        %4230 = vrot.lane.b32.xlu0 %v936, 32
        %v4231 = vpop.permute.xlu0 %4230
        %4232 = vrot.lane.b32.xlu0 %v944, 32
        %v4233 = vpop.permute.xlu0 %4232
        %v4235 = vsel %vm954, %v4231, 0
        %v4238 = vsel %vm954, %v4233, 0
        %4240 = vmatprep.subr.bf16.mxu0 0
        %4241 = vmatpush1.bf16.xpose.msra.mxu0 0
        %4242 = vmatprep.subr.bf16.mxu0 0
        %4243 = vmatpush1.bf16.xpose.msra.mxu0 0
        %4244 = vmatprep.subr.bf16.mxu0 0
        %4245 = vmatpush1.bf16.xpose.msra.mxu0 0
        %4246 = vmatprep.subr.bf16.mxu0 0
        %4247 = vmatpush1.bf16.xpose.msra.mxu0 0
        %4248 = vmatprep.subr.bf16.mxu0 0
        %4249 = vmatpush1.bf16.xpose.msra.mxu0 0
        %4250 = vmatprep.subr.bf16.mxu0 0
        %4251 = vmatpush1.bf16.xpose.msra.mxu0 0
        %4252 = vmatprep.subr.bf16.mxu0 0
        %4253 = vmatpush1.bf16.xpose.msra.mxu0 0
        %4254 = vmatprep.subr.bf16.mxu0 0
        %4255 = vmatpush1.bf16.xpose.msra.mxu0 %v4238
        %4256 = vmatprep.subr.bf16.mxu0 0
        %4257 = vmatpush2.bf16.xpose.msra.mxu0 0
        %4258 = vmatprep.subr.bf16.mxu0 0
        %4259 = vmatpush2.bf16.xpose.msra.mxu0 0
        %4260 = vmatprep.subr.bf16.mxu0 0
        %4261 = vmatpush2.bf16.xpose.msra.mxu0 0
        %4262 = vmatprep.subr.bf16.mxu0 0
        %4263 = vmatpush2.bf16.xpose.msra.mxu0 0
        %4264 = vmatprep.subr.bf16.mxu0 0
        %4265 = vmatpush2.bf16.xpose.msra.mxu0 0
        %4266 = vmatprep.subr.bf16.mxu0 0
        %4267 = vmatpush2.bf16.xpose.msra.mxu0 0
        %4268 = vmatprep.subr.bf16.mxu0 0
        %4269 = vmatpush2.bf16.xpose.msra.mxu0 0
        %4270 = vmatprep.subr.bf16.mxu0 0
        %4271 = vmatpush2.bf16.xpose.msra.mxu0 0
        %4272 = vmatprep.mubr.bf16.mxu0 0
        %4273 = vmatmul.mubr.bf16.gmra.mxu0 %v4235
        %v4274 = vpop.f32.mrf.mxu0
        %v4275 = vadd.f32 0.0, %v4274
        %v4276 = vpop.f32.mrf.mxu0
        %v4277 = vpop.f32.mrf.mxu0
        %v4278 = vadd.f32 0.0, %v4277
        %v4279 = vpop.f32.mrf.mxu0
        %4280 = vdwg.mxu0
        %4281 = vrot.lane.b32.xlu0 %v937, 32
        %v4282 = vpop.permute.xlu0 %4281
        %4283 = vrot.lane.b32.xlu0 %v945, 32
        %v4284 = vpop.permute.xlu0 %4283
        %v4286 = vsel %vm954, %v4282, 0
        %v4289 = vsel %vm954, %v4284, 0
        %4291 = vmatprep.subr.bf16.mxu0 0
        %4292 = vmatpush1.bf16.xpose.msra.mxu0 0
        %4293 = vmatprep.subr.bf16.mxu0 0
        %4294 = vmatpush1.bf16.xpose.msra.mxu0 0
        %4295 = vmatprep.subr.bf16.mxu0 0
        %4296 = vmatpush1.bf16.xpose.msra.mxu0 0
        %4297 = vmatprep.subr.bf16.mxu0 0
        %4298 = vmatpush1.bf16.xpose.msra.mxu0 0
        %4299 = vmatprep.subr.bf16.mxu0 0
        %4300 = vmatpush1.bf16.xpose.msra.mxu0 0
        %4301 = vmatprep.subr.bf16.mxu0 0
        %4302 = vmatpush1.bf16.xpose.msra.mxu0 0
        %4303 = vmatprep.subr.bf16.mxu0 0
        %4304 = vmatpush1.bf16.xpose.msra.mxu0 0
        %4305 = vmatprep.subr.bf16.mxu0 0
        %4306 = vmatpush1.bf16.xpose.msra.mxu0 %v4289
        %4307 = vmatprep.subr.bf16.mxu0 0
        %4308 = vmatpush2.bf16.xpose.msra.mxu0 0
        %4309 = vmatprep.subr.bf16.mxu0 0
        %4310 = vmatpush2.bf16.xpose.msra.mxu0 0
        %4311 = vmatprep.subr.bf16.mxu0 0
        %4312 = vmatpush2.bf16.xpose.msra.mxu0 0
        %4313 = vmatprep.subr.bf16.mxu0 0
        %4314 = vmatpush2.bf16.xpose.msra.mxu0 0
        %4315 = vmatprep.subr.bf16.mxu0 0
        %4316 = vmatpush2.bf16.xpose.msra.mxu0 0
        %4317 = vmatprep.subr.bf16.mxu0 0
        %4318 = vmatpush2.bf16.xpose.msra.mxu0 0
        %4319 = vmatprep.subr.bf16.mxu0 0
        %4320 = vmatpush2.bf16.xpose.msra.mxu0 0
        %4321 = vmatprep.subr.bf16.mxu0 0
        %4322 = vmatpush2.bf16.xpose.msra.mxu0 0
        %4323 = vmatprep.mubr.bf16.mxu0 0
        %4324 = vmatmul.mubr.bf16.gmra.mxu0 %v4286
        %v4325 = vpop.f32.mrf.mxu0
        %v4326 = vadd.f32 0.0, %v4325
        %v4327 = vpop.f32.mrf.mxu0
        %v4328 = vpop.f32.mrf.mxu0
        %v4329 = vadd.f32 0.0, %v4328
        %v4330 = vpop.f32.mrf.mxu0
        %4331 = vdwg.mxu0
        %v4332 = vmul.f32 %v3969, 0.17677669
        %v4333 = vmul.f32 %v3972, 0.17677669
        %v4334 = vmul.f32 %v4020, 0.17677669
        %v4335 = vmul.f32 %v4023, 0.17677669
        %v4336 = vmul.f32 %v4071, 0.17677669
        %v4337 = vmul.f32 %v4074, 0.17677669
        %v4338 = vmul.f32 %v4122, 0.17677669
        %v4339 = vmul.f32 %v4125, 0.17677669
        %v4340 = vmul.f32 %v4173, 0.17677669
        %v4341 = vmul.f32 %v4176, 0.17677669
        %v4342 = vmul.f32 %v4224, 0.17677669
        %v4343 = vmul.f32 %v4227, 0.17677669
        %v4344 = vmul.f32 %v4275, 0.17677669
        %v4345 = vmul.f32 %v4278, 0.17677669
        %v4346 = vmul.f32 %v4326, 0.17677669
        %v4347 = vmul.f32 %v4329, 0.17677669
        %v4348 = vadd.f32 %v4332, %v519
        %v4349 = vadd.f32 %v4333, %v520
        %v4350 = vadd.f32 %v4334, %v521
        %v4351 = vadd.f32 %v4335, %v522
        %v4352 = vadd.f32 %v4336, %v523
        %v4353 = vadd.f32 %v4337, %v524
        %v4354 = vadd.f32 %v4338, %v525
        %v4355 = vadd.f32 %v4339, %v526
        %v4356 = vadd.f32 %v4340, %v527
        %v4357 = vadd.f32 %v4341, %v528
        %v4358 = vadd.f32 %v4342, %v529
        %v4359 = vadd.f32 %v4343, %v530
        %v4360 = vadd.f32 %v4344, %v531
        %v4361 = vadd.f32 %v4345, %v532
        %v4362 = vadd.f32 %v4346, %v533
        %v4363 = vadd.f32 %v4347, %v534
        %v4364 = vsel %vm1363, %v4348, -inf
        %4365 = vmax.xlane.f32.xlu0 %v4364
        %v4366 = vpop.xlane.xlu0 %4365
        %v4367 = vsel %vm1363, %v4349, -inf
        %4368 = vmax.xlane.f32.xlu0 %v4367
        %v4369 = vpop.xlane.xlu0 %4368
        %v4370 = vsel %vm1363, %v4350, -inf
        %4371 = vmax.xlane.f32.xlu0 %v4370
        %v4372 = vpop.xlane.xlu0 %4371
        %v4373 = vsel %vm1363, %v4351, -inf
        %4374 = vmax.xlane.f32.xlu0 %v4373
        %v4375 = vpop.xlane.xlu0 %4374
        %v4376 = vsel %vm1363, %v4352, -inf
        %4377 = vmax.xlane.f32.xlu0 %v4376
        %v4378 = vpop.xlane.xlu0 %4377
        %v4379 = vsel %vm1363, %v4353, -inf
        %4380 = vmax.xlane.f32.xlu0 %v4379
        %v4381 = vpop.xlane.xlu0 %4380
        %v4382 = vsel %vm1363, %v4354, -inf
        %4383 = vmax.xlane.f32.xlu0 %v4382
        %v4384 = vpop.xlane.xlu0 %4383
        %v4385 = vsel %vm1363, %v4355, -inf
        %4386 = vmax.xlane.f32.xlu0 %v4385
        %v4387 = vpop.xlane.xlu0 %4386
        %v4388 = vsel %vm1363, %v4356, -inf
        %4389 = vmax.xlane.f32.xlu0 %v4388
        %v4390 = vpop.xlane.xlu0 %4389
        %v4391 = vsel %vm1363, %v4357, -inf
        %4392 = vmax.xlane.f32.xlu0 %v4391
        %v4393 = vpop.xlane.xlu0 %4392
        %v4394 = vsel %vm1363, %v4358, -inf
        %4395 = vmax.xlane.f32.xlu0 %v4394
        %v4396 = vpop.xlane.xlu0 %4395
        %v4397 = vsel %vm1363, %v4359, -inf
        %4398 = vmax.xlane.f32.xlu0 %v4397
        %v4399 = vpop.xlane.xlu0 %4398
        %v4400 = vsel %vm1363, %v4360, -inf
        %4401 = vmax.xlane.f32.xlu0 %v4400
        %v4402 = vpop.xlane.xlu0 %4401
        %v4403 = vsel %vm1363, %v4361, -inf
        %4404 = vmax.xlane.f32.xlu0 %v4403
        %v4405 = vpop.xlane.xlu0 %4404
        %v4406 = vsel %vm1363, %v4362, -inf
        %4407 = vmax.xlane.f32.xlu0 %v4406
        %v4408 = vpop.xlane.xlu0 %4407
        %v4409 = vsel %vm1363, %v4363, -inf
        %4410 = vmax.xlane.f32.xlu0 %v4409
        %v4411 = vpop.xlane.xlu0 %4410
        %v4412 = vsub.f32 %v4348, %v4366
        %v4413 = vsub.f32 %v4349, %v4369
        %v4414 = vsub.f32 %v4350, %v4372
        %v4415 = vsub.f32 %v4351, %v4375
        %v4416 = vsub.f32 %v4352, %v4378
        %v4417 = vsub.f32 %v4353, %v4381
        %v4418 = vsub.f32 %v4354, %v4384
        %v4419 = vsub.f32 %v4355, %v4387
        %v4420 = vsub.f32 %v4356, %v4390
        %v4421 = vsub.f32 %v4357, %v4393
        %v4422 = vsub.f32 %v4358, %v4396
        %v4423 = vsub.f32 %v4359, %v4399
        %v4424 = vsub.f32 %v4360, %v4402
        %v4425 = vsub.f32 %v4361, %v4405
        %v4426 = vsub.f32 %v4362, %v4408
        %v4427 = vsub.f32 %v4363, %v4411
        %v4428 = vmul.f32 %v4412, 1.442695
        %v4429 = vpow.pop %v4428
        %v4430 = vmul.f32 %v4413, 1.442695
        %v4431 = vpow.pop %v4430
        %v4432 = vmul.f32 %v4414, 1.442695
        %v4433 = vpow.pop %v4432
        %v4434 = vmul.f32 %v4415, 1.442695
        %v4435 = vpow.pop %v4434
        %v4436 = vmul.f32 %v4416, 1.442695
        %v4437 = vpow.pop %v4436
        %v4438 = vmul.f32 %v4417, 1.442695
        %v4439 = vpow.pop %v4438
        %v4440 = vmul.f32 %v4418, 1.442695
        %v4441 = vpow.pop %v4440
        %v4442 = vmul.f32 %v4419, 1.442695
        %v4443 = vpow.pop %v4442
        %v4444 = vmul.f32 %v4420, 1.442695
        %v4445 = vpow.pop %v4444
        %v4446 = vmul.f32 %v4421, 1.442695
        %v4447 = vpow.pop %v4446
        %v4448 = vmul.f32 %v4422, 1.442695
        %v4449 = vpow.pop %v4448
        %v4450 = vmul.f32 %v4423, 1.442695
        %v4451 = vpow.pop %v4450
        %v4452 = vmul.f32 %v4424, 1.442695
        %v4453 = vpow.pop %v4452
        %v4454 = vmul.f32 %v4425, 1.442695
        %v4455 = vpow.pop %v4454
        %v4456 = vmul.f32 %v4426, 1.442695
        %v4457 = vpow.pop %v4456
        %v4458 = vmul.f32 %v4427, 1.442695
        %v4459 = vpow.pop %v4458
        %v4460 = vsel %vm1363, %v4429, 0.0
        %4461 = vadd.xlane.f32.xlu0 %v4460
        %v4462 = vpop.xlane.xlu0 %4461
        %v4463 = vsel %vm1363, %v4431, 0.0
        %4464 = vadd.xlane.f32.xlu0 %v4463
        %v4465 = vpop.xlane.xlu0 %4464
        %v4466 = vsel %vm1363, %v4433, 0.0
        %4467 = vadd.xlane.f32.xlu0 %v4466
        %v4468 = vpop.xlane.xlu0 %4467
        %v4469 = vsel %vm1363, %v4435, 0.0
        %4470 = vadd.xlane.f32.xlu0 %v4469
        %v4471 = vpop.xlane.xlu0 %4470
        %v4472 = vsel %vm1363, %v4437, 0.0
        %4473 = vadd.xlane.f32.xlu0 %v4472
        %v4474 = vpop.xlane.xlu0 %4473
        %v4475 = vsel %vm1363, %v4439, 0.0
        %4476 = vadd.xlane.f32.xlu0 %v4475
        %v4477 = vpop.xlane.xlu0 %4476
        %v4478 = vsel %vm1363, %v4441, 0.0
        %4479 = vadd.xlane.f32.xlu0 %v4478
        %v4480 = vpop.xlane.xlu0 %4479
        %v4481 = vsel %vm1363, %v4443, 0.0
        %4482 = vadd.xlane.f32.xlu0 %v4481
        %v4483 = vpop.xlane.xlu0 %4482
        %v4484 = vsel %vm1363, %v4445, 0.0
        %4485 = vadd.xlane.f32.xlu0 %v4484
        %v4486 = vpop.xlane.xlu0 %4485
        %v4487 = vsel %vm1363, %v4447, 0.0
        %4488 = vadd.xlane.f32.xlu0 %v4487
        %v4489 = vpop.xlane.xlu0 %4488
        %v4490 = vsel %vm1363, %v4449, 0.0
        %4491 = vadd.xlane.f32.xlu0 %v4490
        %v4492 = vpop.xlane.xlu0 %4491
        %v4493 = vsel %vm1363, %v4451, 0.0
        %4494 = vadd.xlane.f32.xlu0 %v4493
        %v4495 = vpop.xlane.xlu0 %4494
        %v4496 = vsel %vm1363, %v4453, 0.0
        %4497 = vadd.xlane.f32.xlu0 %v4496
        %v4498 = vpop.xlane.xlu0 %4497
        %v4499 = vsel %vm1363, %v4455, 0.0
        %4500 = vadd.xlane.f32.xlu0 %v4499
        %v4501 = vpop.xlane.xlu0 %4500
        %v4502 = vsel %vm1363, %v4457, 0.0
        %4503 = vadd.xlane.f32.xlu0 %v4502
        %v4504 = vpop.xlane.xlu0 %4503
        %v4505 = vsel %vm1363, %v4459, 0.0
        %4506 = vadd.xlane.f32.xlu0 %v4505
        %v4507 = vpop.xlane.xlu0 %4506
        %v4508 = vrcp.pop %v4462
        %v4509 = vrcp.pop %v4465
        %v4510 = vrcp.pop %v4468
        %v4511 = vrcp.pop %v4471
        %v4512 = vrcp.pop %v4474
        %v4513 = vrcp.pop %v4477
        %v4514 = vrcp.pop %v4480
        %v4515 = vrcp.pop %v4483
        %v4516 = vrcp.pop %v4486
        %v4517 = vrcp.pop %v4489
        %v4518 = vrcp.pop %v4492
        %v4519 = vrcp.pop %v4495
        %v4520 = vrcp.pop %v4498
        %v4521 = vrcp.pop %v4501
        %v4522 = vrcp.pop %v4504
        %v4523 = vrcp.pop %v4507
        %v4524 = vmul.f32 %v4429, %v4508
        %v4525 = vmul.f32 %v4431, %v4509
        %v4526 = vmul.f32 %v4433, %v4510
        %v4527 = vmul.f32 %v4435, %v4511
        %v4528 = vmul.f32 %v4437, %v4512
        %v4529 = vmul.f32 %v4439, %v4513
        %v4530 = vmul.f32 %v4441, %v4514
        %v4531 = vmul.f32 %v4443, %v4515
        %v4532 = vmul.f32 %v4445, %v4516
        %v4533 = vmul.f32 %v4447, %v4517
        %v4534 = vmul.f32 %v4449, %v4518
        %v4535 = vmul.f32 %v4451, %v4519
        %v4536 = vmul.f32 %v4453, %v4520
        %v4537 = vmul.f32 %v4455, %v4521
        %v4538 = vmul.f32 %v4457, %v4522
        %v4539 = vmul.f32 %v4459, %v4523
        %v4540 = vpack.c.bf16 %v4525, %v4524
        %v4541 = vpack.c.bf16 %v4527, %v4526
        %v4542 = vpack.c.bf16 %v4529, %v4528
        %v4543 = vpack.c.bf16 %v4531, %v4530
        %v4544 = vpack.c.bf16 %v4533, %v4532
        %v4545 = vpack.c.bf16 %v4535, %v4534
        %v4546 = vpack.c.bf16 %v4537, %v4536
        %v4547 = vpack.c.bf16 %v4539, %v4538
        %4548 = vrot.lane.b32.xlu0 %v946, 32
        %v4549 = vpop.permute.xlu0 %4548
        %v4552 = vsel %vm1363, %v4540, 0
        %4554 = vmatprep.subr.bf16.mxu0 0
        %4555 = vmatpush1.bf16.msra.mxu0 0
        %4556 = vmatprep.subr.bf16.mxu0 0
        %4557 = vmatpush1.bf16.msra.mxu0 0
        %4558 = vmatprep.subr.bf16.mxu0 0
        %4559 = vmatpush1.bf16.msra.mxu0 0
        %4560 = vmatprep.subr.bf16.mxu0 0
        %4561 = vmatpush1.bf16.msra.mxu0 0
        %4562 = vmatprep.subr.bf16.mxu0 0
        %4563 = vmatpush1.bf16.msra.mxu0 0
        %4564 = vmatprep.subr.bf16.mxu0 0
        %4565 = vmatpush1.bf16.msra.mxu0 0
        %4566 = vmatprep.subr.bf16.mxu0 0
        %4567 = vmatpush1.bf16.msra.mxu0 0
        %4568 = vmatprep.subr.bf16.mxu0 0
        %4569 = vmatpush1.bf16.msra.mxu0 %v4549
        %4570 = vmatprep.subr.bf16.mxu0 0
        %4571 = vmatpush2.bf16.msra.mxu0 0
        %4572 = vmatprep.subr.bf16.mxu0 0
        %4573 = vmatpush2.bf16.msra.mxu0 0
        %4574 = vmatprep.subr.bf16.mxu0 0
        %4575 = vmatpush2.bf16.msra.mxu0 0
        %4576 = vmatprep.subr.bf16.mxu0 0
        %4577 = vmatpush2.bf16.msra.mxu0 0
        %4578 = vmatprep.subr.bf16.mxu0 0
        %4579 = vmatpush2.bf16.msra.mxu0 0
        %4580 = vmatprep.subr.bf16.mxu0 0
        %4581 = vmatpush2.bf16.msra.mxu0 0
        %4582 = vmatprep.subr.bf16.mxu0 0
        %4583 = vmatpush2.bf16.msra.mxu0 0
        %4584 = vmatprep.subr.bf16.mxu0 0
        %4585 = vmatpush2.bf16.msra.mxu0 0
        %4586 = vmatprep.mubr.bf16.mxu0 0
        %4587 = vmatmul.mubr.bf16.gmra.mxu0 %v4552
        %v4588 = vpop.f32.mrf.mxu0
        %v4589 = vadd.f32 0.0, %v4588
        %v4590 = vpop.f32.mrf.mxu0
        %v4591 = vpop.f32.mrf.mxu0
        %v4592 = vadd.f32 0.0, %v4591
        %v4593 = vpop.f32.mrf.mxu0
        %4594 = vdwg.mxu0
        %4595 = vrot.lane.b32.xlu0 %v947, 32
        %v4596 = vpop.permute.xlu0 %4595
        %v4599 = vsel %vm1363, %v4541, 0
        %4601 = vmatprep.subr.bf16.mxu0 0
        %4602 = vmatpush1.bf16.msra.mxu0 0
        %4603 = vmatprep.subr.bf16.mxu0 0
        %4604 = vmatpush1.bf16.msra.mxu0 0
        %4605 = vmatprep.subr.bf16.mxu0 0
        %4606 = vmatpush1.bf16.msra.mxu0 0
        %4607 = vmatprep.subr.bf16.mxu0 0
        %4608 = vmatpush1.bf16.msra.mxu0 0
        %4609 = vmatprep.subr.bf16.mxu0 0
        %4610 = vmatpush1.bf16.msra.mxu0 0
        %4611 = vmatprep.subr.bf16.mxu0 0
        %4612 = vmatpush1.bf16.msra.mxu0 0
        %4613 = vmatprep.subr.bf16.mxu0 0
        %4614 = vmatpush1.bf16.msra.mxu0 0
        %4615 = vmatprep.subr.bf16.mxu0 0
        %4616 = vmatpush1.bf16.msra.mxu0 %v4596
        %4617 = vmatprep.subr.bf16.mxu0 0
        %4618 = vmatpush2.bf16.msra.mxu0 0
        %4619 = vmatprep.subr.bf16.mxu0 0
        %4620 = vmatpush2.bf16.msra.mxu0 0
        %4621 = vmatprep.subr.bf16.mxu0 0
        %4622 = vmatpush2.bf16.msra.mxu0 0
        %4623 = vmatprep.subr.bf16.mxu0 0
        %4624 = vmatpush2.bf16.msra.mxu0 0
        %4625 = vmatprep.subr.bf16.mxu0 0
        %4626 = vmatpush2.bf16.msra.mxu0 0
        %4627 = vmatprep.subr.bf16.mxu0 0
        %4628 = vmatpush2.bf16.msra.mxu0 0
        %4629 = vmatprep.subr.bf16.mxu0 0
        %4630 = vmatpush2.bf16.msra.mxu0 0
        %4631 = vmatprep.subr.bf16.mxu0 0
        %4632 = vmatpush2.bf16.msra.mxu0 0
        %4633 = vmatprep.mubr.bf16.mxu0 0
        %4634 = vmatmul.mubr.bf16.gmra.mxu0 %v4599
        %v4635 = vpop.f32.mrf.mxu0
        %v4636 = vadd.f32 0.0, %v4635
        %v4637 = vpop.f32.mrf.mxu0
        %v4638 = vpop.f32.mrf.mxu0
        %v4639 = vadd.f32 0.0, %v4638
        %v4640 = vpop.f32.mrf.mxu0
        %4641 = vdwg.mxu0
        %4642 = vrot.lane.b32.xlu0 %v948, 32
        %v4643 = vpop.permute.xlu0 %4642
        %v4646 = vsel %vm1363, %v4542, 0
        %4648 = vmatprep.subr.bf16.mxu0 0
        %4649 = vmatpush1.bf16.msra.mxu0 0
        %4650 = vmatprep.subr.bf16.mxu0 0
        %4651 = vmatpush1.bf16.msra.mxu0 0
        %4652 = vmatprep.subr.bf16.mxu0 0
        %4653 = vmatpush1.bf16.msra.mxu0 0
        %4654 = vmatprep.subr.bf16.mxu0 0
        %4655 = vmatpush1.bf16.msra.mxu0 0
        %4656 = vmatprep.subr.bf16.mxu0 0
        %4657 = vmatpush1.bf16.msra.mxu0 0
        %4658 = vmatprep.subr.bf16.mxu0 0
        %4659 = vmatpush1.bf16.msra.mxu0 0
        %4660 = vmatprep.subr.bf16.mxu0 0
        %4661 = vmatpush1.bf16.msra.mxu0 0
        %4662 = vmatprep.subr.bf16.mxu0 0
        %4663 = vmatpush1.bf16.msra.mxu0 %v4643
        %4664 = vmatprep.subr.bf16.mxu0 0
        %4665 = vmatpush2.bf16.msra.mxu0 0
        %4666 = vmatprep.subr.bf16.mxu0 0
        %4667 = vmatpush2.bf16.msra.mxu0 0
        %4668 = vmatprep.subr.bf16.mxu0 0
        %4669 = vmatpush2.bf16.msra.mxu0 0
        %4670 = vmatprep.subr.bf16.mxu0 0
        %4671 = vmatpush2.bf16.msra.mxu0 0
        %4672 = vmatprep.subr.bf16.mxu0 0
        %4673 = vmatpush2.bf16.msra.mxu0 0
        %4674 = vmatprep.subr.bf16.mxu0 0
        %4675 = vmatpush2.bf16.msra.mxu0 0
        %4676 = vmatprep.subr.bf16.mxu0 0
        %4677 = vmatpush2.bf16.msra.mxu0 0
        %4678 = vmatprep.subr.bf16.mxu0 0
        %4679 = vmatpush2.bf16.msra.mxu0 0
        %4680 = vmatprep.mubr.bf16.mxu0 0
        %4681 = vmatmul.mubr.bf16.gmra.mxu0 %v4646
        %v4682 = vpop.f32.mrf.mxu0
        %v4683 = vadd.f32 0.0, %v4682
        %v4684 = vpop.f32.mrf.mxu0
        %v4685 = vpop.f32.mrf.mxu0
        %v4686 = vadd.f32 0.0, %v4685
        %v4687 = vpop.f32.mrf.mxu0
        %4688 = vdwg.mxu0
        %4689 = vrot.lane.b32.xlu0 %v949, 32
        %v4690 = vpop.permute.xlu0 %4689
        %v4693 = vsel %vm1363, %v4543, 0
        %4695 = vmatprep.subr.bf16.mxu0 0
        %4696 = vmatpush1.bf16.msra.mxu0 0
        %4697 = vmatprep.subr.bf16.mxu0 0
        %4698 = vmatpush1.bf16.msra.mxu0 0
        %4699 = vmatprep.subr.bf16.mxu0 0
        %4700 = vmatpush1.bf16.msra.mxu0 0
        %4701 = vmatprep.subr.bf16.mxu0 0
        %4702 = vmatpush1.bf16.msra.mxu0 0
        %4703 = vmatprep.subr.bf16.mxu0 0
        %4704 = vmatpush1.bf16.msra.mxu0 0
        %4705 = vmatprep.subr.bf16.mxu0 0
        %4706 = vmatpush1.bf16.msra.mxu0 0
        %4707 = vmatprep.subr.bf16.mxu0 0
        %4708 = vmatpush1.bf16.msra.mxu0 0
        %4709 = vmatprep.subr.bf16.mxu0 0
        %4710 = vmatpush1.bf16.msra.mxu0 %v4690
        %4711 = vmatprep.subr.bf16.mxu0 0
        %4712 = vmatpush2.bf16.msra.mxu0 0
        %4713 = vmatprep.subr.bf16.mxu0 0
        %4714 = vmatpush2.bf16.msra.mxu0 0
        %4715 = vmatprep.subr.bf16.mxu0 0
        %4716 = vmatpush2.bf16.msra.mxu0 0
        %4717 = vmatprep.subr.bf16.mxu0 0
        %4718 = vmatpush2.bf16.msra.mxu0 0
        %4719 = vmatprep.subr.bf16.mxu0 0
        %4720 = vmatpush2.bf16.msra.mxu0 0
        %4721 = vmatprep.subr.bf16.mxu0 0
        %4722 = vmatpush2.bf16.msra.mxu0 0
        %4723 = vmatprep.subr.bf16.mxu0 0
        %4724 = vmatpush2.bf16.msra.mxu0 0
        %4725 = vmatprep.subr.bf16.mxu0 0
        %4726 = vmatpush2.bf16.msra.mxu0 0
        %4727 = vmatprep.mubr.bf16.mxu0 0
        %4728 = vmatmul.mubr.bf16.gmra.mxu0 %v4693
        %v4729 = vpop.f32.mrf.mxu0
        %v4730 = vadd.f32 0.0, %v4729
        %v4731 = vpop.f32.mrf.mxu0
        %v4732 = vpop.f32.mrf.mxu0
        %v4733 = vadd.f32 0.0, %v4732
        %v4734 = vpop.f32.mrf.mxu0
        %4735 = vdwg.mxu0
        %4736 = vrot.lane.b32.xlu0 %v950, 32
        %v4737 = vpop.permute.xlu0 %4736
        %v4740 = vsel %vm1363, %v4544, 0
        %4742 = vmatprep.subr.bf16.mxu0 0
        %4743 = vmatpush1.bf16.msra.mxu0 0
        %4744 = vmatprep.subr.bf16.mxu0 0
        %4745 = vmatpush1.bf16.msra.mxu0 0
        %4746 = vmatprep.subr.bf16.mxu0 0
        %4747 = vmatpush1.bf16.msra.mxu0 0
        %4748 = vmatprep.subr.bf16.mxu0 0
        %4749 = vmatpush1.bf16.msra.mxu0 0
        %4750 = vmatprep.subr.bf16.mxu0 0
        %4751 = vmatpush1.bf16.msra.mxu0 0
        %4752 = vmatprep.subr.bf16.mxu0 0
        %4753 = vmatpush1.bf16.msra.mxu0 0
        %4754 = vmatprep.subr.bf16.mxu0 0
        %4755 = vmatpush1.bf16.msra.mxu0 0
        %4756 = vmatprep.subr.bf16.mxu0 0
        %4757 = vmatpush1.bf16.msra.mxu0 %v4737
        %4758 = vmatprep.subr.bf16.mxu0 0
        %4759 = vmatpush2.bf16.msra.mxu0 0
        %4760 = vmatprep.subr.bf16.mxu0 0
        %4761 = vmatpush2.bf16.msra.mxu0 0
        %4762 = vmatprep.subr.bf16.mxu0 0
        %4763 = vmatpush2.bf16.msra.mxu0 0
        %4764 = vmatprep.subr.bf16.mxu0 0
        %4765 = vmatpush2.bf16.msra.mxu0 0
        %4766 = vmatprep.subr.bf16.mxu0 0
        %4767 = vmatpush2.bf16.msra.mxu0 0
        %4768 = vmatprep.subr.bf16.mxu0 0
        %4769 = vmatpush2.bf16.msra.mxu0 0
        %4770 = vmatprep.subr.bf16.mxu0 0
        %4771 = vmatpush2.bf16.msra.mxu0 0
        %4772 = vmatprep.subr.bf16.mxu0 0
        %4773 = vmatpush2.bf16.msra.mxu0 0
        %4774 = vmatprep.mubr.bf16.mxu0 0
        %4775 = vmatmul.mubr.bf16.gmra.mxu0 %v4740
        %v4776 = vpop.f32.mrf.mxu0
        %v4777 = vadd.f32 0.0, %v4776
        %v4778 = vpop.f32.mrf.mxu0
        %v4779 = vpop.f32.mrf.mxu0
        %v4780 = vadd.f32 0.0, %v4779
        %v4781 = vpop.f32.mrf.mxu0
        %4782 = vdwg.mxu0
        %4783 = vrot.lane.b32.xlu0 %v951, 32
        %v4784 = vpop.permute.xlu0 %4783
        %v4787 = vsel %vm1363, %v4545, 0
        %4789 = vmatprep.subr.bf16.mxu0 0
        %4790 = vmatpush1.bf16.msra.mxu0 0
        %4791 = vmatprep.subr.bf16.mxu0 0
        %4792 = vmatpush1.bf16.msra.mxu0 0
        %4793 = vmatprep.subr.bf16.mxu0 0
        %4794 = vmatpush1.bf16.msra.mxu0 0
        %4795 = vmatprep.subr.bf16.mxu0 0
        %4796 = vmatpush1.bf16.msra.mxu0 0
        %4797 = vmatprep.subr.bf16.mxu0 0
        %4798 = vmatpush1.bf16.msra.mxu0 0
        %4799 = vmatprep.subr.bf16.mxu0 0
        %4800 = vmatpush1.bf16.msra.mxu0 0
        %4801 = vmatprep.subr.bf16.mxu0 0
        %4802 = vmatpush1.bf16.msra.mxu0 0
        %4803 = vmatprep.subr.bf16.mxu0 0
        %4804 = vmatpush1.bf16.msra.mxu0 %v4784
        %4805 = vmatprep.subr.bf16.mxu0 0
        %4806 = vmatpush2.bf16.msra.mxu0 0
        %4807 = vmatprep.subr.bf16.mxu0 0
        %4808 = vmatpush2.bf16.msra.mxu0 0
        %4809 = vmatprep.subr.bf16.mxu0 0
        %4810 = vmatpush2.bf16.msra.mxu0 0
        %4811 = vmatprep.subr.bf16.mxu0 0
        %4812 = vmatpush2.bf16.msra.mxu0 0
        %4813 = vmatprep.subr.bf16.mxu0 0
        %4814 = vmatpush2.bf16.msra.mxu0 0
        %4815 = vmatprep.subr.bf16.mxu0 0
        %4816 = vmatpush2.bf16.msra.mxu0 0
        %4817 = vmatprep.subr.bf16.mxu0 0
        %4818 = vmatpush2.bf16.msra.mxu0 0
        %4819 = vmatprep.subr.bf16.mxu0 0
        %4820 = vmatpush2.bf16.msra.mxu0 0
        %4821 = vmatprep.mubr.bf16.mxu0 0
        %4822 = vmatmul.mubr.bf16.gmra.mxu0 %v4787
        %v4823 = vpop.f32.mrf.mxu0
        %v4824 = vadd.f32 0.0, %v4823
        %v4825 = vpop.f32.mrf.mxu0
        %v4826 = vpop.f32.mrf.mxu0
        %v4827 = vadd.f32 0.0, %v4826
        %v4828 = vpop.f32.mrf.mxu0
        %4829 = vdwg.mxu0
        %4830 = vrot.lane.b32.xlu0 %v952, 32
        %v4831 = vpop.permute.xlu0 %4830
        %v4834 = vsel %vm1363, %v4546, 0
        %4836 = vmatprep.subr.bf16.mxu0 0
        %4837 = vmatpush1.bf16.msra.mxu0 0
        %4838 = vmatprep.subr.bf16.mxu0 0
        %4839 = vmatpush1.bf16.msra.mxu0 0
        %4840 = vmatprep.subr.bf16.mxu0 0
        %4841 = vmatpush1.bf16.msra.mxu0 0
        %4842 = vmatprep.subr.bf16.mxu0 0
        %4843 = vmatpush1.bf16.msra.mxu0 0
        %4844 = vmatprep.subr.bf16.mxu0 0
        %4845 = vmatpush1.bf16.msra.mxu0 0
        %4846 = vmatprep.subr.bf16.mxu0 0
        %4847 = vmatpush1.bf16.msra.mxu0 0
        %4848 = vmatprep.subr.bf16.mxu0 0
        %4849 = vmatpush1.bf16.msra.mxu0 0
        %4850 = vmatprep.subr.bf16.mxu0 0
        %4851 = vmatpush1.bf16.msra.mxu0 %v4831
        %4852 = vmatprep.subr.bf16.mxu0 0
        %4853 = vmatpush2.bf16.msra.mxu0 0
        %4854 = vmatprep.subr.bf16.mxu0 0
        %4855 = vmatpush2.bf16.msra.mxu0 0
        %4856 = vmatprep.subr.bf16.mxu0 0
        %4857 = vmatpush2.bf16.msra.mxu0 0
        %4858 = vmatprep.subr.bf16.mxu0 0
        %4859 = vmatpush2.bf16.msra.mxu0 0
        %4860 = vmatprep.subr.bf16.mxu0 0
        %4861 = vmatpush2.bf16.msra.mxu0 0
        %4862 = vmatprep.subr.bf16.mxu0 0
        %4863 = vmatpush2.bf16.msra.mxu0 0
        %4864 = vmatprep.subr.bf16.mxu0 0
        %4865 = vmatpush2.bf16.msra.mxu0 0
        %4866 = vmatprep.subr.bf16.mxu0 0
        %4867 = vmatpush2.bf16.msra.mxu0 0
        %4868 = vmatprep.mubr.bf16.mxu0 0
        %4869 = vmatmul.mubr.bf16.gmra.mxu0 %v4834
        %v4870 = vpop.f32.mrf.mxu0
        %v4871 = vadd.f32 0.0, %v4870
        %v4872 = vpop.f32.mrf.mxu0
        %v4873 = vpop.f32.mrf.mxu0
        %v4874 = vadd.f32 0.0, %v4873
        %v4875 = vpop.f32.mrf.mxu0
        %4876 = vdwg.mxu0
        %4877 = vrot.lane.b32.xlu0 %v953, 32
        %v4878 = vpop.permute.xlu0 %4877
        %v4881 = vsel %vm1363, %v4547, 0
        %4883 = vmatprep.subr.bf16.mxu0 0
        %4884 = vmatpush1.bf16.msra.mxu0 0
        %4885 = vmatprep.subr.bf16.mxu0 0
        %4886 = vmatpush1.bf16.msra.mxu0 0
        %4887 = vmatprep.subr.bf16.mxu0 0
        %4888 = vmatpush1.bf16.msra.mxu0 0
        %4889 = vmatprep.subr.bf16.mxu0 0
        %4890 = vmatpush1.bf16.msra.mxu0 0
        %4891 = vmatprep.subr.bf16.mxu0 0
        %4892 = vmatpush1.bf16.msra.mxu0 0
        %4893 = vmatprep.subr.bf16.mxu0 0
        %4894 = vmatpush1.bf16.msra.mxu0 0
        %4895 = vmatprep.subr.bf16.mxu0 0
        %4896 = vmatpush1.bf16.msra.mxu0 0
        %4897 = vmatprep.subr.bf16.mxu0 0
        %4898 = vmatpush1.bf16.msra.mxu0 %v4878
        %4899 = vmatprep.subr.bf16.mxu0 0
        %4900 = vmatpush2.bf16.msra.mxu0 0
        %4901 = vmatprep.subr.bf16.mxu0 0
        %4902 = vmatpush2.bf16.msra.mxu0 0
        %4903 = vmatprep.subr.bf16.mxu0 0
        %4904 = vmatpush2.bf16.msra.mxu0 0
        %4905 = vmatprep.subr.bf16.mxu0 0
        %4906 = vmatpush2.bf16.msra.mxu0 0
        %4907 = vmatprep.subr.bf16.mxu0 0
        %4908 = vmatpush2.bf16.msra.mxu0 0
        %4909 = vmatprep.subr.bf16.mxu0 0
        %4910 = vmatpush2.bf16.msra.mxu0 0
        %4911 = vmatprep.subr.bf16.mxu0 0
        %4912 = vmatpush2.bf16.msra.mxu0 0
        %4913 = vmatprep.subr.bf16.mxu0 0
        %4914 = vmatpush2.bf16.msra.mxu0 0
        %4915 = vmatprep.mubr.bf16.mxu0 0
        %4916 = vmatmul.mubr.bf16.gmra.mxu0 %v4881
        %v4917 = vpop.f32.mrf.mxu0
        %v4918 = vadd.f32 0.0, %v4917
        %v4919 = vpop.f32.mrf.mxu0
        %v4920 = vpop.f32.mrf.mxu0
        %v4921 = vadd.f32 0.0, %v4920
        %v4922 = vpop.f32.mrf.mxu0
        %4923 = vdwg.mxu0
        %4940 = vrot.lane.b32.xlu0 %v2582, 32
        %v4941 = vpop.permute.xlu0 %4940
        %4942 = vrot.lane.b32.xlu0 %v2585, 32
        %v4943 = vpop.permute.xlu0 %4942
        %4944 = vrot.lane.b32.xlu0 %v2630, 32
        %v4945 = vpop.permute.xlu0 %4944
        %4946 = vrot.lane.b32.xlu0 %v2633, 32
        %v4947 = vpop.permute.xlu0 %4946
        %4948 = vrot.lane.b32.xlu0 %v2678, 32
        %v4949 = vpop.permute.xlu0 %4948
        %4950 = vrot.lane.b32.xlu0 %v2681, 32
        %v4951 = vpop.permute.xlu0 %4950
        %4952 = vrot.lane.b32.xlu0 %v2726, 32
        %v4953 = vpop.permute.xlu0 %4952
        %4954 = vrot.lane.b32.xlu0 %v2729, 32
        %v4955 = vpop.permute.xlu0 %4954
        %4956 = vrot.lane.b32.xlu0 %v2774, 32
        %v4957 = vpop.permute.xlu0 %4956
        %4958 = vrot.lane.b32.xlu0 %v2777, 32
        %v4959 = vpop.permute.xlu0 %4958
        %4960 = vrot.lane.b32.xlu0 %v2822, 32
        %v4961 = vpop.permute.xlu0 %4960
        %4962 = vrot.lane.b32.xlu0 %v2825, 32
        %v4963 = vpop.permute.xlu0 %4962
        %4964 = vrot.lane.b32.xlu0 %v2870, 32
        %v4965 = vpop.permute.xlu0 %4964
        %4966 = vrot.lane.b32.xlu0 %v2873, 32
        %v4967 = vpop.permute.xlu0 %4966
        %4968 = vrot.lane.b32.xlu0 %v2918, 32
        %v4969 = vpop.permute.xlu0 %4968
        %4970 = vrot.lane.b32.xlu0 %v2921, 32
        %v4971 = vpop.permute.xlu0 %4970
        %5004 = vrot.lane.b32.xlu0 %v3589, 64
        %v5005 = vpop.permute.xlu0 %5004
        %5006 = vrot.lane.b32.xlu0 %v3592, 64
        %v5007 = vpop.permute.xlu0 %5006
        %5008 = vrot.lane.b32.xlu0 %v3636, 64
        %v5009 = vpop.permute.xlu0 %5008
        %5010 = vrot.lane.b32.xlu0 %v3639, 64
        %v5011 = vpop.permute.xlu0 %5010
        %5012 = vrot.lane.b32.xlu0 %v3683, 64
        %v5013 = vpop.permute.xlu0 %5012
        %5014 = vrot.lane.b32.xlu0 %v3686, 64
        %v5015 = vpop.permute.xlu0 %5014
        %5016 = vrot.lane.b32.xlu0 %v3730, 64
        %v5017 = vpop.permute.xlu0 %5016
        %5018 = vrot.lane.b32.xlu0 %v3733, 64
        %v5019 = vpop.permute.xlu0 %5018
        %5020 = vrot.lane.b32.xlu0 %v3777, 64
        %v5021 = vpop.permute.xlu0 %5020
        %5022 = vrot.lane.b32.xlu0 %v3780, 64
        %v5023 = vpop.permute.xlu0 %5022
        %5024 = vrot.lane.b32.xlu0 %v3824, 64
        %v5025 = vpop.permute.xlu0 %5024
        %5026 = vrot.lane.b32.xlu0 %v3827, 64
        %v5027 = vpop.permute.xlu0 %5026
        %5028 = vrot.lane.b32.xlu0 %v3871, 64
        %v5029 = vpop.permute.xlu0 %5028
        %5030 = vrot.lane.b32.xlu0 %v3874, 64
        %v5031 = vpop.permute.xlu0 %5030
        %5032 = vrot.lane.b32.xlu0 %v3918, 64
        %v5033 = vpop.permute.xlu0 %5032
        %5034 = vrot.lane.b32.xlu0 %v3921, 64
        %v5035 = vpop.permute.xlu0 %5034
        %5068 = vrot.lane.b32.xlu0 %v4589, 96
        %v5069 = vpop.permute.xlu0 %5068
        %5070 = vrot.lane.b32.xlu0 %v4592, 96
        %v5071 = vpop.permute.xlu0 %5070
        %5072 = vrot.lane.b32.xlu0 %v4636, 96
        %v5073 = vpop.permute.xlu0 %5072
        %5074 = vrot.lane.b32.xlu0 %v4639, 96
        %v5075 = vpop.permute.xlu0 %5074
        %5076 = vrot.lane.b32.xlu0 %v4683, 96
        %v5077 = vpop.permute.xlu0 %5076
        %5078 = vrot.lane.b32.xlu0 %v4686, 96
        %v5079 = vpop.permute.xlu0 %5078
        %5080 = vrot.lane.b32.xlu0 %v4730, 96
        %v5081 = vpop.permute.xlu0 %5080
        %5082 = vrot.lane.b32.xlu0 %v4733, 96
        %v5083 = vpop.permute.xlu0 %5082
        %5084 = vrot.lane.b32.xlu0 %v4777, 96
        %v5085 = vpop.permute.xlu0 %5084
        %5086 = vrot.lane.b32.xlu0 %v4780, 96
        %v5087 = vpop.permute.xlu0 %5086
        %5088 = vrot.lane.b32.xlu0 %v4824, 96
        %v5089 = vpop.permute.xlu0 %5088
        %5090 = vrot.lane.b32.xlu0 %v4827, 96
        %v5091 = vpop.permute.xlu0 %5090
        %5092 = vrot.lane.b32.xlu0 %v4871, 96
        %v5093 = vpop.permute.xlu0 %5092
        %5094 = vrot.lane.b32.xlu0 %v4874, 96
        %v5095 = vpop.permute.xlu0 %5094
        %5096 = vrot.lane.b32.xlu0 %v4918, 96
        %v5097 = vpop.permute.xlu0 %5096
        %5098 = vrot.lane.b32.xlu0 %v4921, 96
        %v5099 = vpop.permute.xlu0 %5098
        %v5116 = vsel %vm954, %v1586, %v4941
        %v5117 = vsel %vm954, %v1589, %v4943
        %v5118 = vsel %vm954, %v1630, %v4945
        %v5119 = vsel %vm954, %v1633, %v4947
        %v5120 = vsel %vm954, %v1674, %v4949
        %v5121 = vsel %vm954, %v1677, %v4951
        %v5122 = vsel %vm954, %v1718, %v4953
        %v5123 = vsel %vm954, %v1721, %v4955
        %v5124 = vsel %vm954, %v1762, %v4957
        %v5125 = vsel %vm954, %v1765, %v4959
        %v5126 = vsel %vm954, %v1806, %v4961
        %v5127 = vsel %vm954, %v1809, %v4963
        %v5128 = vsel %vm954, %v1850, %v4965
        %v5129 = vsel %vm954, %v1853, %v4967
        %v5130 = vsel %vm954, %v1894, %v4969
        %v5131 = vsel %vm954, %v1897, %v4971
        %vm5132 = vcmask 523264
        %v5133 = vsel %vm5132, %v5116, %v5005
        %v5134 = vsel %vm5132, %v5117, %v5007
        %v5135 = vsel %vm5132, %v5118, %v5009
        %v5136 = vsel %vm5132, %v5119, %v5011
        %v5137 = vsel %vm5132, %v5120, %v5013
        %v5138 = vsel %vm5132, %v5121, %v5015
        %v5139 = vsel %vm5132, %v5122, %v5017
        %v5140 = vsel %vm5132, %v5123, %v5019
        %v5141 = vsel %vm5132, %v5124, %v5021
        %v5142 = vsel %vm5132, %v5125, %v5023
        %v5143 = vsel %vm5132, %v5126, %v5025
        %v5144 = vsel %vm5132, %v5127, %v5027
        %v5145 = vsel %vm5132, %v5128, %v5029
        %v5146 = vsel %vm5132, %v5129, %v5031
        %v5147 = vsel %vm5132, %v5130, %v5033
        %v5148 = vsel %vm5132, %v5131, %v5035
        %vm5149 = vcmask 785408
        %v5150 = vsel %vm5149, %v5133, %v5069
        %v5151 = vsel %vm5149, %v5134, %v5071
        %v5152 = vsel %vm5149, %v5135, %v5073
        %v5153 = vsel %vm5149, %v5136, %v5075
        %v5154 = vsel %vm5149, %v5137, %v5077
        %v5155 = vsel %vm5149, %v5138, %v5079
        %v5156 = vsel %vm5149, %v5139, %v5081
        %v5157 = vsel %vm5149, %v5140, %v5083
        %v5158 = vsel %vm5149, %v5141, %v5085
        %v5159 = vsel %vm5149, %v5142, %v5087
        %v5160 = vsel %vm5149, %v5143, %v5089
        %v5161 = vsel %vm5149, %v5144, %v5091
        %v5162 = vsel %vm5149, %v5145, %v5093
        %v5163 = vsel %vm5149, %v5146, %v5095
        %v5164 = vsel %vm5149, %v5147, %v5097
        %v5165 = vsel %vm5149, %v5148, %v5099
        %v5166 = vpack.c.bf16 %v5151, %v5150
        %v5167 = vpack.c.bf16 %v5153, %v5152
        %v5168 = vpack.c.bf16 %v5155, %v5154
        %v5169 = vpack.c.bf16 %v5157, %v5156
        %v5170 = vpack.c.bf16 %v5159, %v5158
        %v5171 = vpack.c.bf16 %v5161, %v5160
        %v5172 = vpack.c.bf16 %v5163, %v5162
        %v5173 = vpack.c.bf16 %v5165, %v5164
        %v5174 = vld [vmem:[#allocation8] sm:$0xf]
        %v5175 = vld [vmem:[#allocation8 + $0x4] sm:$0xf]
        %v5176 = vld [vmem:[#allocation8 + $0x8] sm:$0xf]
        %v5177 = vld [vmem:[#allocation8 + $0xc] sm:$0xf]
        %v5178 = vld [vmem:[#allocation8 + $0x10] sm:$0xf]
        %v5179 = vld [vmem:[#allocation8 + $0x14] sm:$0xf]
        %v5180 = vld [vmem:[#allocation8 + $0x18] sm:$0xf]
        %v5181 = vld [vmem:[#allocation8 + $0x1c] sm:$0xf]
        %v5182 = vld [vmem:[#allocation8 + $0x20] sm:$0xf]
        %v5183 = vld [vmem:[#allocation8 + $0x24] sm:$0xf]
        %v5184 = vld [vmem:[#allocation8 + $0x28] sm:$0xf]
        %v5185 = vld [vmem:[#allocation8 + $0x2c] sm:$0xf]
        %v5186 = vld [vmem:[#allocation8 + $0x30] sm:$0xf]
        %v5187 = vld [vmem:[#allocation8 + $0x34] sm:$0xf]
        %v5188 = vld [vmem:[#allocation8 + $0x38] sm:$0xf]
        %v5189 = vld [vmem:[#allocation8 + $0x3c] sm:$0xf]
        %v5190 = vld [vmem:[%s7] sm:$0x1]
        %v5191 = vlaneseq
        %v5192 = vshrl.u32 %v5191, 7
        %v5193 = vsub.s32 0, %v5192
        %v5194 = vrot.slane %v5190, %v5193
        %v5211 = vunpack.c.l.b16 %v5174
        %v5212 = vunpack.c.l.b16 %v5175
        %v5213 = vunpack.c.l.b16 %v5176
        %v5214 = vunpack.c.l.b16 %v5177
        %v5215 = vunpack.c.l.b16 %v5178
        %v5216 = vunpack.c.l.b16 %v5179
        %v5217 = vunpack.c.l.b16 %v5180
        %v5218 = vunpack.c.l.b16 %v5181
        %v5219 = vunpack.c.l.b16 %v5182
        %v5220 = vunpack.c.l.b16 %v5183
        %v5221 = vunpack.c.l.b16 %v5184
        %v5222 = vunpack.c.l.b16 %v5185
        %v5223 = vunpack.c.l.b16 %v5186
        %v5224 = vunpack.c.l.b16 %v5187
        %v5225 = vunpack.c.l.b16 %v5188
        %v5226 = vunpack.c.l.b16 %v5189
        %v5227 = vpack.c.b16 %v5212, %v5211
        %v5228 = vpack.c.b16 %v5214, %v5213
        %v5229 = vpack.c.b16 %v5216, %v5215
        %v5230 = vpack.c.b16 %v5218, %v5217
        %v5231 = vpack.c.b16 %v5220, %v5219
        %v5232 = vpack.c.b16 %v5222, %v5221
        %v5233 = vpack.c.b16 %v5224, %v5223
        %v5234 = vpack.c.b16 %v5226, %v5225
        %5243 = vmatprep.subr.bf16.mxu0 0
        %5244 = vmatpush1.bf16.msra.mxu0 %v5234
        %5245 = vmatprep.subr.bf16.mxu0 0
        %5246 = vmatpush1.bf16.msra.mxu0 %v5233
        %5247 = vmatprep.subr.bf16.mxu0 0
        %5248 = vmatpush1.bf16.msra.mxu0 %v5232
        %5249 = vmatprep.subr.bf16.mxu0 0
        %5250 = vmatpush1.bf16.msra.mxu0 %v5231
        %5251 = vmatprep.subr.bf16.mxu0 0
        %5252 = vmatpush1.bf16.msra.mxu0 %v5230
        %5253 = vmatprep.subr.bf16.mxu0 0
        %5254 = vmatpush1.bf16.msra.mxu0 %v5229
        %5255 = vmatprep.subr.bf16.mxu0 0
        %5256 = vmatpush1.bf16.msra.mxu0 %v5228
        %5257 = vmatprep.subr.bf16.mxu0 0
        %5258 = vmatpush1.bf16.msra.mxu0 %v5227
        %5259 = vmatprep.subr.bf16.mxu0 0
        %5260 = vmatpush2.bf16.msra.mxu0 0
        %5261 = vmatprep.subr.bf16.mxu0 0
        %5262 = vmatpush2.bf16.msra.mxu0 0
        %5263 = vmatprep.subr.bf16.mxu0 0
        %5264 = vmatpush2.bf16.msra.mxu0 0
        %5265 = vmatprep.subr.bf16.mxu0 0
        %5266 = vmatpush2.bf16.msra.mxu0 0
        %5267 = vmatprep.subr.bf16.mxu0 0
        %5268 = vmatpush2.bf16.msra.mxu0 0
        %5269 = vmatprep.subr.bf16.mxu0 0
        %5270 = vmatpush2.bf16.msra.mxu0 0
        %5271 = vmatprep.subr.bf16.mxu0 0
        %5272 = vmatpush2.bf16.msra.mxu0 0
        %5273 = vmatprep.subr.bf16.mxu0 0
        %5274 = vmatpush2.bf16.msra.mxu0 0
        %5275 = vmatprep.mubr.bf16.mxu0 0
        %5276 = vmatmul.mubr.bf16.gmra.mxu0 %v5166
        %v5277 = vpop.f32.mrf.mxu0
        %v5278 = vadd.f32 %v5194, %v5277
        %v5279 = vpop.f32.mrf.mxu0
        %v5280 = vpop.f32.mrf.mxu0
        %v5281 = vadd.f32 %v5194, %v5280
        %v5282 = vpop.f32.mrf.mxu0
        %5283 = vmatprep.mubr.bf16.mxu0 0
        %5284 = vmatmul.mubr.bf16.gmra.mxu0 %v5167
        %v5285 = vpop.f32.mrf.mxu0
        %v5286 = vadd.f32 %v5194, %v5285
        %v5287 = vpop.f32.mrf.mxu0
        %v5288 = vpop.f32.mrf.mxu0
        %v5289 = vadd.f32 %v5194, %v5288
        %v5290 = vpop.f32.mrf.mxu0
        %5291 = vmatprep.mubr.bf16.mxu0 0
        %5292 = vmatmul.mubr.bf16.gmra.mxu0 %v5168
        %v5293 = vpop.f32.mrf.mxu0
        %v5294 = vadd.f32 %v5194, %v5293
        %v5295 = vpop.f32.mrf.mxu0
        %v5296 = vpop.f32.mrf.mxu0
        %v5297 = vadd.f32 %v5194, %v5296
        %v5298 = vpop.f32.mrf.mxu0
        %5299 = vmatprep.mubr.bf16.mxu0 0
        %5300 = vmatmul.mubr.bf16.gmra.mxu0 %v5169
        %v5301 = vpop.f32.mrf.mxu0
        %v5302 = vadd.f32 %v5194, %v5301
        %v5303 = vpop.f32.mrf.mxu0
        %v5304 = vpop.f32.mrf.mxu0
        %v5305 = vadd.f32 %v5194, %v5304
        %v5306 = vpop.f32.mrf.mxu0
        %5307 = vmatprep.mubr.bf16.mxu0 0
        %5308 = vmatmul.mubr.bf16.gmra.mxu0 %v5170
        %v5309 = vpop.f32.mrf.mxu0
        %v5310 = vadd.f32 %v5194, %v5309
        %v5311 = vpop.f32.mrf.mxu0
        %v5312 = vpop.f32.mrf.mxu0
        %v5313 = vadd.f32 %v5194, %v5312
        %v5314 = vpop.f32.mrf.mxu0
        %5315 = vmatprep.mubr.bf16.mxu0 0
        %5316 = vmatmul.mubr.bf16.gmra.mxu0 %v5171
        %v5317 = vpop.f32.mrf.mxu0
        %v5318 = vadd.f32 %v5194, %v5317
        %v5319 = vpop.f32.mrf.mxu0
        %v5320 = vpop.f32.mrf.mxu0
        %v5321 = vadd.f32 %v5194, %v5320
        %v5322 = vpop.f32.mrf.mxu0
        %5323 = vmatprep.mubr.bf16.mxu0 0
        %5324 = vmatmul.mubr.bf16.gmra.mxu0 %v5172
        %v5325 = vpop.f32.mrf.mxu0
        %v5326 = vadd.f32 %v5194, %v5325
        %v5327 = vpop.f32.mrf.mxu0
        %v5328 = vpop.f32.mrf.mxu0
        %v5329 = vadd.f32 %v5194, %v5328
        %v5330 = vpop.f32.mrf.mxu0
        %5331 = vmatprep.mubr.bf16.mxu0 0
        %5332 = vmatmul.mubr.bf16.gmra.mxu0 %v5173
        %v5333 = vpop.f32.mrf.mxu0
        %v5334 = vadd.f32 %v5194, %v5333
        %v5335 = vpop.f32.mrf.mxu0
        %v5336 = vpop.f32.mrf.mxu0
        %v5337 = vadd.f32 %v5194, %v5336
        %v5338 = vpop.f32.mrf.mxu0
        %5339 = vdwg.mxu0
        %v5340 = vadd.f32 %v5278, %v455
        %v5341 = vadd.f32 %v5281, %v456
        %v5342 = vadd.f32 %v5286, %v457
        %v5343 = vadd.f32 %v5289, %v458
        %v5344 = vadd.f32 %v5294, %v459
        %v5345 = vadd.f32 %v5297, %v460
        %v5346 = vadd.f32 %v5302, %v461
        %v5347 = vadd.f32 %v5305, %v462
        %v5348 = vadd.f32 %v5310, %v463
        %v5349 = vadd.f32 %v5313, %v464
        %v5350 = vadd.f32 %v5318, %v465
        %v5351 = vadd.f32 %v5321, %v466
        %v5352 = vadd.f32 %v5326, %v467
        %v5353 = vadd.f32 %v5329, %v468
        %v5354 = vadd.f32 %v5334, %v469
        %v5355 = vadd.f32 %v5337, %v470
        %5356 = vadd.xlane.f32.xlu0 %v5340
        %v5357 = vpop.xlane.xlu0 %5356
        %5358 = vadd.xlane.f32.xlu0 %v5341
        %v5359 = vpop.xlane.xlu0 %5358
        %5360 = vadd.xlane.f32.xlu0 %v5342
        %v5361 = vpop.xlane.xlu0 %5360
        %5362 = vadd.xlane.f32.xlu0 %v5343
        %v5363 = vpop.xlane.xlu0 %5362
        %5364 = vadd.xlane.f32.xlu0 %v5344
        %v5365 = vpop.xlane.xlu0 %5364
        %5366 = vadd.xlane.f32.xlu0 %v5345
        %v5367 = vpop.xlane.xlu0 %5366
        %5368 = vadd.xlane.f32.xlu0 %v5346
        %v5369 = vpop.xlane.xlu0 %5368
        %5370 = vadd.xlane.f32.xlu0 %v5347
        %v5371 = vpop.xlane.xlu0 %5370
        %5372 = vadd.xlane.f32.xlu0 %v5348
        %v5373 = vpop.xlane.xlu0 %5372
        %5374 = vadd.xlane.f32.xlu0 %v5349
        %v5375 = vpop.xlane.xlu0 %5374
        %5376 = vadd.xlane.f32.xlu0 %v5350
        %v5377 = vpop.xlane.xlu0 %5376
        %5378 = vadd.xlane.f32.xlu0 %v5351
        %v5379 = vpop.xlane.xlu0 %5378
        %5380 = vadd.xlane.f32.xlu0 %v5352
        %v5381 = vpop.xlane.xlu0 %5380
        %5382 = vadd.xlane.f32.xlu0 %v5353
        %v5383 = vpop.xlane.xlu0 %5382
        %5384 = vadd.xlane.f32.xlu0 %v5354
        %v5385 = vpop.xlane.xlu0 %5384
        %5386 = vadd.xlane.f32.xlu0 %v5355
        %v5387 = vpop.xlane.xlu0 %5386
        %v5388 = vrcp.pop 128.0
        %v5389 = vmul.f32 %v5357, %v5388
        %v5390 = vmul.f32 %v5359, %v5388
        %v5391 = vmul.f32 %v5361, %v5388
        %v5392 = vmul.f32 %v5363, %v5388
        %v5393 = vmul.f32 %v5365, %v5388
        %v5394 = vmul.f32 %v5367, %v5388
        %v5395 = vmul.f32 %v5369, %v5388
        %v5396 = vmul.f32 %v5371, %v5388
        %v5397 = vmul.f32 %v5373, %v5388
        %v5398 = vmul.f32 %v5375, %v5388
        %v5399 = vmul.f32 %v5377, %v5388
        %v5400 = vmul.f32 %v5379, %v5388
        %v5401 = vmul.f32 %v5381, %v5388
        %v5402 = vmul.f32 %v5383, %v5388
        %v5403 = vmul.f32 %v5385, %v5388
        %v5404 = vmul.f32 %v5387, %v5388
        %v5405 = vsub.f32 %v5340, %v5389
        %v5406 = vsub.f32 %v5341, %v5390
        %v5407 = vsub.f32 %v5342, %v5391
        %v5408 = vsub.f32 %v5343, %v5392
        %v5409 = vsub.f32 %v5344, %v5393
        %v5410 = vsub.f32 %v5345, %v5394
        %v5411 = vsub.f32 %v5346, %v5395
        %v5412 = vsub.f32 %v5347, %v5396
        %v5413 = vsub.f32 %v5348, %v5397
        %v5414 = vsub.f32 %v5349, %v5398
        %v5415 = vsub.f32 %v5350, %v5399
        %v5416 = vsub.f32 %v5351, %v5400
        %v5417 = vsub.f32 %v5352, %v5401
        %v5418 = vsub.f32 %v5353, %v5402
        %v5419 = vsub.f32 %v5354, %v5403
        %v5420 = vsub.f32 %v5355, %v5404
        %v5421 = vmul.f32 %v5405, %v5405
        %v5422 = vmul.f32 %v5406, %v5406
        %v5423 = vmul.f32 %v5407, %v5407
        %v5424 = vmul.f32 %v5408, %v5408
        %v5425 = vmul.f32 %v5409, %v5409
        %v5426 = vmul.f32 %v5410, %v5410
        %v5427 = vmul.f32 %v5411, %v5411
        %v5428 = vmul.f32 %v5412, %v5412
        %v5429 = vmul.f32 %v5413, %v5413
        %v5430 = vmul.f32 %v5414, %v5414
        %v5431 = vmul.f32 %v5415, %v5415
        %v5432 = vmul.f32 %v5416, %v5416
        %v5433 = vmul.f32 %v5417, %v5417
        %v5434 = vmul.f32 %v5418, %v5418
        %v5435 = vmul.f32 %v5419, %v5419
        %v5436 = vmul.f32 %v5420, %v5420
        %5437 = vadd.xlane.f32.xlu0 %v5421
        %v5438 = vpop.xlane.xlu0 %5437
        %5439 = vadd.xlane.f32.xlu0 %v5422
        %v5440 = vpop.xlane.xlu0 %5439
        %5441 = vadd.xlane.f32.xlu0 %v5423
        %v5442 = vpop.xlane.xlu0 %5441
        %5443 = vadd.xlane.f32.xlu0 %v5424
        %v5444 = vpop.xlane.xlu0 %5443
        %5445 = vadd.xlane.f32.xlu0 %v5425
        %v5446 = vpop.xlane.xlu0 %5445
        %5447 = vadd.xlane.f32.xlu0 %v5426
        %v5448 = vpop.xlane.xlu0 %5447
        %5449 = vadd.xlane.f32.xlu0 %v5427
        %v5450 = vpop.xlane.xlu0 %5449
        %5451 = vadd.xlane.f32.xlu0 %v5428
        %v5452 = vpop.xlane.xlu0 %5451
        %5453 = vadd.xlane.f32.xlu0 %v5429
        %v5454 = vpop.xlane.xlu0 %5453
        %5455 = vadd.xlane.f32.xlu0 %v5430
        %v5456 = vpop.xlane.xlu0 %5455
        %5457 = vadd.xlane.f32.xlu0 %v5431
        %v5458 = vpop.xlane.xlu0 %5457
        %5459 = vadd.xlane.f32.xlu0 %v5432
        %v5460 = vpop.xlane.xlu0 %5459
        %5461 = vadd.xlane.f32.xlu0 %v5433
        %v5462 = vpop.xlane.xlu0 %5461
        %5463 = vadd.xlane.f32.xlu0 %v5434
        %v5464 = vpop.xlane.xlu0 %5463
        %5465 = vadd.xlane.f32.xlu0 %v5435
        %v5466 = vpop.xlane.xlu0 %5465
        %5467 = vadd.xlane.f32.xlu0 %v5436
        %v5468 = vpop.xlane.xlu0 %5467
        %v5469 = vmul.f32 %v5438, %v5388
        %v5470 = vmul.f32 %v5440, %v5388
        %v5471 = vmul.f32 %v5442, %v5388
        %v5472 = vmul.f32 %v5444, %v5388
        %v5473 = vmul.f32 %v5446, %v5388
        %v5474 = vmul.f32 %v5448, %v5388
        %v5475 = vmul.f32 %v5450, %v5388
        %v5476 = vmul.f32 %v5452, %v5388
        %v5477 = vmul.f32 %v5454, %v5388
        %v5478 = vmul.f32 %v5456, %v5388
        %v5479 = vmul.f32 %v5458, %v5388
        %v5480 = vmul.f32 %v5460, %v5388
        %v5481 = vmul.f32 %v5462, %v5388
        %v5482 = vmul.f32 %v5464, %v5388
        %v5483 = vmul.f32 %v5466, %v5388
        %v5484 = vmul.f32 %v5468, %v5388
        %v5485 = vadd.f32 %v5469, 1e-05
        %v5486 = vadd.f32 %v5470, 1e-05
        %v5487 = vadd.f32 %v5471, 1e-05
        %v5488 = vadd.f32 %v5472, 1e-05
        %v5489 = vadd.f32 %v5473, 1e-05
        %v5490 = vadd.f32 %v5474, 1e-05
        %v5491 = vadd.f32 %v5475, 1e-05
        %v5492 = vadd.f32 %v5476, 1e-05
        %v5493 = vadd.f32 %v5477, 1e-05
        %v5494 = vadd.f32 %v5478, 1e-05
        %v5495 = vadd.f32 %v5479, 1e-05
        %v5496 = vadd.f32 %v5480, 1e-05
        %v5497 = vadd.f32 %v5481, 1e-05
        %v5498 = vadd.f32 %v5482, 1e-05
        %v5499 = vadd.f32 %v5483, 1e-05
        %v5500 = vadd.f32 %v5484, 1e-05
        %v5501 = vrsqrt.pop %v5485
        %v5502 = vrsqrt.pop %v5486
        %v5503 = vrsqrt.pop %v5487
        %v5504 = vrsqrt.pop %v5488
        %v5505 = vrsqrt.pop %v5489
        %v5506 = vrsqrt.pop %v5490
        %v5507 = vrsqrt.pop %v5491
        %v5508 = vrsqrt.pop %v5492
        %v5509 = vrsqrt.pop %v5493
        %v5510 = vrsqrt.pop %v5494
        %v5511 = vrsqrt.pop %v5495
        %v5512 = vrsqrt.pop %v5496
        %v5513 = vrsqrt.pop %v5497
        %v5514 = vrsqrt.pop %v5498
        %v5515 = vrsqrt.pop %v5499
        %v5516 = vrsqrt.pop %v5500
        %v5517 = vmul.f32 %v5405, %v5501
        %v5518 = vmul.f32 %v5406, %v5502
        %v5519 = vmul.f32 %v5407, %v5503
        %v5520 = vmul.f32 %v5408, %v5504
        %v5521 = vmul.f32 %v5409, %v5505
        %v5522 = vmul.f32 %v5410, %v5506
        %v5523 = vmul.f32 %v5411, %v5507
        %v5524 = vmul.f32 %v5412, %v5508
        %v5525 = vmul.f32 %v5413, %v5509
        %v5526 = vmul.f32 %v5414, %v5510
        %v5527 = vmul.f32 %v5415, %v5511
        %v5528 = vmul.f32 %v5416, %v5512
        %v5529 = vmul.f32 %v5417, %v5513
        %v5530 = vmul.f32 %v5418, %v5514
        %v5531 = vmul.f32 %v5419, %v5515
        %v5532 = vmul.f32 %v5420, %v5516
        %v5533 = vld [vmem:[%s7 + $0x1] sm:$0x1]
        %v5534 = vlaneseq
        %v5535 = vshrl.u32 %v5534, 7
        %v5536 = vsub.s32 0, %v5535
        %v5537 = vrot.slane %v5533, %v5536
        %v5538 = vmul.f32 %v5517, %v5537
        %v5539 = vmul.f32 %v5518, %v5537
        %v5540 = vmul.f32 %v5519, %v5537
        %v5541 = vmul.f32 %v5520, %v5537
        %v5542 = vmul.f32 %v5521, %v5537
        %v5543 = vmul.f32 %v5522, %v5537
        %v5544 = vmul.f32 %v5523, %v5537
        %v5545 = vmul.f32 %v5524, %v5537
        %v5546 = vmul.f32 %v5525, %v5537
        %v5547 = vmul.f32 %v5526, %v5537
        %v5548 = vmul.f32 %v5527, %v5537
        %v5549 = vmul.f32 %v5528, %v5537
        %v5550 = vmul.f32 %v5529, %v5537
        %v5551 = vmul.f32 %v5530, %v5537
        %v5552 = vmul.f32 %v5531, %v5537
        %v5553 = vmul.f32 %v5532, %v5537
        %v5554 = vld [vmem:[%s7 + $0x2] sm:$0x1]
        %v5555 = vlaneseq
        %v5556 = vshrl.u32 %v5555, 7
        %v5557 = vsub.s32 0, %v5556
        %v5558 = vrot.slane %v5554, %v5557
        %v5559 = vadd.f32 %v5538, %v5558
        %v5560 = vadd.f32 %v5539, %v5558
        %v5561 = vadd.f32 %v5540, %v5558
        %v5562 = vadd.f32 %v5541, %v5558
        %v5563 = vadd.f32 %v5542, %v5558
        %v5564 = vadd.f32 %v5543, %v5558
        %v5565 = vadd.f32 %v5544, %v5558
        %v5566 = vadd.f32 %v5545, %v5558
        %v5567 = vadd.f32 %v5546, %v5558
        %v5568 = vadd.f32 %v5547, %v5558
        %v5569 = vadd.f32 %v5548, %v5558
        %v5570 = vadd.f32 %v5549, %v5558
        %v5571 = vadd.f32 %v5550, %v5558
        %v5572 = vadd.f32 %v5551, %v5558
        %v5573 = vadd.f32 %v5552, %v5558
        %v5574 = vadd.f32 %v5553, %v5558
        %v5575 = vpack.c.bf16 %v5560, %v5559
        %v5576 = vpack.c.bf16 %v5562, %v5561
        %v5577 = vpack.c.bf16 %v5564, %v5563
        %v5578 = vpack.c.bf16 %v5566, %v5565
        %v5579 = vpack.c.bf16 %v5568, %v5567
        %v5580 = vpack.c.bf16 %v5570, %v5569
        %v5581 = vpack.c.bf16 %v5572, %v5571
        %v5582 = vpack.c.bf16 %v5574, %v5573
        %v5583 = vld [vmem:[#allocation10] sm:$0xff]
        %v5584 = vld [vmem:[#allocation10 + $0x8] sm:$0xff]
        %v5585 = vld [vmem:[#allocation10 + $0x10] sm:$0xff]
        %v5586 = vld [vmem:[#allocation10 + $0x18] sm:$0xff]
        %v5587 = vld [vmem:[#allocation10 + $0x20] sm:$0xff]
        %v5588 = vld [vmem:[#allocation10 + $0x28] sm:$0xff]
        %v5589 = vld [vmem:[#allocation10 + $0x30] sm:$0xff]
        %v5590 = vld [vmem:[#allocation10 + $0x38] sm:$0xff]
        %v5591 = vld [vmem:[#allocation10 + $0x40] sm:$0xff]
        %v5592 = vld [vmem:[#allocation10 + $0x48] sm:$0xff]
        %v5593 = vld [vmem:[#allocation10 + $0x50] sm:$0xff]
        %v5594 = vld [vmem:[#allocation10 + $0x58] sm:$0xff]
        %v5595 = vld [vmem:[#allocation10 + $0x60] sm:$0xff]
        %v5596 = vld [vmem:[#allocation10 + $0x68] sm:$0xff]
        %v5597 = vld [vmem:[#allocation10 + $0x70] sm:$0xff]
        %v5598 = vld [vmem:[#allocation10 + $0x78] sm:$0xff]
        %v5599 = vld [vmem:[%s8] sm:$0x3]
        %v5601 = vlaneseq
        %v5602 = vshrl.u32 %v5601, 7
        %v5603 = vsub.s32 0, %v5602
        %v5604 = vrot.slane %v5599, %v5603
        %v5605 = vlaneseq
        %v5606 = vshrl.u32 %v5605, 7
        %v5607 = vsub.s32 1, %v5606
        %v5608 = vrot.slane %v5599, %v5607
        %v5627 = vunpack.c.l.b16 %v5583
        %v5628 = vunpack.c.h.b16 %v5583
        %v5629 = vunpack.c.l.b16 %v5584
        %v5630 = vunpack.c.h.b16 %v5584
        %v5631 = vunpack.c.l.b16 %v5585
        %v5632 = vunpack.c.h.b16 %v5585
        %v5633 = vunpack.c.l.b16 %v5586
        %v5634 = vunpack.c.h.b16 %v5586
        %v5635 = vunpack.c.l.b16 %v5587
        %v5636 = vunpack.c.h.b16 %v5587
        %v5637 = vunpack.c.l.b16 %v5588
        %v5638 = vunpack.c.h.b16 %v5588
        %v5639 = vunpack.c.l.b16 %v5589
        %v5640 = vunpack.c.h.b16 %v5589
        %v5641 = vunpack.c.l.b16 %v5590
        %v5642 = vunpack.c.h.b16 %v5590
        %v5643 = vunpack.c.l.b16 %v5591
        %v5644 = vunpack.c.h.b16 %v5591
        %v5645 = vunpack.c.l.b16 %v5592
        %v5646 = vunpack.c.h.b16 %v5592
        %v5647 = vunpack.c.l.b16 %v5593
        %v5648 = vunpack.c.h.b16 %v5593
        %v5649 = vunpack.c.l.b16 %v5594
        %v5650 = vunpack.c.h.b16 %v5594
        %v5651 = vunpack.c.l.b16 %v5595
        %v5652 = vunpack.c.h.b16 %v5595
        %v5653 = vunpack.c.l.b16 %v5596
        %v5654 = vunpack.c.h.b16 %v5596
        %v5655 = vunpack.c.l.b16 %v5597
        %v5656 = vunpack.c.h.b16 %v5597
        %v5657 = vunpack.c.l.b16 %v5598
        %v5658 = vunpack.c.h.b16 %v5598
        %v5659 = vpack.c.b16 %v5629, %v5627
        %v5660 = vpack.c.b16 %v5630, %v5628
        %v5661 = vpack.c.b16 %v5633, %v5631
        %v5662 = vpack.c.b16 %v5634, %v5632
        %v5663 = vpack.c.b16 %v5637, %v5635
        %v5664 = vpack.c.b16 %v5638, %v5636
        %v5665 = vpack.c.b16 %v5641, %v5639
        %v5666 = vpack.c.b16 %v5642, %v5640
        %v5667 = vpack.c.b16 %v5645, %v5643
        %v5668 = vpack.c.b16 %v5646, %v5644
        %v5669 = vpack.c.b16 %v5649, %v5647
        %v5670 = vpack.c.b16 %v5650, %v5648
        %v5671 = vpack.c.b16 %v5653, %v5651
        %v5672 = vpack.c.b16 %v5654, %v5652
        %v5673 = vpack.c.b16 %v5657, %v5655
        %v5674 = vpack.c.b16 %v5658, %v5656
        %5691 = vmatprep.subr.bf16.mxu0 %v5674
        %5692 = vmatpush1.bf16.msra.mxu0 %v5673
        %5693 = vmatprep.subr.bf16.mxu0 %v5672
        %5694 = vmatpush1.bf16.msra.mxu0 %v5671
        %5695 = vmatprep.subr.bf16.mxu0 %v5670
        %5696 = vmatpush1.bf16.msra.mxu0 %v5669
        %5697 = vmatprep.subr.bf16.mxu0 %v5668
        %5698 = vmatpush1.bf16.msra.mxu0 %v5667
        %5699 = vmatprep.subr.bf16.mxu0 %v5666
        %5700 = vmatpush1.bf16.msra.mxu0 %v5665
        %5701 = vmatprep.subr.bf16.mxu0 %v5664
        %5702 = vmatpush1.bf16.msra.mxu0 %v5663
        %5703 = vmatprep.subr.bf16.mxu0 %v5662
        %5704 = vmatpush1.bf16.msra.mxu0 %v5661
        %5705 = vmatprep.subr.bf16.mxu0 %v5660
        %5706 = vmatpush1.bf16.msra.mxu0 %v5659
        %5707 = vmatprep.subr.bf16.mxu0 0
        %5708 = vmatpush2.bf16.msra.mxu0 0
        %5709 = vmatprep.subr.bf16.mxu0 0
        %5710 = vmatpush2.bf16.msra.mxu0 0
        %5711 = vmatprep.subr.bf16.mxu0 0
        %5712 = vmatpush2.bf16.msra.mxu0 0
        %5713 = vmatprep.subr.bf16.mxu0 0
        %5714 = vmatpush2.bf16.msra.mxu0 0
        %5715 = vmatprep.subr.bf16.mxu0 0
        %5716 = vmatpush2.bf16.msra.mxu0 0
        %5717 = vmatprep.subr.bf16.mxu0 0
        %5718 = vmatpush2.bf16.msra.mxu0 0
        %5719 = vmatprep.subr.bf16.mxu0 0
        %5720 = vmatpush2.bf16.msra.mxu0 0
        %5721 = vmatprep.subr.bf16.mxu0 0
        %5722 = vmatpush2.bf16.msra.mxu0 0
        %5723 = vmatprep.mubr.bf16.mxu0 0
        %5724 = vmatmul.mubr.bf16.gmra.mxu0 %v5575
        %v5725 = vpop.f32.mrf.mxu0
        %v5726 = vadd.f32 %v5604, %v5725
        %v5727 = vpop.f32.mrf.mxu0
        %v5728 = vadd.f32 %v5608, %v5727
        %v5729 = vpop.f32.mrf.mxu0
        %v5730 = vadd.f32 %v5604, %v5729
        %v5731 = vpop.f32.mrf.mxu0
        %v5732 = vadd.f32 %v5608, %v5731
        %5733 = vmatprep.mubr.bf16.mxu0 0
        %5734 = vmatmul.mubr.bf16.gmra.mxu0 %v5576
        %v5735 = vpop.f32.mrf.mxu0
        %v5736 = vadd.f32 %v5604, %v5735
        %v5737 = vpop.f32.mrf.mxu0
        %v5738 = vadd.f32 %v5608, %v5737
        %v5739 = vpop.f32.mrf.mxu0
        %v5740 = vadd.f32 %v5604, %v5739
        %v5741 = vpop.f32.mrf.mxu0
        %v5742 = vadd.f32 %v5608, %v5741
        %5743 = vmatprep.mubr.bf16.mxu0 0
        %5744 = vmatmul.mubr.bf16.gmra.mxu0 %v5577
        %v5745 = vpop.f32.mrf.mxu0
        %v5746 = vadd.f32 %v5604, %v5745
        %v5747 = vpop.f32.mrf.mxu0
        %v5748 = vadd.f32 %v5608, %v5747
        %v5749 = vpop.f32.mrf.mxu0
        %v5750 = vadd.f32 %v5604, %v5749
        %v5751 = vpop.f32.mrf.mxu0
        %v5752 = vadd.f32 %v5608, %v5751
        %5753 = vmatprep.mubr.bf16.mxu0 0
        %5754 = vmatmul.mubr.bf16.gmra.mxu0 %v5578
        %v5755 = vpop.f32.mrf.mxu0
        %v5756 = vadd.f32 %v5604, %v5755
        %v5757 = vpop.f32.mrf.mxu0
        %v5758 = vadd.f32 %v5608, %v5757
        %v5759 = vpop.f32.mrf.mxu0
        %v5760 = vadd.f32 %v5604, %v5759
        %v5761 = vpop.f32.mrf.mxu0
        %v5762 = vadd.f32 %v5608, %v5761
        %5763 = vmatprep.mubr.bf16.mxu0 0
        %5764 = vmatmul.mubr.bf16.gmra.mxu0 %v5579
        %v5765 = vpop.f32.mrf.mxu0
        %v5766 = vadd.f32 %v5604, %v5765
        %v5767 = vpop.f32.mrf.mxu0
        %v5768 = vadd.f32 %v5608, %v5767
        %v5769 = vpop.f32.mrf.mxu0
        %v5770 = vadd.f32 %v5604, %v5769
        %v5771 = vpop.f32.mrf.mxu0
        %v5772 = vadd.f32 %v5608, %v5771
        %5773 = vmatprep.mubr.bf16.mxu0 0
        %5774 = vmatmul.mubr.bf16.gmra.mxu0 %v5580
        %v5775 = vpop.f32.mrf.mxu0
        %v5776 = vadd.f32 %v5604, %v5775
        %v5777 = vpop.f32.mrf.mxu0
        %v5778 = vadd.f32 %v5608, %v5777
        %v5779 = vpop.f32.mrf.mxu0
        %v5780 = vadd.f32 %v5604, %v5779
        %v5781 = vpop.f32.mrf.mxu0
        %v5782 = vadd.f32 %v5608, %v5781
        %5783 = vmatprep.mubr.bf16.mxu0 0
        %5784 = vmatmul.mubr.bf16.gmra.mxu0 %v5581
        %v5785 = vpop.f32.mrf.mxu0
        %v5786 = vadd.f32 %v5604, %v5785
        %v5787 = vpop.f32.mrf.mxu0
        %v5788 = vadd.f32 %v5608, %v5787
        %v5789 = vpop.f32.mrf.mxu0
        %v5790 = vadd.f32 %v5604, %v5789
        %v5791 = vpop.f32.mrf.mxu0
        %v5792 = vadd.f32 %v5608, %v5791
        %5793 = vmatprep.mubr.bf16.mxu0 0
        %5794 = vmatmul.mubr.bf16.gmra.mxu0 %v5582
        %v5795 = vpop.f32.mrf.mxu0
        %v5796 = vadd.f32 %v5604, %v5795
        %v5797 = vpop.f32.mrf.mxu0
        %v5798 = vadd.f32 %v5608, %v5797
        %v5799 = vpop.f32.mrf.mxu0
        %v5800 = vadd.f32 %v5604, %v5799
        %v5801 = vpop.f32.mrf.mxu0
        %v5802 = vadd.f32 %v5608, %v5801
        %5803 = vdwg.mxu0
        %v5804 = vmax.f32 %v5726, 0.0
        %v5805 = vmax.f32 %v5728, 0.0
        %v5806 = vmax.f32 %v5730, 0.0
        %v5807 = vmax.f32 %v5732, 0.0
        %v5808 = vmax.f32 %v5736, 0.0
        %v5809 = vmax.f32 %v5738, 0.0
        %v5810 = vmax.f32 %v5740, 0.0
        %v5811 = vmax.f32 %v5742, 0.0
        %v5812 = vmax.f32 %v5746, 0.0
        %v5813 = vmax.f32 %v5748, 0.0
        %v5814 = vmax.f32 %v5750, 0.0
        %v5815 = vmax.f32 %v5752, 0.0
        %v5816 = vmax.f32 %v5756, 0.0
        %v5817 = vmax.f32 %v5758, 0.0
        %v5818 = vmax.f32 %v5760, 0.0
        %v5819 = vmax.f32 %v5762, 0.0
        %v5820 = vmax.f32 %v5766, 0.0
        %v5821 = vmax.f32 %v5768, 0.0
        %v5822 = vmax.f32 %v5770, 0.0
        %v5823 = vmax.f32 %v5772, 0.0
        %v5824 = vmax.f32 %v5776, 0.0
        %v5825 = vmax.f32 %v5778, 0.0
        %v5826 = vmax.f32 %v5780, 0.0
        %v5827 = vmax.f32 %v5782, 0.0
        %v5828 = vmax.f32 %v5786, 0.0
        %v5829 = vmax.f32 %v5788, 0.0
        %v5830 = vmax.f32 %v5790, 0.0
        %v5831 = vmax.f32 %v5792, 0.0
        %v5832 = vmax.f32 %v5796, 0.0
        %v5833 = vmax.f32 %v5798, 0.0
        %v5834 = vmax.f32 %v5800, 0.0
        %v5835 = vmax.f32 %v5802, 0.0
        %v5836 = vpack.c.bf16 %v5806, %v5804
        %v5837 = vpack.c.bf16 %v5807, %v5805
        %v5838 = vpack.c.bf16 %v5810, %v5808
        %v5839 = vpack.c.bf16 %v5811, %v5809
        %v5840 = vpack.c.bf16 %v5814, %v5812
        %v5841 = vpack.c.bf16 %v5815, %v5813
        %v5842 = vpack.c.bf16 %v5818, %v5816
        %v5843 = vpack.c.bf16 %v5819, %v5817
        %v5844 = vpack.c.bf16 %v5822, %v5820
        %v5845 = vpack.c.bf16 %v5823, %v5821
        %v5846 = vpack.c.bf16 %v5826, %v5824
        %v5847 = vpack.c.bf16 %v5827, %v5825
        %v5848 = vpack.c.bf16 %v5830, %v5828
        %v5849 = vpack.c.bf16 %v5831, %v5829
        %v5850 = vpack.c.bf16 %v5834, %v5832
        %v5851 = vpack.c.bf16 %v5835, %v5833
        %v5852 = vld [vmem:[#allocation11] sm:$0xf]
        %v5853 = vld [vmem:[#allocation11 + $0x4] sm:$0xf]
        %v5854 = vld [vmem:[#allocation11 + $0x8] sm:$0xf]
        %v5855 = vld [vmem:[#allocation11 + $0xc] sm:$0xf]
        %v5856 = vld [vmem:[#allocation11 + $0x10] sm:$0xf]
        %v5857 = vld [vmem:[#allocation11 + $0x14] sm:$0xf]
        %v5858 = vld [vmem:[#allocation11 + $0x18] sm:$0xf]
        %v5859 = vld [vmem:[#allocation11 + $0x1c] sm:$0xf]
        %v5860 = vld [vmem:[#allocation11 + $0x20] sm:$0xf]
        %v5861 = vld [vmem:[#allocation11 + $0x24] sm:$0xf]
        %v5862 = vld [vmem:[#allocation11 + $0x28] sm:$0xf]
        %v5863 = vld [vmem:[#allocation11 + $0x2c] sm:$0xf]
        %v5864 = vld [vmem:[#allocation11 + $0x30] sm:$0xf]
        %v5865 = vld [vmem:[#allocation11 + $0x34] sm:$0xf]
        %v5866 = vld [vmem:[#allocation11 + $0x38] sm:$0xf]
        %v5867 = vld [vmem:[#allocation11 + $0x3c] sm:$0xf]
        %v5868 = vld [vmem:[#allocation11 + $0x40] sm:$0xf]
        %v5869 = vld [vmem:[#allocation11 + $0x44] sm:$0xf]
        %v5870 = vld [vmem:[#allocation11 + $0x48] sm:$0xf]
        %v5871 = vld [vmem:[#allocation11 + $0x4c] sm:$0xf]
        %v5872 = vld [vmem:[#allocation11 + $0x50] sm:$0xf]
        %v5873 = vld [vmem:[#allocation11 + $0x54] sm:$0xf]
        %v5874 = vld [vmem:[#allocation11 + $0x58] sm:$0xf]
        %v5875 = vld [vmem:[#allocation11 + $0x5c] sm:$0xf]
        %v5876 = vld [vmem:[#allocation11 + $0x60] sm:$0xf]
        %v5877 = vld [vmem:[#allocation11 + $0x64] sm:$0xf]
        %v5878 = vld [vmem:[#allocation11 + $0x68] sm:$0xf]
        %v5879 = vld [vmem:[#allocation11 + $0x6c] sm:$0xf]
        %v5880 = vld [vmem:[#allocation11 + $0x70] sm:$0xf]
        %v5881 = vld [vmem:[#allocation11 + $0x74] sm:$0xf]
        %v5882 = vld [vmem:[#allocation11 + $0x78] sm:$0xf]
        %v5883 = vld [vmem:[#allocation11 + $0x7c] sm:$0xf]
        %v5884 = vld [vmem:[%s7 + $0x3] sm:$0x1]
        %v5885 = vlaneseq
        %v5886 = vshrl.u32 %v5885, 7
        %v5887 = vsub.s32 0, %v5886
        %v5888 = vrot.slane %v5884, %v5887
        %v5921 = vunpack.c.l.b16 %v5852
        %v5922 = vunpack.c.l.b16 %v5853
        %v5923 = vunpack.c.l.b16 %v5854
        %v5924 = vunpack.c.l.b16 %v5855
        %v5925 = vunpack.c.l.b16 %v5856
        %v5926 = vunpack.c.l.b16 %v5857
        %v5927 = vunpack.c.l.b16 %v5858
        %v5928 = vunpack.c.l.b16 %v5859
        %v5929 = vunpack.c.l.b16 %v5860
        %v5930 = vunpack.c.l.b16 %v5861
        %v5931 = vunpack.c.l.b16 %v5862
        %v5932 = vunpack.c.l.b16 %v5863
        %v5933 = vunpack.c.l.b16 %v5864
        %v5934 = vunpack.c.l.b16 %v5865
        %v5935 = vunpack.c.l.b16 %v5866
        %v5936 = vunpack.c.l.b16 %v5867
        %v5937 = vunpack.c.l.b16 %v5868
        %v5938 = vunpack.c.l.b16 %v5869
        %v5939 = vunpack.c.l.b16 %v5870
        %v5940 = vunpack.c.l.b16 %v5871
        %v5941 = vunpack.c.l.b16 %v5872
        %v5942 = vunpack.c.l.b16 %v5873
        %v5943 = vunpack.c.l.b16 %v5874
        %v5944 = vunpack.c.l.b16 %v5875
        %v5945 = vunpack.c.l.b16 %v5876
        %v5946 = vunpack.c.l.b16 %v5877
        %v5947 = vunpack.c.l.b16 %v5878
        %v5948 = vunpack.c.l.b16 %v5879
        %v5949 = vunpack.c.l.b16 %v5880
        %v5950 = vunpack.c.l.b16 %v5881
        %v5951 = vunpack.c.l.b16 %v5882
        %v5952 = vunpack.c.l.b16 %v5883
        %v5953 = vpack.c.b16 %v5922, %v5921
        %v5954 = vpack.c.b16 %v5924, %v5923
        %v5955 = vpack.c.b16 %v5926, %v5925
        %v5956 = vpack.c.b16 %v5928, %v5927
        %v5957 = vpack.c.b16 %v5930, %v5929
        %v5958 = vpack.c.b16 %v5932, %v5931
        %v5959 = vpack.c.b16 %v5934, %v5933
        %v5960 = vpack.c.b16 %v5936, %v5935
        %v5961 = vpack.c.b16 %v5938, %v5937
        %v5962 = vpack.c.b16 %v5940, %v5939
        %v5963 = vpack.c.b16 %v5942, %v5941
        %v5964 = vpack.c.b16 %v5944, %v5943
        %v5965 = vpack.c.b16 %v5946, %v5945
        %v5966 = vpack.c.b16 %v5948, %v5947
        %v5967 = vpack.c.b16 %v5950, %v5949
        %v5968 = vpack.c.b16 %v5952, %v5951
        %5985 = vmatprep.subr.bf16.mxu0 0
        %5986 = vmatpush1.bf16.msra.mxu0 %v5960
        %5987 = vmatprep.subr.bf16.mxu0 0
        %5988 = vmatpush1.bf16.msra.mxu0 %v5959
        %5989 = vmatprep.subr.bf16.mxu0 0
        %5990 = vmatpush1.bf16.msra.mxu0 %v5958
        %5991 = vmatprep.subr.bf16.mxu0 0
        %5992 = vmatpush1.bf16.msra.mxu0 %v5957
        %5993 = vmatprep.subr.bf16.mxu0 0
        %5994 = vmatpush1.bf16.msra.mxu0 %v5956
        %5995 = vmatprep.subr.bf16.mxu0 0
        %5996 = vmatpush1.bf16.msra.mxu0 %v5955
        %5997 = vmatprep.subr.bf16.mxu0 0
        %5998 = vmatpush1.bf16.msra.mxu0 %v5954
        %5999 = vmatprep.subr.bf16.mxu0 0
        %6000 = vmatpush1.bf16.msra.mxu0 %v5953
        %6001 = vmatprep.subr.bf16.mxu0 0
        %6002 = vmatpush2.bf16.msra.mxu0 %v5968
        %6003 = vmatprep.subr.bf16.mxu0 0
        %6004 = vmatpush2.bf16.msra.mxu0 %v5967
        %6005 = vmatprep.subr.bf16.mxu0 0
        %6006 = vmatpush2.bf16.msra.mxu0 %v5966
        %6007 = vmatprep.subr.bf16.mxu0 0
        %6008 = vmatpush2.bf16.msra.mxu0 %v5965
        %6009 = vmatprep.subr.bf16.mxu0 0
        %6010 = vmatpush2.bf16.msra.mxu0 %v5964
        %6011 = vmatprep.subr.bf16.mxu0 0
        %6012 = vmatpush2.bf16.msra.mxu0 %v5963
        %6013 = vmatprep.subr.bf16.mxu0 0
        %6014 = vmatpush2.bf16.msra.mxu0 %v5962
        %6015 = vmatprep.subr.bf16.mxu0 0
        %6016 = vmatpush2.bf16.msra.mxu0 %v5961
        %6017 = vmatprep.mubr.bf16.mxu0 %v5837
        %6018 = vmatmul.mubr.bf16.gmra.mxu0 %v5836
        %v6019 = vpop.f32.mrf.mxu0
        %v6020 = vadd.f32 %v5888, %v6019
        %v6021 = vpop.f32.mrf.mxu0
        %v6022 = vpop.f32.mrf.mxu0
        %v6023 = vadd.f32 %v5888, %v6022
        %v6024 = vpop.f32.mrf.mxu0
        %6025 = vmatprep.mubr.bf16.mxu0 %v5839
        %6026 = vmatmul.mubr.bf16.gmra.mxu0 %v5838
        %v6027 = vpop.f32.mrf.mxu0
        %v6028 = vadd.f32 %v5888, %v6027
        %v6029 = vpop.f32.mrf.mxu0
        %v6030 = vpop.f32.mrf.mxu0
        %v6031 = vadd.f32 %v5888, %v6030
        %v6032 = vpop.f32.mrf.mxu0
        %6033 = vmatprep.mubr.bf16.mxu0 %v5841
        %6034 = vmatmul.mubr.bf16.gmra.mxu0 %v5840
        %v6035 = vpop.f32.mrf.mxu0
        %v6036 = vadd.f32 %v5888, %v6035
        %v6037 = vpop.f32.mrf.mxu0
        %v6038 = vpop.f32.mrf.mxu0
        %v6039 = vadd.f32 %v5888, %v6038
        %v6040 = vpop.f32.mrf.mxu0
        %6041 = vmatprep.mubr.bf16.mxu0 %v5843
        %6042 = vmatmul.mubr.bf16.gmra.mxu0 %v5842
        %v6043 = vpop.f32.mrf.mxu0
        %v6044 = vadd.f32 %v5888, %v6043
        %v6045 = vpop.f32.mrf.mxu0
        %v6046 = vpop.f32.mrf.mxu0
        %v6047 = vadd.f32 %v5888, %v6046
        %v6048 = vpop.f32.mrf.mxu0
        %6049 = vmatprep.mubr.bf16.mxu0 %v5845
        %6050 = vmatmul.mubr.bf16.gmra.mxu0 %v5844
        %v6051 = vpop.f32.mrf.mxu0
        %v6052 = vadd.f32 %v5888, %v6051
        %v6053 = vpop.f32.mrf.mxu0
        %v6054 = vpop.f32.mrf.mxu0
        %v6055 = vadd.f32 %v5888, %v6054
        %v6056 = vpop.f32.mrf.mxu0
        %6057 = vmatprep.mubr.bf16.mxu0 %v5847
        %6058 = vmatmul.mubr.bf16.gmra.mxu0 %v5846
        %v6059 = vpop.f32.mrf.mxu0
        %v6060 = vadd.f32 %v5888, %v6059
        %v6061 = vpop.f32.mrf.mxu0
        %v6062 = vpop.f32.mrf.mxu0
        %v6063 = vadd.f32 %v5888, %v6062
        %v6064 = vpop.f32.mrf.mxu0
        %6065 = vmatprep.mubr.bf16.mxu0 %v5849
        %6066 = vmatmul.mubr.bf16.gmra.mxu0 %v5848
        %v6067 = vpop.f32.mrf.mxu0
        %v6068 = vadd.f32 %v5888, %v6067
        %v6069 = vpop.f32.mrf.mxu0
        %v6070 = vpop.f32.mrf.mxu0
        %v6071 = vadd.f32 %v5888, %v6070
        %v6072 = vpop.f32.mrf.mxu0
        %6073 = vmatprep.mubr.bf16.mxu0 %v5851
        %6074 = vmatmul.mubr.bf16.gmra.mxu0 %v5850
        %v6075 = vpop.f32.mrf.mxu0
        %v6076 = vadd.f32 %v5888, %v6075
        %v6077 = vpop.f32.mrf.mxu0
        %v6078 = vpop.f32.mrf.mxu0
        %v6079 = vadd.f32 %v5888, %v6078
        %v6080 = vpop.f32.mrf.mxu0
        %6081 = vdwg.mxu0
        %6082 = vst [vmem:[%s450] sm:$0xff] %v6020
        %6083 = vst [vmem:[%s450 + $0x8] sm:$0xff] %v6023
        %6084 = vst [vmem:[%s450 + $0x10] sm:$0xff] %v6028
        %6085 = vst [vmem:[%s450 + $0x18] sm:$0xff] %v6031
        %6086 = vst [vmem:[%s450 + $0x20] sm:$0xff] %v6036
        %6087 = vst [vmem:[%s450 + $0x28] sm:$0xff] %v6039
        %6088 = vst [vmem:[%s450 + $0x30] sm:$0xff] %v6044
        %6089 = vst [vmem:[%s450 + $0x38] sm:$0xff] %v6047
        %6090 = vst [vmem:[%s450 + $0x40] sm:$0xff] %v6052
        %6091 = vst [vmem:[%s450 + $0x48] sm:$0xff] %v6055
        %6092 = vst [vmem:[%s450 + $0x50] sm:$0xff] %v6060
        %6093 = vst [vmem:[%s450 + $0x58] sm:$0xff] %v6063
        %6094 = vst [vmem:[%s450 + $0x60] sm:$0xff] %v6068
        %6095 = vst [vmem:[%s450 + $0x68] sm:$0xff] %v6071
        %6096 = vst [vmem:[%s450 + $0x70] sm:$0xff] %v6076
        %6097 = vst [vmem:[%s450 + $0x78] sm:$0xff] %v6079
        %s6098 = sand.u32 %s238, 1
        %s6099 = scalar_lea.sflag [#allocation4], %s6098
        %s6100 = sand.u32 %s238, 1
        %s6101 = smul.addr %s6100, 128
        %s6102 = scalar_lea.vmem [#allocation13], %s6101
        // Predicated region
        $region81: #{tpu_custom_call.1} parent=55 // pred_check
          %p6103 = pneg %p248
        $region82: #{tpu_custom_call.1} parent=55 // pred_check_branch
          %6105 = sbr.rel (%p6103) target = $region84
        $region83: #{tpu_custom_call.1} parent=55 // pred_region
          %s6106 = smul.u32 8, %s31
          %s6108 = ssub.s32 2048, 2048
          %6109 = vsyncadd %s6099, %s6108
          %s6110 = smul.addr %s6106, 2
          %s6111 = smul.addr %s6110, 128
          %s6112 = scalar_lea.hbm %s9, %s6111
          %s6113 = sshll.u32 %s6102, 4
          %s6114 = int_to_ptr.vmem [resolvable:$true] %s6113
          %6119 = dma.vmem_to_hbm [thread:$0]  %s6114, 2048, %s6112, %s6099, 128, 128, 8
        $region84: #{tpu_custom_call.1} parent=55 // pred_fallthru
          _
      $region56: #{tpu_custom_call.1} parent=5 // pred_fallthru
        _
      %p6120 = scmp.le.s32.totalorder 2, %s26
      // Predicated region
      $region85: #{tpu_custom_call.1} parent=5 // pred_check
        %p6121 = pneg %p6120
      $region86: #{tpu_custom_call.1} parent=5 // pred_check_branch
        %6123 = sbr.rel (%p6121) target = $region88
      $region87: #{tpu_custom_call.1} parent=5 // pred_region
        %s6124 = ssub.s32 %s26, 2
        // Predicated region
        $region89: #{tpu_custom_call.1} parent=87 // pred_check
          %p6125 = pneg %p254
        $region90: #{tpu_custom_call.1} parent=87 // pred_check_branch
          %6127 = sbr.rel (%p6125) target = $region92
        $region91: #{tpu_custom_call.1} parent=87 // pred_region
          %s6128 = sand.u32 %s239, 1
          %s6129 = scalar_lea.sflag [#allocation4], %s6128
          %s6130 = sand.u32 %s239, 1
          %s6131 = smul.addr %s6130, 128
          %s6132 = scalar_lea.vmem [#allocation13], %s6131
          %6133 = dma.done %s6129, 2048
        $region92: #{tpu_custom_call.1} parent=87 // pred_fallthru
          _
      $region88: #{tpu_custom_call.1} parent=5 // pred_fallthru
        _
    $region6: #{tpu_custom_call.1} parent=1 // loop_footer
      %s30 = sadd.s32 1, %s26
    $region7: #{tpu_custom_call.1} parent=1 // loop_footer_branch
      %25 = sbr.rel target = $region3
    $region8: #{tpu_custom_call.1} parent=1 // loop_exit
      _
    %6134 = vsyncpa [#allocation3], 1
    %s6135 = scalar_lea.sflag [#allocation3], 1
    %6136 = vsyncpa %s6135, 1
    %6137 = vsyncpa [#allocation6], 1
    %s6138 = scalar_lea.sflag [#allocation6], 1
    %6139 = vsyncpa %s6138, 1
    %6140 = vsyncpa [#allocation9], 1
    %6141 = vsyncpa [#allocation12], 1
    %6142 = vsyncpa [#allocation4], 1
    %s6143 = scalar_lea.sflag [#allocation4], 1
    %6144 = vsyncpa %s6143, 1

</llo_original>
